<compile_context>
chip_gen: v5e
topology: v5e:2x2
jax: 0.10.0
libtpu: 0.0.40
codegen_flags: <defaults>
</compile_context>

<pallas_src>
import math

import jax
import jax.numpy as jnp
from jax import lax
from jax.experimental import pallas as pl
from jax.experimental.pallas import tpu as pltpu

BN_EPS = 1e-5
NEG_SLOPE = 0.2


# ---------------------------------------------------------------------------
# In-kernel helpers
# ---------------------------------------------------------------------------
def _store_pointwise(o_ref, acc3d, w_pw, scale, shift, neg_slope):
    """acc3d: (H, W, Cin) f32.  Computes acc3d @ w_pw, applies the folded affine
    (scale/shift over Cout) and LeakyReLU, and stores into o_ref[0] = (H*W, Cout).

    When W is sublane-aligned (W % 8 == 0) the (H, W) -> (H*W,) collapse is a
    trivial retiling and a single matmul is used; otherwise fall back to per-row
    matmuls so no awkward relayout/reshape is required.
    """
    h, w, cin = acc3d.shape

    def finish(y2d):
        if scale is not None:
            y2d = y2d * scale
        if shift is not None:
            y2d = y2d + shift
        if neg_slope is not None:
            y2d = jnp.maximum(y2d, neg_slope * y2d)   # LeakyReLU(0.2)
        return y2d.astype(o_ref.dtype)

    if w % 8 == 0:
        y = jnp.dot(acc3d.reshape(h * w, cin), w_pw,
                    preferred_element_type=jnp.float32)
        o_ref[0] = finish(y)
    else:
        for r in range(h):
            y = jnp.dot(acc3d[r], w_pw, preferred_element_type=jnp.float32)
            o_ref[0, pl.ds(r * w, w), :] = finish(y)


def _make_conv_s1_kernel(K, H, W):
    """Dense KxK conv, stride 1, 'same' padding (the Encoder's conv1)."""
    KK = K * K

    def kernel(xp_ref, w_ref, b_ref, o_ref):
        # xp_ref: (1, Hp, Wp, Cin) zero-padded input (NHWC)
        # w_ref:  (K*K, Cin, Cout) tap-major weights
        # b_ref:  (1, Cout)
        # o_ref:  (1, H*W, Cout)
        cin = xp_ref.shape[3]
        cout = w_ref.shape[2]
        xp = xp_ref[0].astype(jnp.float32)                       # (Hp, Wp, Cin)
        acc = jnp.zeros((H * W, cout), jnp.float32)
        for t in range(KK):
            dy, dx = divmod(t, K)
            win = xp[dy:dy + H, dx:dx + W, :]                    # (H, W, Cin)
            acc = acc + jnp.dot(win.reshape(H * W, cin),
                                w_ref[t].astype(jnp.float32),
                                preferred_element_type=jnp.float32)
        o_ref[0] = (acc + b_ref[...].astype(jnp.float32)).astype(o_ref.dtype)

    return kernel


def _make_dsconv_kernel(K, Ho, Wo, neg_slope):
    """Fused depthwise KxK stride-2 conv + 1x1 conv + folded BN affine + LeakyReLU."""

    def kernel(p00_ref, p01_ref, p10_ref, p11_ref,
               wdw_ref, wpw_ref, scale_ref, shift_ref, o_ref):
        # pXY_ref: (1, Hf, Wf, Cin) spatial phase (row-parity X, col-parity Y) of
        #          the zero-padded NHWC input.
        # wdw_ref: (K*K, Cin) depthwise weights (tap-major)
        # wpw_ref: (Cin, Cout) pointwise weights
        # scale_ref/shift_ref: (1, Cout) folded BatchNorm(+bias) affine
        # o_ref:   (1, Ho*Wo, Cout)
        cin = wdw_ref.shape[1]
        phase_refs = ((p00_ref, p01_ref), (p10_ref, p11_ref))

        # Load each phase once; reuse across taps.
        phase_vals = [[None, None], [None, None]]
        for p in range(2):
            for q in range(2):
                phase_vals[p][q] = phase_refs[p][q][0].astype(jnp.float32)

        wdw = wdw_ref[...].astype(jnp.float32)                   # (K*K, Cin)

        # Depthwise KxK / stride-2 conv: pure VPU multiply-accumulate over taps.
        acc = jnp.zeros((Ho, Wo, cin), jnp.float32)
        for dy in range(K):
            for dx in range(K):
                ph = phase_vals[dy % 2][dx % 2]                  # (Hf, Wf, Cin)
                r0, c0 = dy // 2, dx // 2
                win = ph[r0:r0 + Ho, c0:c0 + Wo, :]              # (Ho, Wo, Cin)
                t = dy * K + dx
                wt = wdw[t:t + 1, :][None]                       # (1, 1, Cin)
                acc = acc + win * wt

        # Pointwise 1x1 conv (MXU) + folded BN/bias affine + LeakyReLU, then store.
        _store_pointwise(o_ref, acc,
                         wpw_ref[...].astype(jnp.float32),
                         scale_ref[...].astype(jnp.float32),
                         shift_ref[...].astype(jnp.float32),
                         neg_slope)

    return kernel


# ---------------------------------------------------------------------------
# pallas_call wrappers
# ---------------------------------------------------------------------------
def conv2d_same_s1(x_nhwc, w_taps, bias):
    """x: (B, H, W, Cin); w_taps: (K*K, Cin, Cout); bias: (Cout,). stride 1, pad K//2."""
    B, H, W, Cin = x_nhwc.shape
    KK, _, Cout = w_taps.shape
    K = int(round(math.sqrt(KK)))
    pad = K // 2
    assert W % 8 == 0, "conv2d_same_s1 kernel assumes the input width is sublane-aligned"
    xp = jnp.pad(x_nhwc, ((0, 0), (pad, pad), (pad, pad), (0, 0)))
    Hp, Wp = H + 2 * pad, W + 2 * pad

    out = pl.pallas_call(
        _make_conv_s1_kernel(K, H, W),
        out_shape=jax.ShapeDtypeStruct((B, H * W, Cout), x_nhwc.dtype),
        grid_spec=pltpu.PrefetchScalarGridSpec(
            num_scalar_prefetch=0,
            grid=(B,),
            in_specs=[
                pl.BlockSpec((1, Hp, Wp, Cin), lambda b: (b, 0, 0, 0)),
                pl.BlockSpec((KK, Cin, Cout), lambda b: (0, 0, 0)),
                pl.BlockSpec((1, Cout), lambda b: (0, 0)),
            ],
            out_specs=pl.BlockSpec((1, H * W, Cout), lambda b: (b, 0, 0)),
        ),
        compiler_params=pltpu.CompilerParams(
            dimension_semantics=("parallel",)),
    )(xp, w_taps, bias.reshape(1, Cout))
    return out.reshape(B, H, W, Cout)


def dsconv_block(x_nhwc, w_dw_taps, w_pw, scale, shift, K, neg_slope=NEG_SLOPE):
    """Fused: depthwise KxK stride-2 conv -> 1x1 conv -> folded-BN affine -> LeakyReLU.

    x: (B, H, W, Cin); w_dw_taps: (K*K, Cin); w_pw: (Cin, Cout); scale/shift: (Cout,).
    """
    B, H, W, Cin = x_nhwc.shape
    assert H % 2 == 0 and W % 2 == 0, "dsconv_block assumes even spatial dims"
    Cout = w_pw.shape[1]
    pad = K // 2
    Ho = (H + 2 * pad - K) // 2 + 1
    Wo = (W + 2 * pad - K) // 2 + 1

    xp = jnp.pad(x_nhwc, ((0, 0), (pad, pad), (pad, pad), (0, 0)))
    # 4 spatial phases -> every stride-2 tap becomes a contiguous window slice.
    phases = [xp[:, p::2, q::2, :] for p in (0, 1) for q in (0, 1)]
    Hf, Wf = phases[0].shape[1], phases[0].shape[2]
    for ph in phases:
        assert ph.shape == (B, Hf, Wf, Cin)

    phase_spec = pl.BlockSpec((1, Hf, Wf, Cin), lambda b: (b, 0, 0, 0))
    out = pl.pallas_call(
        _make_dsconv_kernel(K, Ho, Wo, neg_slope),
        out_shape=jax.ShapeDtypeStruct((B, Ho * Wo, Cout), x_nhwc.dtype),
        grid_spec=pltpu.PrefetchScalarGridSpec(
            num_scalar_prefetch=0,
            grid=(B,),
            in_specs=[phase_spec] * 4 + [
                pl.BlockSpec((K * K, Cin), lambda b: (0, 0)),
                pl.BlockSpec((Cin, Cout), lambda b: (0, 0)),
                pl.BlockSpec((1, Cout), lambda b: (0, 0)),
                pl.BlockSpec((1, Cout), lambda b: (0, 0)),
            ],
            out_specs=pl.BlockSpec((1, Ho * Wo, Cout), lambda b: (b, 0, 0)),
        ),
        compiler_params=pltpu.CompilerParams(
            dimension_semantics=("parallel",)),
    )(*phases, w_dw_taps, w_pw, scale.reshape(1, Cout), shift.reshape(1, Cout))
    return out.reshape(B, Ho, Wo, Cout)


# ---------------------------------------------------------------------------
# Encoder forward (wrapper-side glue: layout, padding, BN/bias folding)
# ---------------------------------------------------------------------------
def _fold_bn_affine(w_pw, b_dw, b_pw, gamma, beta, mean, var, eps=BN_EPS):
    """Fold eval-mode BatchNorm and both conv biases into one per-channel affine.

    z = BN((dw(x)+b_dw) @ W_pw + b_pw) = (dw(x) @ W_pw) * scale + shift
    """
    s = gamma * lax.rsqrt(var + eps)
    base = jnp.zeros_like(gamma)
    if b_pw is not None:
        base = base + b_pw
    if b_dw is not None:
        base = base + b_dw @ w_pw
    shift = (base - mean) * s + beta
    return s, shift


def encoder_forward(x_nchw, params):
    """x: (B, Cin, H, W) NCHW like PyTorch.  Returns (x1, x2, x3, x4) in NCHW."""
    x = jnp.transpose(x_nchw, (0, 2, 3, 1))                      # NCHW -> NHWC
    x1 = conv2d_same_s1(x, params["w1_taps"], params["b1"])
    outs_nhwc = [x1]
    y = x1
    for blk in params["blocks"]:
        scale, shift = _fold_bn_affine(blk["w_pw"], blk["b_dw"], blk["b_pw"],
                                       blk["gamma"], blk["beta"],
                                       blk["mean"], blk["var"])
        y = dsconv_block(y, blk["w_dw_taps"], blk["w_pw"], scale, shift, blk["K"])
        outs_nhwc.append(y)
    return tuple(jnp.transpose(t, (0, 3, 1, 2)) for t in outs_nhwc)  # -> NCHW


# ---------------------------------------------------------------------------
# Parameters (PyTorch layouts) + repack into kernel layouts
# ---------------------------------------------------------------------------
def init_params(key, in_channel, embed_dim, bias=True):
    ks = iter(jax.random.split(key, 32))

    def nrm(shape, scale):
        return scale * jax.random.normal(next(ks), shape, dtype=jnp.float32)

    p = {
        "w1_oihw": nrm((embed_dim, in_channel, 5, 5), 1.0 / math.sqrt(in_channel * 25)),
        "b1": nrm((embed_dim,), 0.1) if bias else jnp.zeros((embed_dim,), jnp.float32),
        "blocks": [],
    }
    c = embed_dim
    for K in (5, 3, 3):
        co = c * 2
        p["blocks"].append({
            "K": K,
            "w_dw_oihw": nrm((c, 1, K, K), 1.0 / math.sqrt(K * K)),
            "b_dw": nrm((c,), 0.1) if bias else None,
            "w_pw_oihw": nrm((co, c, 1, 1), 1.0 / math.sqrt(c)),
            "b_pw": nrm((co,), 0.1) if bias else None,
            "gamma": 1.0 + 0.1 * jax.random.normal(next(ks), (co,), dtype=jnp.float32),
            "beta": nrm((co,), 0.1),
            "mean": nrm((co,), 0.1),
            "var": jax.random.uniform(next(ks), (co,), minval=0.5, maxval=1.5,
                                      dtype=jnp.float32),
        })
        c = co
    return p


def repack_for_kernels(p):
    e, cin = p["w1_oihw"].shape[0], p["w1_oihw"].shape[1]
    kp = {
        # (E, Cin, K, K) -> (K*K, Cin, E)   tap-major
        "w1_taps": jnp.transpose(p["w1_oihw"], (2, 3, 1, 0)).reshape(-1, cin, e),
        "b1": p["b1"],
        "blocks": [],
    }
    for blk in p["blocks"]:
        K = blk["K"]
        c = blk["w_dw_oihw"].shape[0]
        kp["blocks"].append({
            "K": K,
            # (Cin, 1, K, K) -> (K*K, Cin)
            "w_dw_taps": jnp.transpose(blk["w_dw_oihw"], (2, 3, 0, 1)).reshape(K * K, c),
            # (Cout, Cin, 1, 1) -> (Cin, Cout)
            "w_pw": blk["w_pw_oihw"][:, :, 0, 0].T,
            "b_dw": blk["b_dw"],
            "b_pw": blk["b_pw"],
            "gamma": blk["gamma"],
            "beta": blk["beta"],
            "mean": blk["mean"],
            "var": blk["var"],
        })
    return kp


# ---------------------------------------------------------------------------
# Pure-JAX reference (PyTorch semantics, eval-mode BatchNorm)
# ---------------------------------------------------------------------------
def reference_encoder(x_nchw, p, eps=BN_EPS, slope=NEG_SLOPE):
    def conv(x, w, b, stride, pad, groups=1):
        y = lax.conv_general_dilated(
            x, w, (stride, stride), ((pad, pad), (pad, pad)),
            dimension_numbers=("NCHW", "OIHW", "NCHW"),
            feature_group_count=groups, precision=lax.Precision.HIGHEST)
        if b is not None:
            y = y + b[None, :, None, None]
        return y

    def bn(x, g, bt, m, v):
        s = g * lax.rsqrt(v + eps)
        return x * s[None, :, None, None] + (bt - m * s)[None, :, None, None]

    def lrelu(x):
        return jnp.maximum(x, slope * x)

    x1 = conv(x_nchw, p["w1_oihw"], p["b1"], 1, 2)
    outs = [x1]
    y = x1
    for blk in p["blocks"]:
        K = blk["K"]
        y = conv(y, blk["w_dw_oihw"], blk["b_dw"], 2, K // 2, groups=y.shape[1])
        y = conv(y, blk["w_pw_oihw"], blk["b_pw"], 1, 0)
        y = lrelu(bn(y, blk["gamma"], blk["beta"], blk["mean"], blk["var"]))
        outs.append(y)
    return tuple(outs)


# ---------------------------------------------------------------------------
if __name__ == "__main__":
    B, Cin, H, W = 2, 4, 16, 16
    embed_dim = 8

    key = jax.random.PRNGKey(0)
    kx, kp = jax.random.split(key)
    x = jax.random.normal(kx, (B, Cin, H, W), dtype=jnp.float32)

    torch_params = init_params(kp, Cin, embed_dim, bias=True)
    kernel_params = repack_for_kernels(torch_params)

    outs = encoder_forward(x, kernel_params)
    outs = jax.block_until_ready(outs)

    refs = reference_encoder(x, torch_params)
    expected_shapes = [
        (B, embed_dim, H, W),
        (B, embed_dim * 2, H // 2, W // 2),
        (B, embed_dim * 4, H // 4, W // 4),
        (B, embed_dim * 8, H // 8, W // 8),
    ]
    for o, r, s in zip(outs, refs, expected_shapes):
        assert o.shape == s, (o.shape, s)
        assert jnp.allclose(o, r, atol=1e-3, rtol=1e-3), float(jnp.max(jnp.abs(o - r)))

    print("KERNEL_OK")
</pallas_src>

<mosaic_0001>
module attributes {stable_mosaic.version = 11 : i64} {
  func.func @kernel(%arg0: i32, %arg1: memref<1x20x20x4xf32, #tpu.memory_space<vmem>>, %arg2: memref<25x4x8xf32, #tpu.memory_space<vmem>>, %arg3: memref<1x8xf32, #tpu.memory_space<vmem>>, %arg4: memref<1x256x8xf32, #tpu.memory_space<vmem>>) attributes {dimension_semantics = [#tpu.dimension_semantics<parallel>], iteration_bounds = array<i64: 2>, scalar_prefetch = 0 : i64, scratch_operands = 0 : i64, tpu.core_type = #tpu.core_type<tc>, window_params = [{transform_indices = @transform_0, window_bounds = array<i64: 1, 20, 20, 4>}, {pipeline_mode = #tpu.pipeline_mode<synchronous>, transform_indices = @transform_1, window_bounds = array<i64: 25, 4, 8>}, {pipeline_mode = #tpu.pipeline_mode<synchronous>, transform_indices = @transform_2, window_bounds = array<i64: 1, 8>}, {transform_indices = @transform_3, window_bounds = array<i64: 1, 256, 8>}]} {
    %c0 = arith.constant 0 : index
    %c0_0 = arith.constant 0 : index
    %c0_1 = arith.constant 0 : index
    %c0_2 = arith.constant 0 : index
    %0 = vector.load %arg1[%c0, %c0_0, %c0_1, %c0_2] : memref<1x20x20x4xf32, #tpu.memory_space<vmem>>, vector<1x20x20x4xf32>
    %1 = vector.shape_cast %0 : vector<1x20x20x4xf32> to vector<20x20x4xf32>
    %cst = arith.constant 0.000000e+00 : f32
    %2 = vector.broadcast %cst : f32 to vector<256x8xf32>
    %3 = vector.extract_strided_slice %1 {offsets = [0, 0, 0], sizes = [16, 16, 4], strides = [1, 1, 1]} : vector<20x20x4xf32> to vector<16x16x4xf32>
    %4 = vector.shape_cast %3 : vector<16x16x4xf32> to vector<256x4xf32>
    %c0_3 = arith.constant 0 : index
    %c0_4 = arith.constant 0 : index
    %c0_5 = arith.constant 0 : index
    %5 = vector.load %arg2[%c0_3, %c0_4, %c0_5] : memref<25x4x8xf32, #tpu.memory_space<vmem>>, vector<1x4x8xf32>
    %6 = vector.shape_cast %5 : vector<1x4x8xf32> to vector<4x8xf32>
    %cst_6 = arith.constant dense<0.000000e+00> : vector<256x8xf32>
    %7 = tpu.matmul %4, %6, %cst_6 {dimension_numbers = #tpu.dot_dimension_numbers<[1], [0], [0], [1], [0, 0, 1, 1], [], []>} : vector<256x4xf32>, vector<4x8xf32>, vector<256x8xf32> -> vector<256x8xf32>
    %8 = arith.addf %2, %7 : vector<256x8xf32>
    %9 = vector.extract_strided_slice %1 {offsets = [0, 1, 0], sizes = [16, 16, 4], strides = [1, 1, 1]} : vector<20x20x4xf32> to vector<16x16x4xf32>
    %10 = vector.shape_cast %9 : vector<16x16x4xf32> to vector<256x4xf32>
    %c1 = arith.constant 1 : index
    %c0_7 = arith.constant 0 : index
    %c0_8 = arith.constant 0 : index
    %11 = vector.load %arg2[%c1, %c0_7, %c0_8] : memref<25x4x8xf32, #tpu.memory_space<vmem>>, vector<1x4x8xf32>
    %12 = vector.shape_cast %11 : vector<1x4x8xf32> to vector<4x8xf32>
    %cst_9 = arith.constant dense<0.000000e+00> : vector<256x8xf32>
    %13 = tpu.matmul %10, %12, %cst_9 {dimension_numbers = #tpu.dot_dimension_numbers<[1], [0], [0], [1], [0, 0, 1, 1], [], []>} : vector<256x4xf32>, vector<4x8xf32>, vector<256x8xf32> -> vector<256x8xf32>
    %14 = arith.addf %8, %13 : vector<256x8xf32>
    %15 = vector.extract_strided_slice %1 {offsets = [0, 2, 0], sizes = [16, 16, 4], strides = [1, 1, 1]} : vector<20x20x4xf32> to vector<16x16x4xf32>
    %16 = vector.shape_cast %15 : vector<16x16x4xf32> to vector<256x4xf32>
    %c2 = arith.constant 2 : index
    %c0_10 = arith.constant 0 : index
    %c0_11 = arith.constant 0 : index
    %17 = vector.load %arg2[%c2, %c0_10, %c0_11] : memref<25x4x8xf32, #tpu.memory_space<vmem>>, vector<1x4x8xf32>
    %18 = vector.shape_cast %17 : vector<1x4x8xf32> to vector<4x8xf32>
    %cst_12 = arith.constant dense<0.000000e+00> : vector<256x8xf32>
    %19 = tpu.matmul %16, %18, %cst_12 {dimension_numbers = #tpu.dot_dimension_numbers<[1], [0], [0], [1], [0, 0, 1, 1], [], []>} : vector<256x4xf32>, vector<4x8xf32>, vector<256x8xf32> -> vector<256x8xf32>
    %20 = arith.addf %14, %19 : vector<256x8xf32>
    %21 = vector.extract_strided_slice %1 {offsets = [0, 3, 0], sizes = [16, 16, 4], strides = [1, 1, 1]} : vector<20x20x4xf32> to vector<16x16x4xf32>
    %22 = vector.shape_cast %21 : vector<16x16x4xf32> to vector<256x4xf32>
    %c3 = arith.constant 3 : index
    %c0_13 = arith.constant 0 : index
    %c0_14 = arith.constant 0 : index
    %23 = vector.load %arg2[%c3, %c0_13, %c0_14] : memref<25x4x8xf32, #tpu.memory_space<vmem>>, vector<1x4x8xf32>
    %24 = vector.shape_cast %23 : vector<1x4x8xf32> to vector<4x8xf32>
    %cst_15 = arith.constant dense<0.000000e+00> : vector<256x8xf32>
    %25 = tpu.matmul %22, %24, %cst_15 {dimension_numbers = #tpu.dot_dimension_numbers<[1], [0], [0], [1], [0, 0, 1, 1], [], []>} : vector<256x4xf32>, vector<4x8xf32>, vector<256x8xf32> -> vector<256x8xf32>
    %26 = arith.addf %20, %25 : vector<256x8xf32>
    %27 = vector.extract_strided_slice %1 {offsets = [0, 4, 0], sizes = [16, 16, 4], strides = [1, 1, 1]} : vector<20x20x4xf32> to vector<16x16x4xf32>
    %28 = vector.shape_cast %27 : vector<16x16x4xf32> to vector<256x4xf32>
    %c4 = arith.constant 4 : index
    %c0_16 = arith.constant 0 : index
    %c0_17 = arith.constant 0 : index
    %29 = vector.load %arg2[%c4, %c0_16, %c0_17] : memref<25x4x8xf32, #tpu.memory_space<vmem>>, vector<1x4x8xf32>
    %30 = vector.shape_cast %29 : vector<1x4x8xf32> to vector<4x8xf32>
    %cst_18 = arith.constant dense<0.000000e+00> : vector<256x8xf32>
    %31 = tpu.matmul %28, %30, %cst_18 {dimension_numbers = #tpu.dot_dimension_numbers<[1], [0], [0], [1], [0, 0, 1, 1], [], []>} : vector<256x4xf32>, vector<4x8xf32>, vector<256x8xf32> -> vector<256x8xf32>
    %32 = arith.addf %26, %31 : vector<256x8xf32>
    %33 = vector.extract_strided_slice %1 {offsets = [1, 0, 0], sizes = [16, 16, 4], strides = [1, 1, 1]} : vector<20x20x4xf32> to vector<16x16x4xf32>
    %34 = vector.shape_cast %33 : vector<16x16x4xf32> to vector<256x4xf32>
    %c5 = arith.constant 5 : index
    %c0_19 = arith.constant 0 : index
    %c0_20 = arith.constant 0 : index
    %35 = vector.load %arg2[%c5, %c0_19, %c0_20] : memref<25x4x8xf32, #tpu.memory_space<vmem>>, vector<1x4x8xf32>
    %36 = vector.shape_cast %35 : vector<1x4x8xf32> to vector<4x8xf32>
    %cst_21 = arith.constant dense<0.000000e+00> : vector<256x8xf32>
    %37 = tpu.matmul %34, %36, %cst_21 {dimension_numbers = #tpu.dot_dimension_numbers<[1], [0], [0], [1], [0, 0, 1, 1], [], []>} : vector<256x4xf32>, vector<4x8xf32>, vector<256x8xf32> -> vector<256x8xf32>
    %38 = arith.addf %32, %37 : vector<256x8xf32>
    %39 = vector.extract_strided_slice %1 {offsets = [1, 1, 0], sizes = [16, 16, 4], strides = [1, 1, 1]} : vector<20x20x4xf32> to vector<16x16x4xf32>
    %40 = vector.shape_cast %39 : vector<16x16x4xf32> to vector<256x4xf32>
    %c6 = arith.constant 6 : index
    %c0_22 = arith.constant 0 : index
    %c0_23 = arith.constant 0 : index
    %41 = vector.load %arg2[%c6, %c0_22, %c0_23] : memref<25x4x8xf32, #tpu.memory_space<vmem>>, vector<1x4x8xf32>
    %42 = vector.shape_cast %41 : vector<1x4x8xf32> to vector<4x8xf32>
    %cst_24 = arith.constant dense<0.000000e+00> : vector<256x8xf32>
    %43 = tpu.matmul %40, %42, %cst_24 {dimension_numbers = #tpu.dot_dimension_numbers<[1], [0], [0], [1], [0, 0, 1, 1], [], []>} : vector<256x4xf32>, vector<4x8xf32>, vector<256x8xf32> -> vector<256x8xf32>
    %44 = arith.addf %38, %43 : vector<256x8xf32>
    %45 = vector.extract_strided_slice %1 {offsets = [1, 2, 0], sizes = [16, 16, 4], strides = [1, 1, 1]} : vector<20x20x4xf32> to vector<16x16x4xf32>
    %46 = vector.shape_cast %45 : vector<16x16x4xf32> to vector<256x4xf32>
    %c7 = arith.constant 7 : index
    %c0_25 = arith.constant 0 : index
    %c0_26 = arith.constant 0 : index
    %47 = vector.load %arg2[%c7, %c0_25, %c0_26] : memref<25x4x8xf32, #tpu.memory_space<vmem>>, vector<1x4x8xf32>
    %48 = vector.shape_cast %47 : vector<1x4x8xf32> to vector<4x8xf32>
    %cst_27 = arith.constant dense<0.000000e+00> : vector<256x8xf32>
    %49 = tpu.matmul %46, %48, %cst_27 {dimension_numbers = #tpu.dot_dimension_numbers<[1], [0], [0], [1], [0, 0, 1, 1], [], []>} : vector<256x4xf32>, vector<4x8xf32>, vector<256x8xf32> -> vector<256x8xf32>
    %50 = arith.addf %44, %49 : vector<256x8xf32>
    %51 = vector.extract_strided_slice %1 {offsets = [1, 3, 0], sizes = [16, 16, 4], strides = [1, 1, 1]} : vector<20x20x4xf32> to vector<16x16x4xf32>
    %52 = vector.shape_cast %51 : vector<16x16x4xf32> to vector<256x4xf32>
    %c8 = arith.constant 8 : index
    %c0_28 = arith.constant 0 : index
    %c0_29 = arith.constant 0 : index
    %53 = vector.load %arg2[%c8, %c0_28, %c0_29] : memref<25x4x8xf32, #tpu.memory_space<vmem>>, vector<1x4x8xf32>
    %54 = vector.shape_cast %53 : vector<1x4x8xf32> to vector<4x8xf32>
    %cst_30 = arith.constant dense<0.000000e+00> : vector<256x8xf32>
    %55 = tpu.matmul %52, %54, %cst_30 {dimension_numbers = #tpu.dot_dimension_numbers<[1], [0], [0], [1], [0, 0, 1, 1], [], []>} : vector<256x4xf32>, vector<4x8xf32>, vector<256x8xf32> -> vector<256x8xf32>
    %56 = arith.addf %50, %55 : vector<256x8xf32>
    %57 = vector.extract_strided_slice %1 {offsets = [1, 4, 0], sizes = [16, 16, 4], strides = [1, 1, 1]} : vector<20x20x4xf32> to vector<16x16x4xf32>
    %58 = vector.shape_cast %57 : vector<16x16x4xf32> to vector<256x4xf32>
    %c9 = arith.constant 9 : index
    %c0_31 = arith.constant 0 : index
    %c0_32 = arith.constant 0 : index
    %59 = vector.load %arg2[%c9, %c0_31, %c0_32] : memref<25x4x8xf32, #tpu.memory_space<vmem>>, vector<1x4x8xf32>
    %60 = vector.shape_cast %59 : vector<1x4x8xf32> to vector<4x8xf32>
    %cst_33 = arith.constant dense<0.000000e+00> : vector<256x8xf32>
    %61 = tpu.matmul %58, %60, %cst_33 {dimension_numbers = #tpu.dot_dimension_numbers<[1], [0], [0], [1], [0, 0, 1, 1], [], []>} : vector<256x4xf32>, vector<4x8xf32>, vector<256x8xf32> -> vector<256x8xf32>
    %62 = arith.addf %56, %61 : vector<256x8xf32>
    %63 = vector.extract_strided_slice %1 {offsets = [2, 0, 0], sizes = [16, 16, 4], strides = [1, 1, 1]} : vector<20x20x4xf32> to vector<16x16x4xf32>
    %64 = vector.shape_cast %63 : vector<16x16x4xf32> to vector<256x4xf32>
    %c10 = arith.constant 10 : index
    %c0_34 = arith.constant 0 : index
    %c0_35 = arith.constant 0 : index
    %65 = vector.load %arg2[%c10, %c0_34, %c0_35] : memref<25x4x8xf32, #tpu.memory_space<vmem>>, vector<1x4x8xf32>
    %66 = vector.shape_cast %65 : vector<1x4x8xf32> to vector<4x8xf32>
    %cst_36 = arith.constant dense<0.000000e+00> : vector<256x8xf32>
    %67 = tpu.matmul %64, %66, %cst_36 {dimension_numbers = #tpu.dot_dimension_numbers<[1], [0], [0], [1], [0, 0, 1, 1], [], []>} : vector<256x4xf32>, vector<4x8xf32>, vector<256x8xf32> -> vector<256x8xf32>
    %68 = arith.addf %62, %67 : vector<256x8xf32>
    %69 = vector.extract_strided_slice %1 {offsets = [2, 1, 0], sizes = [16, 16, 4], strides = [1, 1, 1]} : vector<20x20x4xf32> to vector<16x16x4xf32>
    %70 = vector.shape_cast %69 : vector<16x16x4xf32> to vector<256x4xf32>
    %c11 = arith.constant 11 : index
    %c0_37 = arith.constant 0 : index
    %c0_38 = arith.constant 0 : index
    %71 = vector.load %arg2[%c11, %c0_37, %c0_38] : memref<25x4x8xf32, #tpu.memory_space<vmem>>, vector<1x4x8xf32>
    %72 = vector.shape_cast %71 : vector<1x4x8xf32> to vector<4x8xf32>
    %cst_39 = arith.constant dense<0.000000e+00> : vector<256x8xf32>
    %73 = tpu.matmul %70, %72, %cst_39 {dimension_numbers = #tpu.dot_dimension_numbers<[1], [0], [0], [1], [0, 0, 1, 1], [], []>} : vector<256x4xf32>, vector<4x8xf32>, vector<256x8xf32> -> vector<256x8xf32>
    %74 = arith.addf %68, %73 : vector<256x8xf32>
    %75 = vector.extract_strided_slice %1 {offsets = [2, 2, 0], sizes = [16, 16, 4], strides = [1, 1, 1]} : vector<20x20x4xf32> to vector<16x16x4xf32>
    %76 = vector.shape_cast %75 : vector<16x16x4xf32> to vector<256x4xf32>
    %c12 = arith.constant 12 : index
    %c0_40 = arith.constant 0 : index
    %c0_41 = arith.constant 0 : index
    %77 = vector.load %arg2[%c12, %c0_40, %c0_41] : memref<25x4x8xf32, #tpu.memory_space<vmem>>, vector<1x4x8xf32>
    %78 = vector.shape_cast %77 : vector<1x4x8xf32> to vector<4x8xf32>
    %cst_42 = arith.constant dense<0.000000e+00> : vector<256x8xf32>
    %79 = tpu.matmul %76, %78, %cst_42 {dimension_numbers = #tpu.dot_dimension_numbers<[1], [0], [0], [1], [0, 0, 1, 1], [], []>} : vector<256x4xf32>, vector<4x8xf32>, vector<256x8xf32> -> vector<256x8xf32>
    %80 = arith.addf %74, %79 : vector<256x8xf32>
    %81 = vector.extract_strided_slice %1 {offsets = [2, 3, 0], sizes = [16, 16, 4], strides = [1, 1, 1]} : vector<20x20x4xf32> to vector<16x16x4xf32>
    %82 = vector.shape_cast %81 : vector<16x16x4xf32> to vector<256x4xf32>
    %c13 = arith.constant 13 : index
    %c0_43 = arith.constant 0 : index
    %c0_44 = arith.constant 0 : index
    %83 = vector.load %arg2[%c13, %c0_43, %c0_44] : memref<25x4x8xf32, #tpu.memory_space<vmem>>, vector<1x4x8xf32>
    %84 = vector.shape_cast %83 : vector<1x4x8xf32> to vector<4x8xf32>
    %cst_45 = arith.constant dense<0.000000e+00> : vector<256x8xf32>
    %85 = tpu.matmul %82, %84, %cst_45 {dimension_numbers = #tpu.dot_dimension_numbers<[1], [0], [0], [1], [0, 0, 1, 1], [], []>} : vector<256x4xf32>, vector<4x8xf32>, vector<256x8xf32> -> vector<256x8xf32>
    %86 = arith.addf %80, %85 : vector<256x8xf32>
    %87 = vector.extract_strided_slice %1 {offsets = [2, 4, 0], sizes = [16, 16, 4], strides = [1, 1, 1]} : vector<20x20x4xf32> to vector<16x16x4xf32>
    %88 = vector.shape_cast %87 : vector<16x16x4xf32> to vector<256x4xf32>
    %c14 = arith.constant 14 : index
    %c0_46 = arith.constant 0 : index
    %c0_47 = arith.constant 0 : index
    %89 = vector.load %arg2[%c14, %c0_46, %c0_47] : memref<25x4x8xf32, #tpu.memory_space<vmem>>, vector<1x4x8xf32>
    %90 = vector.shape_cast %89 : vector<1x4x8xf32> to vector<4x8xf32>
    %cst_48 = arith.constant dense<0.000000e+00> : vector<256x8xf32>
    %91 = tpu.matmul %88, %90, %cst_48 {dimension_numbers = #tpu.dot_dimension_numbers<[1], [0], [0], [1], [0, 0, 1, 1], [], []>} : vector<256x4xf32>, vector<4x8xf32>, vector<256x8xf32> -> vector<256x8xf32>
    %92 = arith.addf %86, %91 : vector<256x8xf32>
    %93 = vector.extract_strided_slice %1 {offsets = [3, 0, 0], sizes = [16, 16, 4], strides = [1, 1, 1]} : vector<20x20x4xf32> to vector<16x16x4xf32>
    %94 = vector.shape_cast %93 : vector<16x16x4xf32> to vector<256x4xf32>
    %c15 = arith.constant 15 : index
    %c0_49 = arith.constant 0 : index
    %c0_50 = arith.constant 0 : index
    %95 = vector.load %arg2[%c15, %c0_49, %c0_50] : memref<25x4x8xf32, #tpu.memory_space<vmem>>, vector<1x4x8xf32>
    %96 = vector.shape_cast %95 : vector<1x4x8xf32> to vector<4x8xf32>
    %cst_51 = arith.constant dense<0.000000e+00> : vector<256x8xf32>
    %97 = tpu.matmul %94, %96, %cst_51 {dimension_numbers = #tpu.dot_dimension_numbers<[1], [0], [0], [1], [0, 0, 1, 1], [], []>} : vector<256x4xf32>, vector<4x8xf32>, vector<256x8xf32> -> vector<256x8xf32>
    %98 = arith.addf %92, %97 : vector<256x8xf32>
    %99 = vector.extract_strided_slice %1 {offsets = [3, 1, 0], sizes = [16, 16, 4], strides = [1, 1, 1]} : vector<20x20x4xf32> to vector<16x16x4xf32>
    %100 = vector.shape_cast %99 : vector<16x16x4xf32> to vector<256x4xf32>
    %c16 = arith.constant 16 : index
    %c0_52 = arith.constant 0 : index
    %c0_53 = arith.constant 0 : index
    %101 = vector.load %arg2[%c16, %c0_52, %c0_53] : memref<25x4x8xf32, #tpu.memory_space<vmem>>, vector<1x4x8xf32>
    %102 = vector.shape_cast %101 : vector<1x4x8xf32> to vector<4x8xf32>
    %cst_54 = arith.constant dense<0.000000e+00> : vector<256x8xf32>
    %103 = tpu.matmul %100, %102, %cst_54 {dimension_numbers = #tpu.dot_dimension_numbers<[1], [0], [0], [1], [0, 0, 1, 1], [], []>} : vector<256x4xf32>, vector<4x8xf32>, vector<256x8xf32> -> vector<256x8xf32>
    %104 = arith.addf %98, %103 : vector<256x8xf32>
    %105 = vector.extract_strided_slice %1 {offsets = [3, 2, 0], sizes = [16, 16, 4], strides = [1, 1, 1]} : vector<20x20x4xf32> to vector<16x16x4xf32>
    %106 = vector.shape_cast %105 : vector<16x16x4xf32> to vector<256x4xf32>
    %c17 = arith.constant 17 : index
    %c0_55 = arith.constant 0 : index
    %c0_56 = arith.constant 0 : index
    %107 = vector.load %arg2[%c17, %c0_55, %c0_56] : memref<25x4x8xf32, #tpu.memory_space<vmem>>, vector<1x4x8xf32>
    %108 = vector.shape_cast %107 : vector<1x4x8xf32> to vector<4x8xf32>
    %cst_57 = arith.constant dense<0.000000e+00> : vector<256x8xf32>
    %109 = tpu.matmul %106, %108, %cst_57 {dimension_numbers = #tpu.dot_dimension_numbers<[1], [0], [0], [1], [0, 0, 1, 1], [], []>} : vector<256x4xf32>, vector<4x8xf32>, vector<256x8xf32> -> vector<256x8xf32>
    %110 = arith.addf %104, %109 : vector<256x8xf32>
    %111 = vector.extract_strided_slice %1 {offsets = [3, 3, 0], sizes = [16, 16, 4], strides = [1, 1, 1]} : vector<20x20x4xf32> to vector<16x16x4xf32>
    %112 = vector.shape_cast %111 : vector<16x16x4xf32> to vector<256x4xf32>
    %c18 = arith.constant 18 : index
    %c0_58 = arith.constant 0 : index
    %c0_59 = arith.constant 0 : index
    %113 = vector.load %arg2[%c18, %c0_58, %c0_59] : memref<25x4x8xf32, #tpu.memory_space<vmem>>, vector<1x4x8xf32>
    %114 = vector.shape_cast %113 : vector<1x4x8xf32> to vector<4x8xf32>
    %cst_60 = arith.constant dense<0.000000e+00> : vector<256x8xf32>
    %115 = tpu.matmul %112, %114, %cst_60 {dimension_numbers = #tpu.dot_dimension_numbers<[1], [0], [0], [1], [0, 0, 1, 1], [], []>} : vector<256x4xf32>, vector<4x8xf32>, vector<256x8xf32> -> vector<256x8xf32>
    %116 = arith.addf %110, %115 : vector<256x8xf32>
    %117 = vector.extract_strided_slice %1 {offsets = [3, 4, 0], sizes = [16, 16, 4], strides = [1, 1, 1]} : vector<20x20x4xf32> to vector<16x16x4xf32>
    %118 = vector.shape_cast %117 : vector<16x16x4xf32> to vector<256x4xf32>
    %c19 = arith.constant 19 : index
    %c0_61 = arith.constant 0 : index
    %c0_62 = arith.constant 0 : index
    %119 = vector.load %arg2[%c19, %c0_61, %c0_62] : memref<25x4x8xf32, #tpu.memory_space<vmem>>, vector<1x4x8xf32>
    %120 = vector.shape_cast %119 : vector<1x4x8xf32> to vector<4x8xf32>
    %cst_63 = arith.constant dense<0.000000e+00> : vector<256x8xf32>
    %121 = tpu.matmul %118, %120, %cst_63 {dimension_numbers = #tpu.dot_dimension_numbers<[1], [0], [0], [1], [0, 0, 1, 1], [], []>} : vector<256x4xf32>, vector<4x8xf32>, vector<256x8xf32> -> vector<256x8xf32>
    %122 = arith.addf %116, %121 : vector<256x8xf32>
    %123 = vector.extract_strided_slice %1 {offsets = [4, 0, 0], sizes = [16, 16, 4], strides = [1, 1, 1]} : vector<20x20x4xf32> to vector<16x16x4xf32>
    %124 = vector.shape_cast %123 : vector<16x16x4xf32> to vector<256x4xf32>
    %c20 = arith.constant 20 : index
    %c0_64 = arith.constant 0 : index
    %c0_65 = arith.constant 0 : index
    %125 = vector.load %arg2[%c20, %c0_64, %c0_65] : memref<25x4x8xf32, #tpu.memory_space<vmem>>, vector<1x4x8xf32>
    %126 = vector.shape_cast %125 : vector<1x4x8xf32> to vector<4x8xf32>
    %cst_66 = arith.constant dense<0.000000e+00> : vector<256x8xf32>
    %127 = tpu.matmul %124, %126, %cst_66 {dimension_numbers = #tpu.dot_dimension_numbers<[1], [0], [0], [1], [0, 0, 1, 1], [], []>} : vector<256x4xf32>, vector<4x8xf32>, vector<256x8xf32> -> vector<256x8xf32>
    %128 = arith.addf %122, %127 : vector<256x8xf32>
    %129 = vector.extract_strided_slice %1 {offsets = [4, 1, 0], sizes = [16, 16, 4], strides = [1, 1, 1]} : vector<20x20x4xf32> to vector<16x16x4xf32>
    %130 = vector.shape_cast %129 : vector<16x16x4xf32> to vector<256x4xf32>
    %c21 = arith.constant 21 : index
    %c0_67 = arith.constant 0 : index
    %c0_68 = arith.constant 0 : index
    %131 = vector.load %arg2[%c21, %c0_67, %c0_68] : memref<25x4x8xf32, #tpu.memory_space<vmem>>, vector<1x4x8xf32>
    %132 = vector.shape_cast %131 : vector<1x4x8xf32> to vector<4x8xf32>
    %cst_69 = arith.constant dense<0.000000e+00> : vector<256x8xf32>
    %133 = tpu.matmul %130, %132, %cst_69 {dimension_numbers = #tpu.dot_dimension_numbers<[1], [0], [0], [1], [0, 0, 1, 1], [], []>} : vector<256x4xf32>, vector<4x8xf32>, vector<256x8xf32> -> vector<256x8xf32>
    %134 = arith.addf %128, %133 : vector<256x8xf32>
    %135 = vector.extract_strided_slice %1 {offsets = [4, 2, 0], sizes = [16, 16, 4], strides = [1, 1, 1]} : vector<20x20x4xf32> to vector<16x16x4xf32>
    %136 = vector.shape_cast %135 : vector<16x16x4xf32> to vector<256x4xf32>
    %c22 = arith.constant 22 : index
    %c0_70 = arith.constant 0 : index
    %c0_71 = arith.constant 0 : index
    %137 = vector.load %arg2[%c22, %c0_70, %c0_71] : memref<25x4x8xf32, #tpu.memory_space<vmem>>, vector<1x4x8xf32>
    %138 = vector.shape_cast %137 : vector<1x4x8xf32> to vector<4x8xf32>
    %cst_72 = arith.constant dense<0.000000e+00> : vector<256x8xf32>
    %139 = tpu.matmul %136, %138, %cst_72 {dimension_numbers = #tpu.dot_dimension_numbers<[1], [0], [0], [1], [0, 0, 1, 1], [], []>} : vector<256x4xf32>, vector<4x8xf32>, vector<256x8xf32> -> vector<256x8xf32>
    %140 = arith.addf %134, %139 : vector<256x8xf32>
    %141 = vector.extract_strided_slice %1 {offsets = [4, 3, 0], sizes = [16, 16, 4], strides = [1, 1, 1]} : vector<20x20x4xf32> to vector<16x16x4xf32>
    %142 = vector.shape_cast %141 : vector<16x16x4xf32> to vector<256x4xf32>
    %c23 = arith.constant 23 : index
    %c0_73 = arith.constant 0 : index
    %c0_74 = arith.constant 0 : index
    %143 = vector.load %arg2[%c23, %c0_73, %c0_74] : memref<25x4x8xf32, #tpu.memory_space<vmem>>, vector<1x4x8xf32>
    %144 = vector.shape_cast %143 : vector<1x4x8xf32> to vector<4x8xf32>
    %cst_75 = arith.constant dense<0.000000e+00> : vector<256x8xf32>
    %145 = tpu.matmul %142, %144, %cst_75 {dimension_numbers = #tpu.dot_dimension_numbers<[1], [0], [0], [1], [0, 0, 1, 1], [], []>} : vector<256x4xf32>, vector<4x8xf32>, vector<256x8xf32> -> vector<256x8xf32>
    %146 = arith.addf %140, %145 : vector<256x8xf32>
    %147 = vector.extract_strided_slice %1 {offsets = [4, 4, 0], sizes = [16, 16, 4], strides = [1, 1, 1]} : vector<20x20x4xf32> to vector<16x16x4xf32>
    %148 = vector.shape_cast %147 : vector<16x16x4xf32> to vector<256x4xf32>
    %c24 = arith.constant 24 : index
    %c0_76 = arith.constant 0 : index
    %c0_77 = arith.constant 0 : index
    %149 = vector.load %arg2[%c24, %c0_76, %c0_77] : memref<25x4x8xf32, #tpu.memory_space<vmem>>, vector<1x4x8xf32>
    %150 = vector.shape_cast %149 : vector<1x4x8xf32> to vector<4x8xf32>
    %cst_78 = arith.constant dense<0.000000e+00> : vector<256x8xf32>
    %151 = tpu.matmul %148, %150, %cst_78 {dimension_numbers = #tpu.dot_dimension_numbers<[1], [0], [0], [1], [0, 0, 1, 1], [], []>} : vector<256x4xf32>, vector<4x8xf32>, vector<256x8xf32> -> vector<256x8xf32>
    %152 = arith.addf %146, %151 : vector<256x8xf32>
    %c0_79 = arith.constant 0 : index
    %c0_80 = arith.constant 0 : index
    %153 = vector.load %arg3[%c0_79, %c0_80] : memref<1x8xf32, #tpu.memory_space<vmem>>, vector<1x8xf32>
    %154 = vector.broadcast %153 : vector<1x8xf32> to vector<256x8xf32>
    %155 = arith.addf %152, %154 : vector<256x8xf32>
    %c0_81 = arith.constant 0 : index
    %c0_82 = arith.constant 0 : index
    %c0_83 = arith.constant 0 : index
    %156 = vector.load %arg4[%c0_81, %c0_82, %c0_83] : memref<1x256x8xf32, #tpu.memory_space<vmem>>, vector<1x256x8xf32>
    %157 = vector.shape_cast %156 : vector<1x256x8xf32> to vector<256x8xf32>
    %158 = vector.shape_cast %155 : vector<256x8xf32> to vector<1x256x8xf32>
    tpu.vector_store %arg4[%c0_81, %c0_82, %c0_83], %158 {strides = array<i32>} : memref<1x256x8xf32, #tpu.memory_space<vmem>>, vector<1x256x8xf32>,
    return
  }
  func.func @transform_0(%arg0: i32) -> (i32, i32, i32, i32) {
    %c0_i32 = arith.constant 0 : i32
    %c0_i32_0 = arith.constant 0 : i32
    %c0_i32_1 = arith.constant 0 : i32
    %c0_i32_2 = arith.constant 0 : i32
    return %arg0, %c0_i32, %c0_i32_0, %c0_i32_1 : i32, i32, i32, i32
  }
  func.func @transform_1(%arg0: i32) -> (i32, i32, i32) {
    %c0_i32 = arith.constant 0 : i32
    %c0_i32_0 = arith.constant 0 : i32
    %c0_i32_1 = arith.constant 0 : i32
    %c0_i32_2 = arith.constant 0 : i32
    return %c0_i32, %c0_i32_0, %c0_i32_1 : i32, i32, i32
  }
  func.func @transform_2(%arg0: i32) -> (i32, i32) {
    %c0_i32 = arith.constant 0 : i32
    %c0_i32_0 = arith.constant 0 : i32
    %c0_i32_1 = arith.constant 0 : i32
    return %c0_i32, %c0_i32_0 : i32, i32
  }
  func.func @transform_3(%arg0: i32) -> (i32, i32, i32) {
    %c0_i32 = arith.constant 0 : i32
    %c0_i32_0 = arith.constant 0 : i32
    %c0_i32_1 = arith.constant 0 : i32
    return %arg0, %c0_i32, %c0_i32_0 : i32, i32, i32
  }
}

</mosaic_0001>

<llo_original>
// kernel: tpu_custom_call.1
$region0: #{tpu_custom_call.1}
  #allocation0 [shape = 'u32[]', space=smem, size = 0x4, offset = 0x4, fixed_abs, tag = 'smem constant byte address 0x4 - core index']
  #allocation1 [shape = 'u32[72,128]{1,0:T(1,128)}', space=vmem, size = 0x9000, scoped, tag = 'internal scratch']
  %s0 = inlined_call_operand.vmem [shape: f32[2,20,20,4], index: 0, kind: input, shape index: {}]
  %s1 = inlined_call_operand.vmem [shape: f32[25,4,8], index: 1, kind: input, shape index: {}]
  %s2 = inlined_call_operand.vmem [shape: f32[1,8], index: 2, kind: input, shape index: {}]
  %s3 = inlined_call_operand.vmem [shape: f32[2,256,8], index: 3, kind: output, shape index: {}]
  %s4 = sld [smem:[#allocation0]]
  $region45: #{tpu_custom_call.1} parent=0
    _
  %s6 = ssub.s32 1, %s4
  %s7 = scalar_select 0, %s6, %s4
  loop: start=0, step=1, limit=4
  $region2: #{tpu_custom_call.1} parent=0 // loop_pre_header
    _
  $region3: #{tpu_custom_call.1} parent=0 // loop_header
    %s9 = sphi 0, %s13
    %p10 = scmp.ge.s32.totalorder %s9, 4
    %s19 = sphi 0, %s21
    %s22 = sphi 0, %s19
    %s23 = sphi 0, %s22
    %s39 = sphi 0, %s23
    %s43 = sphi 0, %s43
    %s45 = sphi 0, %s43
    %s46 = sphi 0, %s45
    %s60 = sphi 0, %s46
    %s64 = sphi 0, %s64
    %s66 = sphi 0, %s64
    %s67 = sphi 0, %s66
    %s81 = sphi 0, %s67
    %s87 = sphi 0, %s89
    %s90 = sphi 0, %s87
    %s91 = sphi 0, %s90
    %s107 = sphi 0, %s91
  $region4: #{tpu_custom_call.1} parent=0 // loop_header_branch
    %12 = sbr.rel (%p10) target = $region8
  $region5: #{tpu_custom_call.1} parent=0 // loop_body
    %s14 = ssub.s32 %s9, 1
    %s15 = ssub.s32 %s9, 2
    %s16 = sadd.s32 %s9, 1
    %s17 = ssub.s32 %s9, %s16
    %p18 = scmp.eq.s32.totalorder %s17, 0
    %s20 = sadd.s32 %s19, 1
    %s21 = scalar_select %p18, %s19, %s20
    %p24 = pneg %p18
    %p25 = scmp.eq.s32.totalorder %s9, 1
    %p26 = por %p24, %p25
    %p27 = scmp.ne.s32.totalorder %s19, %s22
    %p28 = scmp.eq.s32.totalorder %s9, 0
    %p29 = por %p27, %p28
    %p30 = scmp.ne.s32.totalorder %s19, %s22
    %p31 = scmp.eq.s32.totalorder %s14, 1
    %p32 = por %p30, %p31
    %p33 = scmp.ne.s32.totalorder %s22, %s23
    %p34 = scmp.eq.s32.totalorder %s14, 0
    %p35 = por %p33, %p34
    %p36 = scmp.ne.s32.totalorder %s22, %s23
    %p37 = scmp.eq.s32.totalorder %s15, 1
    %p38 = por %p36, %p37
    %p40 = scmp.ne.s32.totalorder %s23, %s39
    %p41 = scmp.eq.s32.totalorder %s15, 0
    %p42 = por %p40, %p41
    %s44 = sadd.s32 %s43, 1
    %p47 = scmp.eq.s32.totalorder %s9, 1
    %p48 = scmp.ne.s32.totalorder %s43, %s45
    %p49 = scmp.eq.s32.totalorder %s9, 0
    %p50 = por %p48, %p49
    %p51 = scmp.ne.s32.totalorder %s43, %s45
    %p52 = scmp.eq.s32.totalorder %s14, 1
    %p53 = por %p51, %p52
    %p54 = scmp.ne.s32.totalorder %s45, %s46
    %p55 = scmp.eq.s32.totalorder %s14, 0
    %p56 = por %p54, %p55
    %p57 = scmp.ne.s32.totalorder %s45, %s46
    %p58 = scmp.eq.s32.totalorder %s15, 1
    %p59 = por %p57, %p58
    %p61 = scmp.ne.s32.totalorder %s46, %s60
    %p62 = scmp.eq.s32.totalorder %s15, 0
    %p63 = por %p61, %p62
    %s65 = sadd.s32 %s64, 1
    %p68 = scmp.eq.s32.totalorder %s9, 1
    %p69 = scmp.ne.s32.totalorder %s64, %s66
    %p70 = scmp.eq.s32.totalorder %s9, 0
    %p71 = por %p69, %p70
    %p72 = scmp.ne.s32.totalorder %s64, %s66
    %p73 = scmp.eq.s32.totalorder %s14, 1
    %p74 = por %p72, %p73
    %p75 = scmp.ne.s32.totalorder %s66, %s67
    %p76 = scmp.eq.s32.totalorder %s14, 0
    %p77 = por %p75, %p76
    %p78 = scmp.ne.s32.totalorder %s66, %s67
    %p79 = scmp.eq.s32.totalorder %s15, 1
    %p80 = por %p78, %p79
    %p82 = scmp.ne.s32.totalorder %s67, %s81
    %p83 = scmp.eq.s32.totalorder %s15, 0
    %p84 = por %p82, %p83
    %s85 = ssub.s32 %s9, %s16
    %p86 = scmp.eq.s32.totalorder %s85, 0
    %s88 = sadd.s32 %s87, 1
    %s89 = scalar_select %p86, %s87, %s88
    %p92 = pneg %p86
    %p93 = scmp.eq.s32.totalorder %s9, 1
    %p94 = por %p92, %p93
    %p95 = scmp.ne.s32.totalorder %s87, %s90
    %p96 = scmp.eq.s32.totalorder %s9, 0
    %p97 = por %p95, %p96
    %p98 = scmp.ne.s32.totalorder %s87, %s90
    %p99 = scmp.eq.s32.totalorder %s14, 1
    %p100 = por %p98, %p99
    %p101 = scmp.ne.s32.totalorder %s90, %s91
    %p102 = scmp.eq.s32.totalorder %s14, 0
    %p103 = por %p101, %p102
    %p104 = scmp.ne.s32.totalorder %s90, %s91
    %p105 = scmp.eq.s32.totalorder %s15, 1
    %p106 = por %p104, %p105
    %p108 = scmp.ne.s32.totalorder %s91, %s107
    %p109 = scmp.eq.s32.totalorder %s15, 0
    %p110 = por %p108, %p109
    %p111 = scmp.le.s32.totalorder 1, %s9
    %p112 = scmp.lt.s32.totalorder %s9, 3
    %p113 = pnand %p111, %p112
    %p114 = pneg %p113
    // Predicated region
    $region9: #{tpu_custom_call.1} parent=5 // pred_check
      _
    $region10: #{tpu_custom_call.1} parent=5 // pred_check_branch
      %116 = sbr.rel (%p113) target = $region12
    $region11: #{tpu_custom_call.1} parent=5 // pred_region
      %s117 = ssub.s32 %s9, 1
      // Predicated region
      $region13: #{tpu_custom_call.1} parent=11 // pred_check
        %p118 = pneg %p56
      $region14: #{tpu_custom_call.1} parent=11 // pred_check_branch
        %120 = sbr.rel (%p118) target = $region16
      $region15: #{tpu_custom_call.1} parent=11 // pred_region
        _
      $region16: #{tpu_custom_call.1} parent=11 // pred_fallthru
        _
      // Predicated region
      $region17: #{tpu_custom_call.1} parent=11 // pred_check
        %p121 = pneg %p77
      $region18: #{tpu_custom_call.1} parent=11 // pred_check_branch
        %123 = sbr.rel (%p121) target = $region20
      $region19: #{tpu_custom_call.1} parent=11 // pred_region
        _
      $region20: #{tpu_custom_call.1} parent=11 // pred_fallthru
        _
    $region12: #{tpu_custom_call.1} parent=5 // pred_fallthru
      _
    %p124 = scmp.lt.s32.totalorder %s9, 2
    // Predicated region
    $region21: #{tpu_custom_call.1} parent=5 // pred_check
      %p125 = pneg %p124
    $region22: #{tpu_custom_call.1} parent=5 // pred_check_branch
      %127 = sbr.rel (%p125) target = $region24
    $region23: #{tpu_custom_call.1} parent=5 // pred_region
      // Predicated region
      $region25: #{tpu_custom_call.1} parent=23 // pred_check
        %p128 = pneg %p29
      $region26: #{tpu_custom_call.1} parent=23 // pred_check_branch
        %130 = sbr.rel (%p128) target = $region28
      $region27: #{tpu_custom_call.1} parent=23 // pred_region
        %p131 = scmp.lt.s32.totalorder %s9, 1
        %s132 = scalar_select %p131, %s9, 1
        %s133 = smul.addr %s132, 60
        %s134 = smul.addr %s133, 8
        %s135 = scalar_lea.vmem %s0, %s134
      $region28: #{tpu_custom_call.1} parent=23 // pred_fallthru
        _
    $region24: #{tpu_custom_call.1} parent=5 // pred_fallthru
      _
    %p136 = scmp.le.s32.totalorder 1, %s9
    %p137 = scmp.lt.s32.totalorder %s9, 3
    %p138 = pnand %p136, %p137
    %p139 = pneg %p138
    // Predicated region
    $region29: #{tpu_custom_call.1} parent=5 // pred_check
      _
    $region30: #{tpu_custom_call.1} parent=5 // pred_check_branch
      %141 = sbr.rel (%p138) target = $region32
    $region31: #{tpu_custom_call.1} parent=5 // pred_region
      %s142 = ssub.s32 %s9, 1
      %p143 = scmp.lt.s32.totalorder %s14, 1
      %s144 = scalar_select %p143, %s14, 1
      %s145 = smul.addr %s144, 60
      %s146 = smul.addr %s145, 8
      %s147 = scalar_lea.vmem %s0, %s146
      %p148 = pneg %p35
      %p149 = pneg %p32
      %p150 = pneg %p56
      %p151 = pneg %p53
      %p152 = pneg %p77
      %p153 = pneg %p74
      %p154 = pneg %p103
      %p155 = pneg %p100
      %p156 = scmp.lt.s32.totalorder %s14, 1
      %s157 = scalar_select %p156, %s14, 1
      %s158 = smul.addr %s157, 32
      %s159 = smul.addr %s158, 8
      %s160 = scalar_lea.vmem %s3, %s159
      %p161 = scmp.lt.s32.totalorder %s14, 1
      %s162 = scalar_select %p161, %s14, 1
      %s163 = smul.addr %s162, 60
      %s164 = smul.addr %s163, 8
      %s165 = scalar_lea.vmem %s0, %s164
      %p166 = scmp.lt.s32.totalorder %s14, 1
      %s167 = scalar_select %p166, %s14, 1
      %s168 = smul.addr %s167, 32
      %s169 = smul.addr %s168, 8
      %s170 = scalar_lea.vmem %s3, %s169
      %v171 = vld [vmem:[%s165] sm:$0xff]
      %v172 = vld [vmem:[%s165 + $0x8] sm:$0xff]
      %v173 = vld [vmem:[%s165 + $0x10] sm:$0xf]
      %v174 = vld [vmem:[%s165 + $0x18] sm:$0xff]
      %v175 = vld [vmem:[%s165 + $0x20] sm:$0xff]
      %v176 = vld [vmem:[%s165 + $0x28] sm:$0xf]
      %v177 = vld [vmem:[%s165 + $0x30] sm:$0xff]
      %v178 = vld [vmem:[%s165 + $0x38] sm:$0xff]
      %v179 = vld [vmem:[%s165 + $0x40] sm:$0xf]
      %v180 = vld [vmem:[%s165 + $0x48] sm:$0xff]
      %v181 = vld [vmem:[%s165 + $0x50] sm:$0xff]
      %v182 = vld [vmem:[%s165 + $0x58] sm:$0xf]
      %v183 = vld [vmem:[%s165 + $0x60] sm:$0xff]
      %v184 = vld [vmem:[%s165 + $0x68] sm:$0xff]
      %v185 = vld [vmem:[%s165 + $0x70] sm:$0xf]
      %v186 = vld [vmem:[%s165 + $0x78] sm:$0xff]
      %v187 = vld [vmem:[%s165 + $0x80] sm:$0xff]
      %v188 = vld [vmem:[%s165 + $0x88] sm:$0xf]
      %v189 = vld [vmem:[%s165 + $0x90] sm:$0xff]
      %v190 = vld [vmem:[%s165 + $0x98] sm:$0xff]
      %v191 = vld [vmem:[%s165 + $0xa0] sm:$0xf]
      %v192 = vld [vmem:[%s165 + $0xa8] sm:$0xff]
      %v193 = vld [vmem:[%s165 + $0xb0] sm:$0xff]
      %v194 = vld [vmem:[%s165 + $0xb8] sm:$0xf]
      %v195 = vld [vmem:[%s165 + $0xc0] sm:$0xff]
      %v196 = vld [vmem:[%s165 + $0xc8] sm:$0xff]
      %v197 = vld [vmem:[%s165 + $0xd0] sm:$0xf]
      %v198 = vld [vmem:[%s165 + $0xd8] sm:$0xff]
      %v199 = vld [vmem:[%s165 + $0xe0] sm:$0xff]
      %v200 = vld [vmem:[%s165 + $0xe8] sm:$0xf]
      %v201 = vld [vmem:[%s165 + $0xf0] sm:$0xff]
      %v202 = vld [vmem:[%s165 + $0xf8] sm:$0xff]
      %v203 = vld [vmem:[%s165 + $0x100] sm:$0xf]
      %v204 = vld [vmem:[%s165 + $0x108] sm:$0xff]
      %v205 = vld [vmem:[%s165 + $0x110] sm:$0xff]
      %v206 = vld [vmem:[%s165 + $0x118] sm:$0xf]
      %v207 = vld [vmem:[%s165 + $0x120] sm:$0xff]
      %v208 = vld [vmem:[%s165 + $0x128] sm:$0xff]
      %v209 = vld [vmem:[%s165 + $0x130] sm:$0xf]
      %v210 = vld [vmem:[%s165 + $0x138] sm:$0xff]
      %v211 = vld [vmem:[%s165 + $0x140] sm:$0xff]
      %v212 = vld [vmem:[%s165 + $0x148] sm:$0xf]
      %v213 = vld [vmem:[%s165 + $0x150] sm:$0xff]
      %v214 = vld [vmem:[%s165 + $0x158] sm:$0xff]
      %v215 = vld [vmem:[%s165 + $0x160] sm:$0xf]
      %v216 = vld [vmem:[%s165 + $0x168] sm:$0xff]
      %v217 = vld [vmem:[%s165 + $0x170] sm:$0xff]
      %v218 = vld [vmem:[%s165 + $0x178] sm:$0xf]
      %v219 = vld [vmem:[%s165 + $0x180] sm:$0xff]
      %v220 = vld [vmem:[%s165 + $0x188] sm:$0xff]
      %v221 = vld [vmem:[%s165 + $0x190] sm:$0xf]
      %v222 = vld [vmem:[%s165 + $0x198] sm:$0xff]
      %v223 = vld [vmem:[%s165 + $0x1a0] sm:$0xff]
      %v224 = vld [vmem:[%s165 + $0x1a8] sm:$0xf]
      %v225 = vld [vmem:[%s165 + $0x1b0] sm:$0xff]
      %v226 = vld [vmem:[%s165 + $0x1b8] sm:$0xff]
      %v227 = vld [vmem:[%s165 + $0x1c0] sm:$0xf]
      %v228 = vld [vmem:[%s165 + $0x1c8] sm:$0xff]
      %v229 = vld [vmem:[%s165 + $0x1d0] sm:$0xff]
      %v230 = vld [vmem:[%s165 + $0x1d8] sm:$0xf]
      %v231 = vld [vmem:[%s1] sm:$0xf]
      %vm280 = vcmask 1046528
      %v281 = vrot.slane %v171, 1
      %v282 = vrot.slane %v172, 1
      %v283 = vsel %vm280, %v281, %v282
      %v284 = vrot.slane %v173, 1
      %v285 = vsel %vm280, %v282, %v284
      %v286 = vrot.slane %v174, 1
      %v287 = vrot.slane %v175, 1
      %v288 = vsel %vm280, %v286, %v287
      %v289 = vrot.slane %v176, 1
      %v290 = vsel %vm280, %v287, %v289
      %v291 = vrot.slane %v177, 1
      %v292 = vrot.slane %v178, 1
      %v293 = vsel %vm280, %v291, %v292
      %v294 = vrot.slane %v179, 1
      %v295 = vsel %vm280, %v292, %v294
      %v296 = vrot.slane %v180, 1
      %v297 = vrot.slane %v181, 1
      %v298 = vsel %vm280, %v296, %v297
      %v299 = vrot.slane %v182, 1
      %v300 = vsel %vm280, %v297, %v299
      %v301 = vrot.slane %v183, 1
      %v302 = vrot.slane %v184, 1
      %v303 = vsel %vm280, %v301, %v302
      %v304 = vrot.slane %v185, 1
      %v305 = vsel %vm280, %v302, %v304
      %v306 = vrot.slane %v186, 1
      %v307 = vrot.slane %v187, 1
      %v308 = vsel %vm280, %v306, %v307
      %v309 = vrot.slane %v188, 1
      %v310 = vsel %vm280, %v307, %v309
      %v311 = vrot.slane %v189, 1
      %v312 = vrot.slane %v190, 1
      %v313 = vsel %vm280, %v311, %v312
      %v314 = vrot.slane %v191, 1
      %v315 = vsel %vm280, %v312, %v314
      %v316 = vrot.slane %v192, 1
      %v317 = vrot.slane %v193, 1
      %v318 = vsel %vm280, %v316, %v317
      %v319 = vrot.slane %v194, 1
      %v320 = vsel %vm280, %v317, %v319
      %v321 = vrot.slane %v195, 1
      %v322 = vrot.slane %v196, 1
      %v323 = vsel %vm280, %v321, %v322
      %v324 = vrot.slane %v197, 1
      %v325 = vsel %vm280, %v322, %v324
      %v326 = vrot.slane %v198, 1
      %v327 = vrot.slane %v199, 1
      %v328 = vsel %vm280, %v326, %v327
      %v329 = vrot.slane %v200, 1
      %v330 = vsel %vm280, %v327, %v329
      %v331 = vrot.slane %v201, 1
      %v332 = vrot.slane %v202, 1
      %v333 = vsel %vm280, %v331, %v332
      %v334 = vrot.slane %v203, 1
      %v335 = vsel %vm280, %v332, %v334
      %v336 = vrot.slane %v204, 1
      %v337 = vrot.slane %v205, 1
      %v338 = vsel %vm280, %v336, %v337
      %v339 = vrot.slane %v206, 1
      %v340 = vsel %vm280, %v337, %v339
      %v341 = vrot.slane %v207, 1
      %v342 = vrot.slane %v208, 1
      %v343 = vsel %vm280, %v341, %v342
      %v344 = vrot.slane %v209, 1
      %v345 = vsel %vm280, %v342, %v344
      %v346 = vrot.slane %v210, 1
      %v347 = vrot.slane %v211, 1
      %v348 = vsel %vm280, %v346, %v347
      %v349 = vrot.slane %v212, 1
      %v350 = vsel %vm280, %v347, %v349
      %v351 = vrot.slane %v213, 1
      %v352 = vrot.slane %v214, 1
      %v353 = vsel %vm280, %v351, %v352
      %v354 = vrot.slane %v215, 1
      %v355 = vsel %vm280, %v352, %v354
      %v356 = vrot.slane %v216, 1
      %v357 = vrot.slane %v217, 1
      %v358 = vsel %vm280, %v356, %v357
      %v359 = vrot.slane %v218, 1
      %v360 = vsel %vm280, %v357, %v359
      %s361 = scalar_lea.vmem %s1, 4
      %v362 = vld [vmem:[%s361] sm:$0xf]
      %vm363 = vcmask 31744
      %v364 = vsel %vm363, %v283, 0
      %v366 = vsel %vm363, %v285, 0
      %v368 = vsel %vm363, %v288, 0
      %v370 = vsel %vm363, %v290, 0
      %v372 = vsel %vm363, %v293, 0
      %v374 = vsel %vm363, %v295, 0
      %v376 = vsel %vm363, %v298, 0
      %v378 = vsel %vm363, %v300, 0
      %v380 = vsel %vm363, %v303, 0
      %v382 = vsel %vm363, %v305, 0
      %v384 = vsel %vm363, %v308, 0
      %v386 = vsel %vm363, %v310, 0
      %v388 = vsel %vm363, %v313, 0
      %v390 = vsel %vm363, %v315, 0
      %v392 = vsel %vm363, %v318, 0
      %v394 = vsel %vm363, %v320, 0
      %v396 = vsel %vm363, %v323, 0
      %v398 = vsel %vm363, %v325, 0
      %v400 = vsel %vm363, %v328, 0
      %v402 = vsel %vm363, %v330, 0
      %v404 = vsel %vm363, %v333, 0
      %v406 = vsel %vm363, %v335, 0
      %v408 = vsel %vm363, %v338, 0
      %v410 = vsel %vm363, %v340, 0
      %v412 = vsel %vm363, %v343, 0
      %v414 = vsel %vm363, %v345, 0
      %v416 = vsel %vm363, %v348, 0
      %v418 = vsel %vm363, %v350, 0
      %v420 = vsel %vm363, %v353, 0
      %v422 = vsel %vm363, %v355, 0
      %v424 = vsel %vm363, %v358, 0
      %v426 = vsel %vm363, %v360, 0
      %vm428 = vcmask 1043456
      %v430 = vsel %vm428, %v362, 0
      %432 = vmatpush.msra.mxu0 0.0
      %433 = vmatpush.msra.mxu0 0.0
      %434 = vmatpush.msra.mxu0 0.0
      %435 = vmatpush.msra.mxu0 0.0
      %436 = vmatpush.msra.mxu0 0.0
      %437 = vmatpush.msra.mxu0 0.0
      %438 = vmatpush.msra.mxu0 0.0
      %439 = vmatpush.msra.mxu0 0.0
      %440 = vmatpush.msra.mxu0 0.0
      %441 = vmatpush.msra.mxu0 0.0
      %442 = vmatpush.msra.mxu0 0.0
      %443 = vmatpush.msra.mxu0 0.0
      %444 = vmatpush.msra.mxu0 0.0
      %445 = vmatpush.msra.mxu0 0.0
      %446 = vmatpush.msra.mxu0 0.0
      %447 = vmatpush.msra.mxu0 %v430
      %448 = vmatmul.f32.gmra.mxu0 %v364
      %v449 = vpop.f32.mrf.mxu0
      %v450 = vadd.f32 0.0, %v449
      %451 = vmatmul.f32.gmra.mxu0 %v366
      %v452 = vpop.f32.mrf.mxu0
      %v453 = vadd.f32 0.0, %v452
      %454 = vmatmul.f32.gmra.mxu0 %v368
      %v455 = vpop.f32.mrf.mxu0
      %v456 = vadd.f32 0.0, %v455
      %457 = vmatmul.f32.gmra.mxu0 %v370
      %v458 = vpop.f32.mrf.mxu0
      %v459 = vadd.f32 0.0, %v458
      %460 = vmatmul.f32.gmra.mxu0 %v372
      %v461 = vpop.f32.mrf.mxu0
      %v462 = vadd.f32 0.0, %v461
      %463 = vmatmul.f32.gmra.mxu0 %v374
      %v464 = vpop.f32.mrf.mxu0
      %v465 = vadd.f32 0.0, %v464
      %466 = vmatmul.f32.gmra.mxu0 %v376
      %v467 = vpop.f32.mrf.mxu0
      %v468 = vadd.f32 0.0, %v467
      %469 = vmatmul.f32.gmra.mxu0 %v378
      %v470 = vpop.f32.mrf.mxu0
      %v471 = vadd.f32 0.0, %v470
      %472 = vmatmul.f32.gmra.mxu0 %v380
      %v473 = vpop.f32.mrf.mxu0
      %v474 = vadd.f32 0.0, %v473
      %475 = vmatmul.f32.gmra.mxu0 %v382
      %v476 = vpop.f32.mrf.mxu0
      %v477 = vadd.f32 0.0, %v476
      %478 = vmatmul.f32.gmra.mxu0 %v384
      %v479 = vpop.f32.mrf.mxu0
      %v480 = vadd.f32 0.0, %v479
      %481 = vmatmul.f32.gmra.mxu0 %v386
      %v482 = vpop.f32.mrf.mxu0
      %v483 = vadd.f32 0.0, %v482
      %484 = vmatmul.f32.gmra.mxu0 %v388
      %v485 = vpop.f32.mrf.mxu0
      %v486 = vadd.f32 0.0, %v485
      %487 = vmatmul.f32.gmra.mxu0 %v390
      %v488 = vpop.f32.mrf.mxu0
      %v489 = vadd.f32 0.0, %v488
      %490 = vmatmul.f32.gmra.mxu0 %v392
      %v491 = vpop.f32.mrf.mxu0
      %v492 = vadd.f32 0.0, %v491
      %493 = vmatmul.f32.gmra.mxu0 %v394
      %v494 = vpop.f32.mrf.mxu0
      %v495 = vadd.f32 0.0, %v494
      %496 = vmatmul.f32.gmra.mxu0 %v396
      %v497 = vpop.f32.mrf.mxu0
      %v498 = vadd.f32 0.0, %v497
      %499 = vmatmul.f32.gmra.mxu0 %v398
      %v500 = vpop.f32.mrf.mxu0
      %v501 = vadd.f32 0.0, %v500
      %502 = vmatmul.f32.gmra.mxu0 %v400
      %v503 = vpop.f32.mrf.mxu0
      %v504 = vadd.f32 0.0, %v503
      %505 = vmatmul.f32.gmra.mxu0 %v402
      %v506 = vpop.f32.mrf.mxu0
      %v507 = vadd.f32 0.0, %v506
      %508 = vmatmul.f32.gmra.mxu0 %v404
      %v509 = vpop.f32.mrf.mxu0
      %v510 = vadd.f32 0.0, %v509
      %511 = vmatmul.f32.gmra.mxu0 %v406
      %v512 = vpop.f32.mrf.mxu0
      %v513 = vadd.f32 0.0, %v512
      %514 = vmatmul.f32.gmra.mxu0 %v408
      %v515 = vpop.f32.mrf.mxu0
      %v516 = vadd.f32 0.0, %v515
      %517 = vmatmul.f32.gmra.mxu0 %v410
      %v518 = vpop.f32.mrf.mxu0
      %v519 = vadd.f32 0.0, %v518
      %520 = vmatmul.f32.gmra.mxu0 %v412
      %v521 = vpop.f32.mrf.mxu0
      %v522 = vadd.f32 0.0, %v521
      %523 = vmatmul.f32.gmra.mxu0 %v414
      %v524 = vpop.f32.mrf.mxu0
      %v525 = vadd.f32 0.0, %v524
      %526 = vmatmul.f32.gmra.mxu0 %v416
      %v527 = vpop.f32.mrf.mxu0
      %v528 = vadd.f32 0.0, %v527
      %529 = vmatmul.f32.gmra.mxu0 %v418
      %v530 = vpop.f32.mrf.mxu0
      %v531 = vadd.f32 0.0, %v530
      %532 = vmatmul.f32.gmra.mxu0 %v420
      %v533 = vpop.f32.mrf.mxu0
      %v534 = vadd.f32 0.0, %v533
      %535 = vmatmul.f32.gmra.mxu0 %v422
      %v536 = vpop.f32.mrf.mxu0
      %v537 = vadd.f32 0.0, %v536
      %538 = vmatmul.f32.gmra.mxu0 %v424
      %v539 = vpop.f32.mrf.mxu0
      %v540 = vadd.f32 0.0, %v539
      %541 = vmatmul.f32.gmra.mxu0 %v426
      %v542 = vpop.f32.mrf.mxu0
      %v543 = vadd.f32 0.0, %v542
      %544 = vdwg.mxu0
      %v545 = vsel %vm363, %v171, 0
      %v547 = vsel %vm363, %v172, 0
      %v549 = vsel %vm363, %v174, 0
      %v551 = vsel %vm363, %v175, 0
      %v553 = vsel %vm363, %v177, 0
      %v555 = vsel %vm363, %v178, 0
      %v557 = vsel %vm363, %v180, 0
      %v559 = vsel %vm363, %v181, 0
      %v561 = vsel %vm363, %v183, 0
      %v563 = vsel %vm363, %v184, 0
      %v565 = vsel %vm363, %v186, 0
      %v567 = vsel %vm363, %v187, 0
      %v569 = vsel %vm363, %v189, 0
      %v571 = vsel %vm363, %v190, 0
      %v573 = vsel %vm363, %v192, 0
      %v575 = vsel %vm363, %v193, 0
      %v577 = vsel %vm363, %v195, 0
      %v579 = vsel %vm363, %v196, 0
      %v581 = vsel %vm363, %v198, 0
      %v583 = vsel %vm363, %v199, 0
      %v585 = vsel %vm363, %v201, 0
      %v587 = vsel %vm363, %v202, 0
      %v589 = vsel %vm363, %v204, 0
      %v591 = vsel %vm363, %v205, 0
      %v593 = vsel %vm363, %v207, 0
      %v595 = vsel %vm363, %v208, 0
      %v597 = vsel %vm363, %v210, 0
      %v599 = vsel %vm363, %v211, 0
      %v601 = vsel %vm363, %v213, 0
      %v603 = vsel %vm363, %v214, 0
      %v605 = vsel %vm363, %v216, 0
      %v607 = vsel %vm363, %v217, 0
      %v610 = vsel %vm428, %v231, 0
      %612 = vmatpush.msra.mxu0 0.0
      %613 = vmatpush.msra.mxu0 0.0
      %614 = vmatpush.msra.mxu0 0.0
      %615 = vmatpush.msra.mxu0 0.0
      %616 = vmatpush.msra.mxu0 0.0
      %617 = vmatpush.msra.mxu0 0.0
      %618 = vmatpush.msra.mxu0 0.0
      %619 = vmatpush.msra.mxu0 0.0
      %620 = vmatpush.msra.mxu0 0.0
      %621 = vmatpush.msra.mxu0 0.0
      %622 = vmatpush.msra.mxu0 0.0
      %623 = vmatpush.msra.mxu0 0.0
      %624 = vmatpush.msra.mxu0 0.0
      %625 = vmatpush.msra.mxu0 0.0
      %626 = vmatpush.msra.mxu0 0.0
      %627 = vmatpush.msra.mxu0 %v610
      %628 = vmatmul.f32.gmra.mxu0 %v545
      %v629 = vpop.f32.mrf.mxu0
      %v630 = vadd.f32 %v450, %v629
      %631 = vmatmul.f32.gmra.mxu0 %v547
      %v632 = vpop.f32.mrf.mxu0
      %v633 = vadd.f32 %v453, %v632
      %634 = vmatmul.f32.gmra.mxu0 %v549
      %v635 = vpop.f32.mrf.mxu0
      %v636 = vadd.f32 %v456, %v635
      %637 = vmatmul.f32.gmra.mxu0 %v551
      %v638 = vpop.f32.mrf.mxu0
      %v639 = vadd.f32 %v459, %v638
      %640 = vmatmul.f32.gmra.mxu0 %v553
      %v641 = vpop.f32.mrf.mxu0
      %v642 = vadd.f32 %v462, %v641
      %643 = vmatmul.f32.gmra.mxu0 %v555
      %v644 = vpop.f32.mrf.mxu0
      %v645 = vadd.f32 %v465, %v644
      %646 = vmatmul.f32.gmra.mxu0 %v557
      %v647 = vpop.f32.mrf.mxu0
      %v648 = vadd.f32 %v468, %v647
      %649 = vmatmul.f32.gmra.mxu0 %v559
      %v650 = vpop.f32.mrf.mxu0
      %v651 = vadd.f32 %v471, %v650
      %652 = vmatmul.f32.gmra.mxu0 %v561
      %v653 = vpop.f32.mrf.mxu0
      %v654 = vadd.f32 %v474, %v653
      %655 = vmatmul.f32.gmra.mxu0 %v563
      %v656 = vpop.f32.mrf.mxu0
      %v657 = vadd.f32 %v477, %v656
      %658 = vmatmul.f32.gmra.mxu0 %v565
      %v659 = vpop.f32.mrf.mxu0
      %v660 = vadd.f32 %v480, %v659
      %661 = vmatmul.f32.gmra.mxu0 %v567
      %v662 = vpop.f32.mrf.mxu0
      %v663 = vadd.f32 %v483, %v662
      %664 = vmatmul.f32.gmra.mxu0 %v569
      %v665 = vpop.f32.mrf.mxu0
      %v666 = vadd.f32 %v486, %v665
      %667 = vmatmul.f32.gmra.mxu0 %v571
      %v668 = vpop.f32.mrf.mxu0
      %v669 = vadd.f32 %v489, %v668
      %670 = vmatmul.f32.gmra.mxu0 %v573
      %v671 = vpop.f32.mrf.mxu0
      %v672 = vadd.f32 %v492, %v671
      %673 = vmatmul.f32.gmra.mxu0 %v575
      %v674 = vpop.f32.mrf.mxu0
      %v675 = vadd.f32 %v495, %v674
      %676 = vmatmul.f32.gmra.mxu0 %v577
      %v677 = vpop.f32.mrf.mxu0
      %v678 = vadd.f32 %v498, %v677
      %679 = vmatmul.f32.gmra.mxu0 %v579
      %v680 = vpop.f32.mrf.mxu0
      %v681 = vadd.f32 %v501, %v680
      %682 = vmatmul.f32.gmra.mxu0 %v581
      %v683 = vpop.f32.mrf.mxu0
      %v684 = vadd.f32 %v504, %v683
      %685 = vmatmul.f32.gmra.mxu0 %v583
      %v686 = vpop.f32.mrf.mxu0
      %v687 = vadd.f32 %v507, %v686
      %688 = vmatmul.f32.gmra.mxu0 %v585
      %v689 = vpop.f32.mrf.mxu0
      %v690 = vadd.f32 %v510, %v689
      %691 = vmatmul.f32.gmra.mxu0 %v587
      %v692 = vpop.f32.mrf.mxu0
      %v693 = vadd.f32 %v513, %v692
      %694 = vmatmul.f32.gmra.mxu0 %v589
      %v695 = vpop.f32.mrf.mxu0
      %v696 = vadd.f32 %v516, %v695
      %697 = vmatmul.f32.gmra.mxu0 %v591
      %v698 = vpop.f32.mrf.mxu0
      %v699 = vadd.f32 %v519, %v698
      %700 = vmatmul.f32.gmra.mxu0 %v593
      %v701 = vpop.f32.mrf.mxu0
      %v702 = vadd.f32 %v522, %v701
      %703 = vmatmul.f32.gmra.mxu0 %v595
      %v704 = vpop.f32.mrf.mxu0
      %v705 = vadd.f32 %v525, %v704
      %706 = vmatmul.f32.gmra.mxu0 %v597
      %v707 = vpop.f32.mrf.mxu0
      %v708 = vadd.f32 %v528, %v707
      %709 = vmatmul.f32.gmra.mxu0 %v599
      %v710 = vpop.f32.mrf.mxu0
      %v711 = vadd.f32 %v531, %v710
      %712 = vmatmul.f32.gmra.mxu0 %v601
      %v713 = vpop.f32.mrf.mxu0
      %v714 = vadd.f32 %v534, %v713
      %715 = vmatmul.f32.gmra.mxu0 %v603
      %v716 = vpop.f32.mrf.mxu0
      %v717 = vadd.f32 %v537, %v716
      %718 = vmatmul.f32.gmra.mxu0 %v605
      %v719 = vpop.f32.mrf.mxu0
      %v720 = vadd.f32 %v540, %v719
      %721 = vmatmul.f32.gmra.mxu0 %v607
      %v722 = vpop.f32.mrf.mxu0
      %v723 = vadd.f32 %v543, %v722
      %724 = vdwg.mxu0
      %vm725 = vcmask 1045504
      %v726 = vrot.slane %v171, 2
      %v727 = vrot.slane %v172, 2
      %v728 = vsel %vm725, %v726, %v727
      %v729 = vrot.slane %v173, 2
      %v730 = vsel %vm725, %v727, %v729
      %v731 = vrot.slane %v174, 2
      %v732 = vrot.slane %v175, 2
      %v733 = vsel %vm725, %v731, %v732
      %v734 = vrot.slane %v176, 2
      %v735 = vsel %vm725, %v732, %v734
      %v736 = vrot.slane %v177, 2
      %v737 = vrot.slane %v178, 2
      %v738 = vsel %vm725, %v736, %v737
      %v739 = vrot.slane %v179, 2
      %v740 = vsel %vm725, %v737, %v739
      %v741 = vrot.slane %v180, 2
      %v742 = vrot.slane %v181, 2
      %v743 = vsel %vm725, %v741, %v742
      %v744 = vrot.slane %v182, 2
      %v745 = vsel %vm725, %v742, %v744
      %v746 = vrot.slane %v183, 2
      %v747 = vrot.slane %v184, 2
      %v748 = vsel %vm725, %v746, %v747
      %v749 = vrot.slane %v185, 2
      %v750 = vsel %vm725, %v747, %v749
      %v751 = vrot.slane %v186, 2
      %v752 = vrot.slane %v187, 2
      %v753 = vsel %vm725, %v751, %v752
      %v754 = vrot.slane %v188, 2
      %v755 = vsel %vm725, %v752, %v754
      %v756 = vrot.slane %v189, 2
      %v757 = vrot.slane %v190, 2
      %v758 = vsel %vm725, %v756, %v757
      %v759 = vrot.slane %v191, 2
      %v760 = vsel %vm725, %v757, %v759
      %v761 = vrot.slane %v192, 2
      %v762 = vrot.slane %v193, 2
      %v763 = vsel %vm725, %v761, %v762
      %v764 = vrot.slane %v194, 2
      %v765 = vsel %vm725, %v762, %v764
      %v766 = vrot.slane %v195, 2
      %v767 = vrot.slane %v196, 2
      %v768 = vsel %vm725, %v766, %v767
      %v769 = vrot.slane %v197, 2
      %v770 = vsel %vm725, %v767, %v769
      %v771 = vrot.slane %v198, 2
      %v772 = vrot.slane %v199, 2
      %v773 = vsel %vm725, %v771, %v772
      %v774 = vrot.slane %v200, 2
      %v775 = vsel %vm725, %v772, %v774
      %v776 = vrot.slane %v201, 2
      %v777 = vrot.slane %v202, 2
      %v778 = vsel %vm725, %v776, %v777
      %v779 = vrot.slane %v203, 2
      %v780 = vsel %vm725, %v777, %v779
      %v781 = vrot.slane %v204, 2
      %v782 = vrot.slane %v205, 2
      %v783 = vsel %vm725, %v781, %v782
      %v784 = vrot.slane %v206, 2
      %v785 = vsel %vm725, %v782, %v784
      %v786 = vrot.slane %v207, 2
      %v787 = vrot.slane %v208, 2
      %v788 = vsel %vm725, %v786, %v787
      %v789 = vrot.slane %v209, 2
      %v790 = vsel %vm725, %v787, %v789
      %v791 = vrot.slane %v210, 2
      %v792 = vrot.slane %v211, 2
      %v793 = vsel %vm725, %v791, %v792
      %v794 = vrot.slane %v212, 2
      %v795 = vsel %vm725, %v792, %v794
      %v796 = vrot.slane %v213, 2
      %v797 = vrot.slane %v214, 2
      %v798 = vsel %vm725, %v796, %v797
      %v799 = vrot.slane %v215, 2
      %v800 = vsel %vm725, %v797, %v799
      %v801 = vrot.slane %v216, 2
      %v802 = vrot.slane %v217, 2
      %v803 = vsel %vm725, %v801, %v802
      %v804 = vrot.slane %v218, 2
      %v805 = vsel %vm725, %v802, %v804
      %s806 = scalar_lea.vmem %s1, 8
      %v807 = vld [vmem:[%s806] sm:$0xf]
      %v808 = vsel %vm363, %v728, 0
      %v810 = vsel %vm363, %v730, 0
      %v812 = vsel %vm363, %v733, 0
      %v814 = vsel %vm363, %v735, 0
      %v816 = vsel %vm363, %v738, 0
      %v818 = vsel %vm363, %v740, 0
      %v820 = vsel %vm363, %v743, 0
      %v822 = vsel %vm363, %v745, 0
      %v824 = vsel %vm363, %v748, 0
      %v826 = vsel %vm363, %v750, 0
      %v828 = vsel %vm363, %v753, 0
      %v830 = vsel %vm363, %v755, 0
      %v832 = vsel %vm363, %v758, 0
      %v834 = vsel %vm363, %v760, 0
      %v836 = vsel %vm363, %v763, 0
      %v838 = vsel %vm363, %v765, 0
      %v840 = vsel %vm363, %v768, 0
      %v842 = vsel %vm363, %v770, 0
      %v844 = vsel %vm363, %v773, 0
      %v846 = vsel %vm363, %v775, 0
      %v848 = vsel %vm363, %v778, 0
      %v850 = vsel %vm363, %v780, 0
      %v852 = vsel %vm363, %v783, 0
      %v854 = vsel %vm363, %v785, 0
      %v856 = vsel %vm363, %v788, 0
      %v858 = vsel %vm363, %v790, 0
      %v860 = vsel %vm363, %v793, 0
      %v862 = vsel %vm363, %v795, 0
      %v864 = vsel %vm363, %v798, 0
      %v866 = vsel %vm363, %v800, 0
      %v868 = vsel %vm363, %v803, 0
      %v870 = vsel %vm363, %v805, 0
      %v873 = vsel %vm428, %v807, 0
      %875 = vmatpush.msra.mxu0 0.0
      %876 = vmatpush.msra.mxu0 0.0
      %877 = vmatpush.msra.mxu0 0.0
      %878 = vmatpush.msra.mxu0 0.0
      %879 = vmatpush.msra.mxu0 0.0
      %880 = vmatpush.msra.mxu0 0.0
      %881 = vmatpush.msra.mxu0 0.0
      %882 = vmatpush.msra.mxu0 0.0
      %883 = vmatpush.msra.mxu0 0.0
      %884 = vmatpush.msra.mxu0 0.0
      %885 = vmatpush.msra.mxu0 0.0
      %886 = vmatpush.msra.mxu0 0.0
      %887 = vmatpush.msra.mxu0 0.0
      %888 = vmatpush.msra.mxu0 0.0
      %889 = vmatpush.msra.mxu0 0.0
      %890 = vmatpush.msra.mxu0 %v873
      %891 = vmatmul.f32.gmra.mxu0 %v808
      %v892 = vpop.f32.mrf.mxu0
      %v893 = vadd.f32 0.0, %v892
      %894 = vmatmul.f32.gmra.mxu0 %v810
      %v895 = vpop.f32.mrf.mxu0
      %v896 = vadd.f32 0.0, %v895
      %897 = vmatmul.f32.gmra.mxu0 %v812
      %v898 = vpop.f32.mrf.mxu0
      %v899 = vadd.f32 0.0, %v898
      %900 = vmatmul.f32.gmra.mxu0 %v814
      %v901 = vpop.f32.mrf.mxu0
      %v902 = vadd.f32 0.0, %v901
      %903 = vmatmul.f32.gmra.mxu0 %v816
      %v904 = vpop.f32.mrf.mxu0
      %v905 = vadd.f32 0.0, %v904
      %906 = vmatmul.f32.gmra.mxu0 %v818
      %v907 = vpop.f32.mrf.mxu0
      %v908 = vadd.f32 0.0, %v907
      %909 = vmatmul.f32.gmra.mxu0 %v820
      %v910 = vpop.f32.mrf.mxu0
      %v911 = vadd.f32 0.0, %v910
      %912 = vmatmul.f32.gmra.mxu0 %v822
      %v913 = vpop.f32.mrf.mxu0
      %v914 = vadd.f32 0.0, %v913
      %915 = vmatmul.f32.gmra.mxu0 %v824
      %v916 = vpop.f32.mrf.mxu0
      %v917 = vadd.f32 0.0, %v916
      %918 = vmatmul.f32.gmra.mxu0 %v826
      %v919 = vpop.f32.mrf.mxu0
      %v920 = vadd.f32 0.0, %v919
      %921 = vmatmul.f32.gmra.mxu0 %v828
      %v922 = vpop.f32.mrf.mxu0
      %v923 = vadd.f32 0.0, %v922
      %924 = vmatmul.f32.gmra.mxu0 %v830
      %v925 = vpop.f32.mrf.mxu0
      %v926 = vadd.f32 0.0, %v925
      %927 = vmatmul.f32.gmra.mxu0 %v832
      %v928 = vpop.f32.mrf.mxu0
      %v929 = vadd.f32 0.0, %v928
      %930 = vmatmul.f32.gmra.mxu0 %v834
      %v931 = vpop.f32.mrf.mxu0
      %v932 = vadd.f32 0.0, %v931
      %933 = vmatmul.f32.gmra.mxu0 %v836
      %v934 = vpop.f32.mrf.mxu0
      %v935 = vadd.f32 0.0, %v934
      %936 = vmatmul.f32.gmra.mxu0 %v838
      %v937 = vpop.f32.mrf.mxu0
      %v938 = vadd.f32 0.0, %v937
      %939 = vmatmul.f32.gmra.mxu0 %v840
      %v940 = vpop.f32.mrf.mxu0
      %v941 = vadd.f32 0.0, %v940
      %942 = vmatmul.f32.gmra.mxu0 %v842
      %v943 = vpop.f32.mrf.mxu0
      %v944 = vadd.f32 0.0, %v943
      %945 = vmatmul.f32.gmra.mxu0 %v844
      %v946 = vpop.f32.mrf.mxu0
      %v947 = vadd.f32 0.0, %v946
      %948 = vmatmul.f32.gmra.mxu0 %v846
      %v949 = vpop.f32.mrf.mxu0
      %v950 = vadd.f32 0.0, %v949
      %951 = vmatmul.f32.gmra.mxu0 %v848
      %v952 = vpop.f32.mrf.mxu0
      %v953 = vadd.f32 0.0, %v952
      %954 = vmatmul.f32.gmra.mxu0 %v850
      %v955 = vpop.f32.mrf.mxu0
      %v956 = vadd.f32 0.0, %v955
      %957 = vmatmul.f32.gmra.mxu0 %v852
      %v958 = vpop.f32.mrf.mxu0
      %v959 = vadd.f32 0.0, %v958
      %960 = vmatmul.f32.gmra.mxu0 %v854
      %v961 = vpop.f32.mrf.mxu0
      %v962 = vadd.f32 0.0, %v961
      %963 = vmatmul.f32.gmra.mxu0 %v856
      %v964 = vpop.f32.mrf.mxu0
      %v965 = vadd.f32 0.0, %v964
      %966 = vmatmul.f32.gmra.mxu0 %v858
      %v967 = vpop.f32.mrf.mxu0
      %v968 = vadd.f32 0.0, %v967
      %969 = vmatmul.f32.gmra.mxu0 %v860
      %v970 = vpop.f32.mrf.mxu0
      %v971 = vadd.f32 0.0, %v970
      %972 = vmatmul.f32.gmra.mxu0 %v862
      %v973 = vpop.f32.mrf.mxu0
      %v974 = vadd.f32 0.0, %v973
      %975 = vmatmul.f32.gmra.mxu0 %v864
      %v976 = vpop.f32.mrf.mxu0
      %v977 = vadd.f32 0.0, %v976
      %978 = vmatmul.f32.gmra.mxu0 %v866
      %v979 = vpop.f32.mrf.mxu0
      %v980 = vadd.f32 0.0, %v979
      %981 = vmatmul.f32.gmra.mxu0 %v868
      %v982 = vpop.f32.mrf.mxu0
      %v983 = vadd.f32 0.0, %v982
      %984 = vmatmul.f32.gmra.mxu0 %v870
      %v985 = vpop.f32.mrf.mxu0
      %v986 = vadd.f32 0.0, %v985
      %987 = vdwg.mxu0
      %v988 = vadd.f32 %v630, %v893
      %v989 = vadd.f32 %v633, %v896
      %v990 = vadd.f32 %v636, %v899
      %v991 = vadd.f32 %v639, %v902
      %v992 = vadd.f32 %v642, %v905
      %v993 = vadd.f32 %v645, %v908
      %v994 = vadd.f32 %v648, %v911
      %v995 = vadd.f32 %v651, %v914
      %v996 = vadd.f32 %v654, %v917
      %v997 = vadd.f32 %v657, %v920
      %v998 = vadd.f32 %v660, %v923
      %v999 = vadd.f32 %v663, %v926
      %v1000 = vadd.f32 %v666, %v929
      %v1001 = vadd.f32 %v669, %v932
      %v1002 = vadd.f32 %v672, %v935
      %v1003 = vadd.f32 %v675, %v938
      %v1004 = vadd.f32 %v678, %v941
      %v1005 = vadd.f32 %v681, %v944
      %v1006 = vadd.f32 %v684, %v947
      %v1007 = vadd.f32 %v687, %v950
      %v1008 = vadd.f32 %v690, %v953
      %v1009 = vadd.f32 %v693, %v956
      %v1010 = vadd.f32 %v696, %v959
      %v1011 = vadd.f32 %v699, %v962
      %v1012 = vadd.f32 %v702, %v965
      %v1013 = vadd.f32 %v705, %v968
      %v1014 = vadd.f32 %v708, %v971
      %v1015 = vadd.f32 %v711, %v974
      %v1016 = vadd.f32 %v714, %v977
      %v1017 = vadd.f32 %v717, %v980
      %v1018 = vadd.f32 %v720, %v983
      %v1019 = vadd.f32 %v723, %v986
      %vm1020 = vcmask 1044480
      %v1021 = vrot.slane %v171, 3
      %v1022 = vrot.slane %v172, 3
      %v1023 = vsel %vm1020, %v1021, %v1022
      %v1024 = vrot.slane %v173, 3
      %v1025 = vsel %vm1020, %v1022, %v1024
      %v1026 = vrot.slane %v174, 3
      %v1027 = vrot.slane %v175, 3
      %v1028 = vsel %vm1020, %v1026, %v1027
      %v1029 = vrot.slane %v176, 3
      %v1030 = vsel %vm1020, %v1027, %v1029
      %v1031 = vrot.slane %v177, 3
      %v1032 = vrot.slane %v178, 3
      %v1033 = vsel %vm1020, %v1031, %v1032
      %v1034 = vrot.slane %v179, 3
      %v1035 = vsel %vm1020, %v1032, %v1034
      %v1036 = vrot.slane %v180, 3
      %v1037 = vrot.slane %v181, 3
      %v1038 = vsel %vm1020, %v1036, %v1037
      %v1039 = vrot.slane %v182, 3
      %v1040 = vsel %vm1020, %v1037, %v1039
      %v1041 = vrot.slane %v183, 3
      %v1042 = vrot.slane %v184, 3
      %v1043 = vsel %vm1020, %v1041, %v1042
      %v1044 = vrot.slane %v185, 3
      %v1045 = vsel %vm1020, %v1042, %v1044
      %v1046 = vrot.slane %v186, 3
      %v1047 = vrot.slane %v187, 3
      %v1048 = vsel %vm1020, %v1046, %v1047
      %v1049 = vrot.slane %v188, 3
      %v1050 = vsel %vm1020, %v1047, %v1049
      %v1051 = vrot.slane %v189, 3
      %v1052 = vrot.slane %v190, 3
      %v1053 = vsel %vm1020, %v1051, %v1052
      %v1054 = vrot.slane %v191, 3
      %v1055 = vsel %vm1020, %v1052, %v1054
      %v1056 = vrot.slane %v192, 3
      %v1057 = vrot.slane %v193, 3
      %v1058 = vsel %vm1020, %v1056, %v1057
      %v1059 = vrot.slane %v194, 3
      %v1060 = vsel %vm1020, %v1057, %v1059
      %v1061 = vrot.slane %v195, 3
      %v1062 = vrot.slane %v196, 3
      %v1063 = vsel %vm1020, %v1061, %v1062
      %v1064 = vrot.slane %v197, 3
      %v1065 = vsel %vm1020, %v1062, %v1064
      %v1066 = vrot.slane %v198, 3
      %v1067 = vrot.slane %v199, 3
      %v1068 = vsel %vm1020, %v1066, %v1067
      %v1069 = vrot.slane %v200, 3
      %v1070 = vsel %vm1020, %v1067, %v1069
      %v1071 = vrot.slane %v201, 3
      %v1072 = vrot.slane %v202, 3
      %v1073 = vsel %vm1020, %v1071, %v1072
      %v1074 = vrot.slane %v203, 3
      %v1075 = vsel %vm1020, %v1072, %v1074
      %v1076 = vrot.slane %v204, 3
      %v1077 = vrot.slane %v205, 3
      %v1078 = vsel %vm1020, %v1076, %v1077
      %v1079 = vrot.slane %v206, 3
      %v1080 = vsel %vm1020, %v1077, %v1079
      %v1081 = vrot.slane %v207, 3
      %v1082 = vrot.slane %v208, 3
      %v1083 = vsel %vm1020, %v1081, %v1082
      %v1084 = vrot.slane %v209, 3
      %v1085 = vsel %vm1020, %v1082, %v1084
      %v1086 = vrot.slane %v210, 3
      %v1087 = vrot.slane %v211, 3
      %v1088 = vsel %vm1020, %v1086, %v1087
      %v1089 = vrot.slane %v212, 3
      %v1090 = vsel %vm1020, %v1087, %v1089
      %v1091 = vrot.slane %v213, 3
      %v1092 = vrot.slane %v214, 3
      %v1093 = vsel %vm1020, %v1091, %v1092
      %v1094 = vrot.slane %v215, 3
      %v1095 = vsel %vm1020, %v1092, %v1094
      %v1096 = vrot.slane %v216, 3
      %v1097 = vrot.slane %v217, 3
      %v1098 = vsel %vm1020, %v1096, %v1097
      %v1099 = vrot.slane %v218, 3
      %v1100 = vsel %vm1020, %v1097, %v1099
      %s1101 = scalar_lea.vmem %s1, 12
      %v1102 = vld [vmem:[%s1101] sm:$0xf]
      %v1103 = vsel %vm363, %v1023, 0
      %v1105 = vsel %vm363, %v1025, 0
      %v1107 = vsel %vm363, %v1028, 0
      %v1109 = vsel %vm363, %v1030, 0
      %v1111 = vsel %vm363, %v1033, 0
      %v1113 = vsel %vm363, %v1035, 0
      %v1115 = vsel %vm363, %v1038, 0
      %v1117 = vsel %vm363, %v1040, 0
      %v1119 = vsel %vm363, %v1043, 0
      %v1121 = vsel %vm363, %v1045, 0
      %v1123 = vsel %vm363, %v1048, 0
      %v1125 = vsel %vm363, %v1050, 0
      %v1127 = vsel %vm363, %v1053, 0
      %v1129 = vsel %vm363, %v1055, 0
      %v1131 = vsel %vm363, %v1058, 0
      %v1133 = vsel %vm363, %v1060, 0
      %v1135 = vsel %vm363, %v1063, 0
      %v1137 = vsel %vm363, %v1065, 0
      %v1139 = vsel %vm363, %v1068, 0
      %v1141 = vsel %vm363, %v1070, 0
      %v1143 = vsel %vm363, %v1073, 0
      %v1145 = vsel %vm363, %v1075, 0
      %v1147 = vsel %vm363, %v1078, 0
      %v1149 = vsel %vm363, %v1080, 0
      %v1151 = vsel %vm363, %v1083, 0
      %v1153 = vsel %vm363, %v1085, 0
      %v1155 = vsel %vm363, %v1088, 0
      %v1157 = vsel %vm363, %v1090, 0
      %v1159 = vsel %vm363, %v1093, 0
      %v1161 = vsel %vm363, %v1095, 0
      %v1163 = vsel %vm363, %v1098, 0
      %v1165 = vsel %vm363, %v1100, 0
      %v1168 = vsel %vm428, %v1102, 0
      %1170 = vmatpush.msra.mxu0 0.0
      %1171 = vmatpush.msra.mxu0 0.0
      %1172 = vmatpush.msra.mxu0 0.0
      %1173 = vmatpush.msra.mxu0 0.0
      %1174 = vmatpush.msra.mxu0 0.0
      %1175 = vmatpush.msra.mxu0 0.0
      %1176 = vmatpush.msra.mxu0 0.0
      %1177 = vmatpush.msra.mxu0 0.0
      %1178 = vmatpush.msra.mxu0 0.0
      %1179 = vmatpush.msra.mxu0 0.0
      %1180 = vmatpush.msra.mxu0 0.0
      %1181 = vmatpush.msra.mxu0 0.0
      %1182 = vmatpush.msra.mxu0 0.0
      %1183 = vmatpush.msra.mxu0 0.0
      %1184 = vmatpush.msra.mxu0 0.0
      %1185 = vmatpush.msra.mxu0 %v1168
      %1186 = vmatmul.f32.gmra.mxu0 %v1103
      %v1187 = vpop.f32.mrf.mxu0
      %v1188 = vadd.f32 0.0, %v1187
      %1189 = vmatmul.f32.gmra.mxu0 %v1105
      %v1190 = vpop.f32.mrf.mxu0
      %v1191 = vadd.f32 0.0, %v1190
      %1192 = vmatmul.f32.gmra.mxu0 %v1107
      %v1193 = vpop.f32.mrf.mxu0
      %v1194 = vadd.f32 0.0, %v1193
      %1195 = vmatmul.f32.gmra.mxu0 %v1109
      %v1196 = vpop.f32.mrf.mxu0
      %v1197 = vadd.f32 0.0, %v1196
      %1198 = vmatmul.f32.gmra.mxu0 %v1111
      %v1199 = vpop.f32.mrf.mxu0
      %v1200 = vadd.f32 0.0, %v1199
      %1201 = vmatmul.f32.gmra.mxu0 %v1113
      %v1202 = vpop.f32.mrf.mxu0
      %v1203 = vadd.f32 0.0, %v1202
      %1204 = vmatmul.f32.gmra.mxu0 %v1115
      %v1205 = vpop.f32.mrf.mxu0
      %v1206 = vadd.f32 0.0, %v1205
      %1207 = vmatmul.f32.gmra.mxu0 %v1117
      %v1208 = vpop.f32.mrf.mxu0
      %v1209 = vadd.f32 0.0, %v1208
      %1210 = vmatmul.f32.gmra.mxu0 %v1119
      %v1211 = vpop.f32.mrf.mxu0
      %v1212 = vadd.f32 0.0, %v1211
      %1213 = vmatmul.f32.gmra.mxu0 %v1121
      %v1214 = vpop.f32.mrf.mxu0
      %v1215 = vadd.f32 0.0, %v1214
      %1216 = vmatmul.f32.gmra.mxu0 %v1123
      %v1217 = vpop.f32.mrf.mxu0
      %v1218 = vadd.f32 0.0, %v1217
      %1219 = vmatmul.f32.gmra.mxu0 %v1125
      %v1220 = vpop.f32.mrf.mxu0
      %v1221 = vadd.f32 0.0, %v1220
      %1222 = vmatmul.f32.gmra.mxu0 %v1127
      %v1223 = vpop.f32.mrf.mxu0
      %v1224 = vadd.f32 0.0, %v1223
      %1225 = vmatmul.f32.gmra.mxu0 %v1129
      %v1226 = vpop.f32.mrf.mxu0
      %v1227 = vadd.f32 0.0, %v1226
      %1228 = vmatmul.f32.gmra.mxu0 %v1131
      %v1229 = vpop.f32.mrf.mxu0
      %v1230 = vadd.f32 0.0, %v1229
      %1231 = vmatmul.f32.gmra.mxu0 %v1133
      %v1232 = vpop.f32.mrf.mxu0
      %v1233 = vadd.f32 0.0, %v1232
      %1234 = vmatmul.f32.gmra.mxu0 %v1135
      %v1235 = vpop.f32.mrf.mxu0
      %v1236 = vadd.f32 0.0, %v1235
      %1237 = vmatmul.f32.gmra.mxu0 %v1137
      %v1238 = vpop.f32.mrf.mxu0
      %v1239 = vadd.f32 0.0, %v1238
      %1240 = vmatmul.f32.gmra.mxu0 %v1139
      %v1241 = vpop.f32.mrf.mxu0
      %v1242 = vadd.f32 0.0, %v1241
      %1243 = vmatmul.f32.gmra.mxu0 %v1141
      %v1244 = vpop.f32.mrf.mxu0
      %v1245 = vadd.f32 0.0, %v1244
      %1246 = vmatmul.f32.gmra.mxu0 %v1143
      %v1247 = vpop.f32.mrf.mxu0
      %v1248 = vadd.f32 0.0, %v1247
      %1249 = vmatmul.f32.gmra.mxu0 %v1145
      %v1250 = vpop.f32.mrf.mxu0
      %v1251 = vadd.f32 0.0, %v1250
      %1252 = vmatmul.f32.gmra.mxu0 %v1147
      %v1253 = vpop.f32.mrf.mxu0
      %v1254 = vadd.f32 0.0, %v1253
      %1255 = vmatmul.f32.gmra.mxu0 %v1149
      %v1256 = vpop.f32.mrf.mxu0
      %v1257 = vadd.f32 0.0, %v1256
      %1258 = vmatmul.f32.gmra.mxu0 %v1151
      %v1259 = vpop.f32.mrf.mxu0
      %v1260 = vadd.f32 0.0, %v1259
      %1261 = vmatmul.f32.gmra.mxu0 %v1153
      %v1262 = vpop.f32.mrf.mxu0
      %v1263 = vadd.f32 0.0, %v1262
      %1264 = vmatmul.f32.gmra.mxu0 %v1155
      %v1265 = vpop.f32.mrf.mxu0
      %v1266 = vadd.f32 0.0, %v1265
      %1267 = vmatmul.f32.gmra.mxu0 %v1157
      %v1268 = vpop.f32.mrf.mxu0
      %v1269 = vadd.f32 0.0, %v1268
      %1270 = vmatmul.f32.gmra.mxu0 %v1159
      %v1271 = vpop.f32.mrf.mxu0
      %v1272 = vadd.f32 0.0, %v1271
      %1273 = vmatmul.f32.gmra.mxu0 %v1161
      %v1274 = vpop.f32.mrf.mxu0
      %v1275 = vadd.f32 0.0, %v1274
      %1276 = vmatmul.f32.gmra.mxu0 %v1163
      %v1277 = vpop.f32.mrf.mxu0
      %v1278 = vadd.f32 0.0, %v1277
      %1279 = vmatmul.f32.gmra.mxu0 %v1165
      %v1280 = vpop.f32.mrf.mxu0
      %v1281 = vadd.f32 0.0, %v1280
      %1282 = vdwg.mxu0
      %v1283 = vadd.f32 %v988, %v1188
      %v1284 = vadd.f32 %v989, %v1191
      %v1285 = vadd.f32 %v990, %v1194
      %v1286 = vadd.f32 %v991, %v1197
      %v1287 = vadd.f32 %v992, %v1200
      %v1288 = vadd.f32 %v993, %v1203
      %v1289 = vadd.f32 %v994, %v1206
      %v1290 = vadd.f32 %v995, %v1209
      %v1291 = vadd.f32 %v996, %v1212
      %v1292 = vadd.f32 %v997, %v1215
      %v1293 = vadd.f32 %v998, %v1218
      %v1294 = vadd.f32 %v999, %v1221
      %v1295 = vadd.f32 %v1000, %v1224
      %v1296 = vadd.f32 %v1001, %v1227
      %v1297 = vadd.f32 %v1002, %v1230
      %v1298 = vadd.f32 %v1003, %v1233
      %v1299 = vadd.f32 %v1004, %v1236
      %v1300 = vadd.f32 %v1005, %v1239
      %v1301 = vadd.f32 %v1006, %v1242
      %v1302 = vadd.f32 %v1007, %v1245
      %v1303 = vadd.f32 %v1008, %v1248
      %v1304 = vadd.f32 %v1009, %v1251
      %v1305 = vadd.f32 %v1010, %v1254
      %v1306 = vadd.f32 %v1011, %v1257
      %v1307 = vadd.f32 %v1012, %v1260
      %v1308 = vadd.f32 %v1013, %v1263
      %v1309 = vadd.f32 %v1014, %v1266
      %v1310 = vadd.f32 %v1015, %v1269
      %v1311 = vadd.f32 %v1016, %v1272
      %v1312 = vadd.f32 %v1017, %v1275
      %v1313 = vadd.f32 %v1018, %v1278
      %v1314 = vadd.f32 %v1019, %v1281
      %v1315 = vrot.slane %v171, 4
      %v1316 = vrot.slane %v172, 4
      %v1317 = vsel %vm428, %v1315, %v1316
      %v1318 = vrot.slane %v173, 4
      %v1319 = vsel %vm428, %v1316, %v1318
      %v1320 = vrot.slane %v174, 4
      %v1321 = vrot.slane %v175, 4
      %v1322 = vsel %vm428, %v1320, %v1321
      %v1323 = vrot.slane %v176, 4
      %v1324 = vsel %vm428, %v1321, %v1323
      %v1325 = vrot.slane %v177, 4
      %v1326 = vrot.slane %v178, 4
      %v1327 = vsel %vm428, %v1325, %v1326
      %v1328 = vrot.slane %v179, 4
      %v1329 = vsel %vm428, %v1326, %v1328
      %v1330 = vrot.slane %v180, 4
      %v1331 = vrot.slane %v181, 4
      %v1332 = vsel %vm428, %v1330, %v1331
      %v1333 = vrot.slane %v182, 4
      %v1334 = vsel %vm428, %v1331, %v1333
      %v1335 = vrot.slane %v183, 4
      %v1336 = vrot.slane %v184, 4
      %v1337 = vsel %vm428, %v1335, %v1336
      %v1338 = vrot.slane %v185, 4
      %v1339 = vsel %vm428, %v1336, %v1338
      %v1340 = vrot.slane %v186, 4
      %v1341 = vrot.slane %v187, 4
      %v1342 = vsel %vm428, %v1340, %v1341
      %v1343 = vrot.slane %v188, 4
      %v1344 = vsel %vm428, %v1341, %v1343
      %v1345 = vrot.slane %v189, 4
      %v1346 = vrot.slane %v190, 4
      %v1347 = vsel %vm428, %v1345, %v1346
      %v1348 = vrot.slane %v191, 4
      %v1349 = vsel %vm428, %v1346, %v1348
      %v1350 = vrot.slane %v192, 4
      %v1351 = vrot.slane %v193, 4
      %v1352 = vsel %vm428, %v1350, %v1351
      %v1353 = vrot.slane %v194, 4
      %v1354 = vsel %vm428, %v1351, %v1353
      %v1355 = vrot.slane %v195, 4
      %v1356 = vrot.slane %v196, 4
      %v1357 = vsel %vm428, %v1355, %v1356
      %v1358 = vrot.slane %v197, 4
      %v1359 = vsel %vm428, %v1356, %v1358
      %v1360 = vrot.slane %v198, 4
      %v1361 = vrot.slane %v199, 4
      %v1362 = vsel %vm428, %v1360, %v1361
      %v1363 = vrot.slane %v200, 4
      %v1364 = vsel %vm428, %v1361, %v1363
      %v1365 = vrot.slane %v201, 4
      %v1366 = vrot.slane %v202, 4
      %v1367 = vsel %vm428, %v1365, %v1366
      %v1368 = vrot.slane %v203, 4
      %v1369 = vsel %vm428, %v1366, %v1368
      %v1370 = vrot.slane %v204, 4
      %v1371 = vrot.slane %v205, 4
      %v1372 = vsel %vm428, %v1370, %v1371
      %v1373 = vrot.slane %v206, 4
      %v1374 = vsel %vm428, %v1371, %v1373
      %v1375 = vrot.slane %v207, 4
      %v1376 = vrot.slane %v208, 4
      %v1377 = vsel %vm428, %v1375, %v1376
      %v1378 = vrot.slane %v209, 4
      %v1379 = vsel %vm428, %v1376, %v1378
      %v1380 = vrot.slane %v210, 4
      %v1381 = vrot.slane %v211, 4
      %v1382 = vsel %vm428, %v1380, %v1381
      %v1383 = vrot.slane %v212, 4
      %v1384 = vsel %vm428, %v1381, %v1383
      %v1385 = vrot.slane %v213, 4
      %v1386 = vrot.slane %v214, 4
      %v1387 = vsel %vm428, %v1385, %v1386
      %v1388 = vrot.slane %v215, 4
      %v1389 = vsel %vm428, %v1386, %v1388
      %v1390 = vrot.slane %v216, 4
      %v1391 = vrot.slane %v217, 4
      %v1392 = vsel %vm428, %v1390, %v1391
      %v1393 = vrot.slane %v218, 4
      %v1394 = vsel %vm428, %v1391, %v1393
      %s1395 = scalar_lea.vmem %s1, 16
      %v1396 = vld [vmem:[%s1395] sm:$0xf]
      %v1397 = vsel %vm363, %v1317, 0
      %v1399 = vsel %vm363, %v1319, 0
      %v1401 = vsel %vm363, %v1322, 0
      %v1403 = vsel %vm363, %v1324, 0
      %v1405 = vsel %vm363, %v1327, 0
      %v1407 = vsel %vm363, %v1329, 0
      %v1409 = vsel %vm363, %v1332, 0
      %v1411 = vsel %vm363, %v1334, 0
      %v1413 = vsel %vm363, %v1337, 0
      %v1415 = vsel %vm363, %v1339, 0
      %v1417 = vsel %vm363, %v1342, 0
      %v1419 = vsel %vm363, %v1344, 0
      %v1421 = vsel %vm363, %v1347, 0
      %v1423 = vsel %vm363, %v1349, 0
      %v1425 = vsel %vm363, %v1352, 0
      %v1427 = vsel %vm363, %v1354, 0
      %v1429 = vsel %vm363, %v1357, 0
      %v1431 = vsel %vm363, %v1359, 0
      %v1433 = vsel %vm363, %v1362, 0
      %v1435 = vsel %vm363, %v1364, 0
      %v1437 = vsel %vm363, %v1367, 0
      %v1439 = vsel %vm363, %v1369, 0
      %v1441 = vsel %vm363, %v1372, 0
      %v1443 = vsel %vm363, %v1374, 0
      %v1445 = vsel %vm363, %v1377, 0
      %v1447 = vsel %vm363, %v1379, 0
      %v1449 = vsel %vm363, %v1382, 0
      %v1451 = vsel %vm363, %v1384, 0
      %v1453 = vsel %vm363, %v1387, 0
      %v1455 = vsel %vm363, %v1389, 0
      %v1457 = vsel %vm363, %v1392, 0
      %v1459 = vsel %vm363, %v1394, 0
      %v1462 = vsel %vm428, %v1396, 0
      %1464 = vmatpush.msra.mxu0 0.0
      %1465 = vmatpush.msra.mxu0 0.0
      %1466 = vmatpush.msra.mxu0 0.0
      %1467 = vmatpush.msra.mxu0 0.0
      %1468 = vmatpush.msra.mxu0 0.0
      %1469 = vmatpush.msra.mxu0 0.0
      %1470 = vmatpush.msra.mxu0 0.0
      %1471 = vmatpush.msra.mxu0 0.0
      %1472 = vmatpush.msra.mxu0 0.0
      %1473 = vmatpush.msra.mxu0 0.0
      %1474 = vmatpush.msra.mxu0 0.0
      %1475 = vmatpush.msra.mxu0 0.0
      %1476 = vmatpush.msra.mxu0 0.0
      %1477 = vmatpush.msra.mxu0 0.0
      %1478 = vmatpush.msra.mxu0 0.0
      %1479 = vmatpush.msra.mxu0 %v1462
      %1480 = vmatmul.f32.gmra.mxu0 %v1397
      %v1481 = vpop.f32.mrf.mxu0
      %v1482 = vadd.f32 0.0, %v1481
      %1483 = vmatmul.f32.gmra.mxu0 %v1399
      %v1484 = vpop.f32.mrf.mxu0
      %v1485 = vadd.f32 0.0, %v1484
      %1486 = vmatmul.f32.gmra.mxu0 %v1401
      %v1487 = vpop.f32.mrf.mxu0
      %v1488 = vadd.f32 0.0, %v1487
      %1489 = vmatmul.f32.gmra.mxu0 %v1403
      %v1490 = vpop.f32.mrf.mxu0
      %v1491 = vadd.f32 0.0, %v1490
      %1492 = vmatmul.f32.gmra.mxu0 %v1405
      %v1493 = vpop.f32.mrf.mxu0
      %v1494 = vadd.f32 0.0, %v1493
      %1495 = vmatmul.f32.gmra.mxu0 %v1407
      %v1496 = vpop.f32.mrf.mxu0
      %v1497 = vadd.f32 0.0, %v1496
      %1498 = vmatmul.f32.gmra.mxu0 %v1409
      %v1499 = vpop.f32.mrf.mxu0
      %v1500 = vadd.f32 0.0, %v1499
      %1501 = vmatmul.f32.gmra.mxu0 %v1411
      %v1502 = vpop.f32.mrf.mxu0
      %v1503 = vadd.f32 0.0, %v1502
      %1504 = vmatmul.f32.gmra.mxu0 %v1413
      %v1505 = vpop.f32.mrf.mxu0
      %v1506 = vadd.f32 0.0, %v1505
      %1507 = vmatmul.f32.gmra.mxu0 %v1415
      %v1508 = vpop.f32.mrf.mxu0
      %v1509 = vadd.f32 0.0, %v1508
      %1510 = vmatmul.f32.gmra.mxu0 %v1417
      %v1511 = vpop.f32.mrf.mxu0
      %v1512 = vadd.f32 0.0, %v1511
      %1513 = vmatmul.f32.gmra.mxu0 %v1419
      %v1514 = vpop.f32.mrf.mxu0
      %v1515 = vadd.f32 0.0, %v1514
      %1516 = vmatmul.f32.gmra.mxu0 %v1421
      %v1517 = vpop.f32.mrf.mxu0
      %v1518 = vadd.f32 0.0, %v1517
      %1519 = vmatmul.f32.gmra.mxu0 %v1423
      %v1520 = vpop.f32.mrf.mxu0
      %v1521 = vadd.f32 0.0, %v1520
      %1522 = vmatmul.f32.gmra.mxu0 %v1425
      %v1523 = vpop.f32.mrf.mxu0
      %v1524 = vadd.f32 0.0, %v1523
      %1525 = vmatmul.f32.gmra.mxu0 %v1427
      %v1526 = vpop.f32.mrf.mxu0
      %v1527 = vadd.f32 0.0, %v1526
      %1528 = vmatmul.f32.gmra.mxu0 %v1429
      %v1529 = vpop.f32.mrf.mxu0
      %v1530 = vadd.f32 0.0, %v1529
      %1531 = vmatmul.f32.gmra.mxu0 %v1431
      %v1532 = vpop.f32.mrf.mxu0
      %v1533 = vadd.f32 0.0, %v1532
      %1534 = vmatmul.f32.gmra.mxu0 %v1433
      %v1535 = vpop.f32.mrf.mxu0
      %v1536 = vadd.f32 0.0, %v1535
      %1537 = vmatmul.f32.gmra.mxu0 %v1435
      %v1538 = vpop.f32.mrf.mxu0
      %v1539 = vadd.f32 0.0, %v1538
      %1540 = vmatmul.f32.gmra.mxu0 %v1437
      %v1541 = vpop.f32.mrf.mxu0
      %v1542 = vadd.f32 0.0, %v1541
      %1543 = vmatmul.f32.gmra.mxu0 %v1439
      %v1544 = vpop.f32.mrf.mxu0
      %v1545 = vadd.f32 0.0, %v1544
      %1546 = vmatmul.f32.gmra.mxu0 %v1441
      %v1547 = vpop.f32.mrf.mxu0
      %v1548 = vadd.f32 0.0, %v1547
      %1549 = vmatmul.f32.gmra.mxu0 %v1443
      %v1550 = vpop.f32.mrf.mxu0
      %v1551 = vadd.f32 0.0, %v1550
      %1552 = vmatmul.f32.gmra.mxu0 %v1445
      %v1553 = vpop.f32.mrf.mxu0
      %v1554 = vadd.f32 0.0, %v1553
      %1555 = vmatmul.f32.gmra.mxu0 %v1447
      %v1556 = vpop.f32.mrf.mxu0
      %v1557 = vadd.f32 0.0, %v1556
      %1558 = vmatmul.f32.gmra.mxu0 %v1449
      %v1559 = vpop.f32.mrf.mxu0
      %v1560 = vadd.f32 0.0, %v1559
      %1561 = vmatmul.f32.gmra.mxu0 %v1451
      %v1562 = vpop.f32.mrf.mxu0
      %v1563 = vadd.f32 0.0, %v1562
      %1564 = vmatmul.f32.gmra.mxu0 %v1453
      %v1565 = vpop.f32.mrf.mxu0
      %v1566 = vadd.f32 0.0, %v1565
      %1567 = vmatmul.f32.gmra.mxu0 %v1455
      %v1568 = vpop.f32.mrf.mxu0
      %v1569 = vadd.f32 0.0, %v1568
      %1570 = vmatmul.f32.gmra.mxu0 %v1457
      %v1571 = vpop.f32.mrf.mxu0
      %v1572 = vadd.f32 0.0, %v1571
      %1573 = vmatmul.f32.gmra.mxu0 %v1459
      %v1574 = vpop.f32.mrf.mxu0
      %v1575 = vadd.f32 0.0, %v1574
      %1576 = vdwg.mxu0
      %v1577 = vadd.f32 %v1283, %v1482
      %v1578 = vadd.f32 %v1284, %v1485
      %v1579 = vadd.f32 %v1285, %v1488
      %v1580 = vadd.f32 %v1286, %v1491
      %v1581 = vadd.f32 %v1287, %v1494
      %v1582 = vadd.f32 %v1288, %v1497
      %v1583 = vadd.f32 %v1289, %v1500
      %v1584 = vadd.f32 %v1290, %v1503
      %v1585 = vadd.f32 %v1291, %v1506
      %v1586 = vadd.f32 %v1292, %v1509
      %v1587 = vadd.f32 %v1293, %v1512
      %v1588 = vadd.f32 %v1294, %v1515
      %v1589 = vadd.f32 %v1295, %v1518
      %v1590 = vadd.f32 %v1296, %v1521
      %v1591 = vadd.f32 %v1297, %v1524
      %v1592 = vadd.f32 %v1298, %v1527
      %v1593 = vadd.f32 %v1299, %v1530
      %v1594 = vadd.f32 %v1300, %v1533
      %v1595 = vadd.f32 %v1301, %v1536
      %v1596 = vadd.f32 %v1302, %v1539
      %v1597 = vadd.f32 %v1303, %v1542
      %v1598 = vadd.f32 %v1304, %v1545
      %v1599 = vadd.f32 %v1305, %v1548
      %v1600 = vadd.f32 %v1306, %v1551
      %v1601 = vadd.f32 %v1307, %v1554
      %v1602 = vadd.f32 %v1308, %v1557
      %v1603 = vadd.f32 %v1309, %v1560
      %v1604 = vadd.f32 %v1310, %v1563
      %v1605 = vadd.f32 %v1311, %v1566
      %v1606 = vadd.f32 %v1312, %v1569
      %v1607 = vadd.f32 %v1313, %v1572
      %v1608 = vadd.f32 %v1314, %v1575
      %s1609 = scalar_lea.vmem %s1, 20
      %v1610 = vld [vmem:[%s1609] sm:$0xf]
      %v1612 = vsel %vm363, %v219, 0
      %v1615 = vsel %vm363, %v220, 0
      %v1618 = vsel %vm428, %v1610, 0
      %1620 = vmatpush.msra.mxu0 0.0
      %1621 = vmatpush.msra.mxu0 0.0
      %1622 = vmatpush.msra.mxu0 0.0
      %1623 = vmatpush.msra.mxu0 0.0
      %1624 = vmatpush.msra.mxu0 0.0
      %1625 = vmatpush.msra.mxu0 0.0
      %1626 = vmatpush.msra.mxu0 0.0
      %1627 = vmatpush.msra.mxu0 0.0
      %1628 = vmatpush.msra.mxu0 0.0
      %1629 = vmatpush.msra.mxu0 0.0
      %1630 = vmatpush.msra.mxu0 0.0
      %1631 = vmatpush.msra.mxu0 0.0
      %1632 = vmatpush.msra.mxu0 0.0
      %1633 = vmatpush.msra.mxu0 0.0
      %1634 = vmatpush.msra.mxu0 0.0
      %1635 = vmatpush.msra.mxu0 %v1618
      %1636 = vmatmul.f32.gmra.mxu0 %v549
      %v1637 = vpop.f32.mrf.mxu0
      %v1638 = vadd.f32 0.0, %v1637
      %1639 = vmatmul.f32.gmra.mxu0 %v551
      %v1640 = vpop.f32.mrf.mxu0
      %v1641 = vadd.f32 0.0, %v1640
      %1642 = vmatmul.f32.gmra.mxu0 %v553
      %v1643 = vpop.f32.mrf.mxu0
      %v1644 = vadd.f32 0.0, %v1643
      %1645 = vmatmul.f32.gmra.mxu0 %v555
      %v1646 = vpop.f32.mrf.mxu0
      %v1647 = vadd.f32 0.0, %v1646
      %1648 = vmatmul.f32.gmra.mxu0 %v557
      %v1649 = vpop.f32.mrf.mxu0
      %v1650 = vadd.f32 0.0, %v1649
      %1651 = vmatmul.f32.gmra.mxu0 %v559
      %v1652 = vpop.f32.mrf.mxu0
      %v1653 = vadd.f32 0.0, %v1652
      %1654 = vmatmul.f32.gmra.mxu0 %v561
      %v1655 = vpop.f32.mrf.mxu0
      %v1656 = vadd.f32 0.0, %v1655
      %1657 = vmatmul.f32.gmra.mxu0 %v563
      %v1658 = vpop.f32.mrf.mxu0
      %v1659 = vadd.f32 0.0, %v1658
      %1660 = vmatmul.f32.gmra.mxu0 %v565
      %v1661 = vpop.f32.mrf.mxu0
      %v1662 = vadd.f32 0.0, %v1661
      %1663 = vmatmul.f32.gmra.mxu0 %v567
      %v1664 = vpop.f32.mrf.mxu0
      %v1665 = vadd.f32 0.0, %v1664
      %1666 = vmatmul.f32.gmra.mxu0 %v569
      %v1667 = vpop.f32.mrf.mxu0
      %v1668 = vadd.f32 0.0, %v1667
      %1669 = vmatmul.f32.gmra.mxu0 %v571
      %v1670 = vpop.f32.mrf.mxu0
      %v1671 = vadd.f32 0.0, %v1670
      %1672 = vmatmul.f32.gmra.mxu0 %v573
      %v1673 = vpop.f32.mrf.mxu0
      %v1674 = vadd.f32 0.0, %v1673
      %1675 = vmatmul.f32.gmra.mxu0 %v575
      %v1676 = vpop.f32.mrf.mxu0
      %v1677 = vadd.f32 0.0, %v1676
      %1678 = vmatmul.f32.gmra.mxu0 %v577
      %v1679 = vpop.f32.mrf.mxu0
      %v1680 = vadd.f32 0.0, %v1679
      %1681 = vmatmul.f32.gmra.mxu0 %v579
      %v1682 = vpop.f32.mrf.mxu0
      %v1683 = vadd.f32 0.0, %v1682
      %1684 = vmatmul.f32.gmra.mxu0 %v581
      %v1685 = vpop.f32.mrf.mxu0
      %v1686 = vadd.f32 0.0, %v1685
      %1687 = vmatmul.f32.gmra.mxu0 %v583
      %v1688 = vpop.f32.mrf.mxu0
      %v1689 = vadd.f32 0.0, %v1688
      %1690 = vmatmul.f32.gmra.mxu0 %v585
      %v1691 = vpop.f32.mrf.mxu0
      %v1692 = vadd.f32 0.0, %v1691
      %1693 = vmatmul.f32.gmra.mxu0 %v587
      %v1694 = vpop.f32.mrf.mxu0
      %v1695 = vadd.f32 0.0, %v1694
      %1696 = vmatmul.f32.gmra.mxu0 %v589
      %v1697 = vpop.f32.mrf.mxu0
      %v1698 = vadd.f32 0.0, %v1697
      %1699 = vmatmul.f32.gmra.mxu0 %v591
      %v1700 = vpop.f32.mrf.mxu0
      %v1701 = vadd.f32 0.0, %v1700
      %1702 = vmatmul.f32.gmra.mxu0 %v593
      %v1703 = vpop.f32.mrf.mxu0
      %v1704 = vadd.f32 0.0, %v1703
      %1705 = vmatmul.f32.gmra.mxu0 %v595
      %v1706 = vpop.f32.mrf.mxu0
      %v1707 = vadd.f32 0.0, %v1706
      %1708 = vmatmul.f32.gmra.mxu0 %v597
      %v1709 = vpop.f32.mrf.mxu0
      %v1710 = vadd.f32 0.0, %v1709
      %1711 = vmatmul.f32.gmra.mxu0 %v599
      %v1712 = vpop.f32.mrf.mxu0
      %v1713 = vadd.f32 0.0, %v1712
      %1714 = vmatmul.f32.gmra.mxu0 %v601
      %v1715 = vpop.f32.mrf.mxu0
      %v1716 = vadd.f32 0.0, %v1715
      %1717 = vmatmul.f32.gmra.mxu0 %v603
      %v1718 = vpop.f32.mrf.mxu0
      %v1719 = vadd.f32 0.0, %v1718
      %1720 = vmatmul.f32.gmra.mxu0 %v605
      %v1721 = vpop.f32.mrf.mxu0
      %v1722 = vadd.f32 0.0, %v1721
      %1723 = vmatmul.f32.gmra.mxu0 %v607
      %v1724 = vpop.f32.mrf.mxu0
      %v1725 = vadd.f32 0.0, %v1724
      %1726 = vmatmul.f32.gmra.mxu0 %v1612
      %v1727 = vpop.f32.mrf.mxu0
      %v1728 = vadd.f32 0.0, %v1727
      %1729 = vmatmul.f32.gmra.mxu0 %v1615
      %v1730 = vpop.f32.mrf.mxu0
      %v1731 = vadd.f32 0.0, %v1730
      %1732 = vdwg.mxu0
      %v1733 = vadd.f32 %v1577, %v1638
      %v1734 = vadd.f32 %v1578, %v1641
      %v1735 = vadd.f32 %v1579, %v1644
      %v1736 = vadd.f32 %v1580, %v1647
      %v1737 = vadd.f32 %v1581, %v1650
      %v1738 = vadd.f32 %v1582, %v1653
      %v1739 = vadd.f32 %v1583, %v1656
      %v1740 = vadd.f32 %v1584, %v1659
      %v1741 = vadd.f32 %v1585, %v1662
      %v1742 = vadd.f32 %v1586, %v1665
      %v1743 = vadd.f32 %v1587, %v1668
      %v1744 = vadd.f32 %v1588, %v1671
      %v1745 = vadd.f32 %v1589, %v1674
      %v1746 = vadd.f32 %v1590, %v1677
      %v1747 = vadd.f32 %v1591, %v1680
      %v1748 = vadd.f32 %v1592, %v1683
      %v1749 = vadd.f32 %v1593, %v1686
      %v1750 = vadd.f32 %v1594, %v1689
      %v1751 = vadd.f32 %v1595, %v1692
      %v1752 = vadd.f32 %v1596, %v1695
      %v1753 = vadd.f32 %v1597, %v1698
      %v1754 = vadd.f32 %v1598, %v1701
      %v1755 = vadd.f32 %v1599, %v1704
      %v1756 = vadd.f32 %v1600, %v1707
      %v1757 = vadd.f32 %v1601, %v1710
      %v1758 = vadd.f32 %v1602, %v1713
      %v1759 = vadd.f32 %v1603, %v1716
      %v1760 = vadd.f32 %v1604, %v1719
      %v1761 = vadd.f32 %v1605, %v1722
      %v1762 = vadd.f32 %v1606, %v1725
      %v1763 = vadd.f32 %v1607, %v1728
      %v1764 = vadd.f32 %v1608, %v1731
      %v1766 = vrot.slane %v219, 1
      %v1767 = vrot.slane %v220, 1
      %v1768 = vsel %vm280, %v1766, %v1767
      %v1769 = vrot.slane %v221, 1
      %v1770 = vsel %vm280, %v1767, %v1769
      %s1771 = scalar_lea.vmem %s1, 24
      %v1772 = vld [vmem:[%s1771] sm:$0xf]
      %v1773 = vsel %vm363, %v1768, 0
      %v1775 = vsel %vm363, %v1770, 0
      %v1778 = vsel %vm428, %v1772, 0
      %1780 = vmatpush.msra.mxu0 0.0
      %1781 = vmatpush.msra.mxu0 0.0
      %1782 = vmatpush.msra.mxu0 0.0
      %1783 = vmatpush.msra.mxu0 0.0
      %1784 = vmatpush.msra.mxu0 0.0
      %1785 = vmatpush.msra.mxu0 0.0
      %1786 = vmatpush.msra.mxu0 0.0
      %1787 = vmatpush.msra.mxu0 0.0
      %1788 = vmatpush.msra.mxu0 0.0
      %1789 = vmatpush.msra.mxu0 0.0
      %1790 = vmatpush.msra.mxu0 0.0
      %1791 = vmatpush.msra.mxu0 0.0
      %1792 = vmatpush.msra.mxu0 0.0
      %1793 = vmatpush.msra.mxu0 0.0
      %1794 = vmatpush.msra.mxu0 0.0
      %1795 = vmatpush.msra.mxu0 %v1778
      %1796 = vmatmul.f32.gmra.mxu0 %v368
      %v1797 = vpop.f32.mrf.mxu0
      %v1798 = vadd.f32 0.0, %v1797
      %1799 = vmatmul.f32.gmra.mxu0 %v370
      %v1800 = vpop.f32.mrf.mxu0
      %v1801 = vadd.f32 0.0, %v1800
      %1802 = vmatmul.f32.gmra.mxu0 %v372
      %v1803 = vpop.f32.mrf.mxu0
      %v1804 = vadd.f32 0.0, %v1803
      %1805 = vmatmul.f32.gmra.mxu0 %v374
      %v1806 = vpop.f32.mrf.mxu0
      %v1807 = vadd.f32 0.0, %v1806
      %1808 = vmatmul.f32.gmra.mxu0 %v376
      %v1809 = vpop.f32.mrf.mxu0
      %v1810 = vadd.f32 0.0, %v1809
      %1811 = vmatmul.f32.gmra.mxu0 %v378
      %v1812 = vpop.f32.mrf.mxu0
      %v1813 = vadd.f32 0.0, %v1812
      %1814 = vmatmul.f32.gmra.mxu0 %v380
      %v1815 = vpop.f32.mrf.mxu0
      %v1816 = vadd.f32 0.0, %v1815
      %1817 = vmatmul.f32.gmra.mxu0 %v382
      %v1818 = vpop.f32.mrf.mxu0
      %v1819 = vadd.f32 0.0, %v1818
      %1820 = vmatmul.f32.gmra.mxu0 %v384
      %v1821 = vpop.f32.mrf.mxu0
      %v1822 = vadd.f32 0.0, %v1821
      %1823 = vmatmul.f32.gmra.mxu0 %v386
      %v1824 = vpop.f32.mrf.mxu0
      %v1825 = vadd.f32 0.0, %v1824
      %1826 = vmatmul.f32.gmra.mxu0 %v388
      %v1827 = vpop.f32.mrf.mxu0
      %v1828 = vadd.f32 0.0, %v1827
      %1829 = vmatmul.f32.gmra.mxu0 %v390
      %v1830 = vpop.f32.mrf.mxu0
      %v1831 = vadd.f32 0.0, %v1830
      %1832 = vmatmul.f32.gmra.mxu0 %v392
      %v1833 = vpop.f32.mrf.mxu0
      %v1834 = vadd.f32 0.0, %v1833
      %1835 = vmatmul.f32.gmra.mxu0 %v394
      %v1836 = vpop.f32.mrf.mxu0
      %v1837 = vadd.f32 0.0, %v1836
      %1838 = vmatmul.f32.gmra.mxu0 %v396
      %v1839 = vpop.f32.mrf.mxu0
      %v1840 = vadd.f32 0.0, %v1839
      %1841 = vmatmul.f32.gmra.mxu0 %v398
      %v1842 = vpop.f32.mrf.mxu0
      %v1843 = vadd.f32 0.0, %v1842
      %1844 = vmatmul.f32.gmra.mxu0 %v400
      %v1845 = vpop.f32.mrf.mxu0
      %v1846 = vadd.f32 0.0, %v1845
      %1847 = vmatmul.f32.gmra.mxu0 %v402
      %v1848 = vpop.f32.mrf.mxu0
      %v1849 = vadd.f32 0.0, %v1848
      %1850 = vmatmul.f32.gmra.mxu0 %v404
      %v1851 = vpop.f32.mrf.mxu0
      %v1852 = vadd.f32 0.0, %v1851
      %1853 = vmatmul.f32.gmra.mxu0 %v406
      %v1854 = vpop.f32.mrf.mxu0
      %v1855 = vadd.f32 0.0, %v1854
      %1856 = vmatmul.f32.gmra.mxu0 %v408
      %v1857 = vpop.f32.mrf.mxu0
      %v1858 = vadd.f32 0.0, %v1857
      %1859 = vmatmul.f32.gmra.mxu0 %v410
      %v1860 = vpop.f32.mrf.mxu0
      %v1861 = vadd.f32 0.0, %v1860
      %1862 = vmatmul.f32.gmra.mxu0 %v412
      %v1863 = vpop.f32.mrf.mxu0
      %v1864 = vadd.f32 0.0, %v1863
      %1865 = vmatmul.f32.gmra.mxu0 %v414
      %v1866 = vpop.f32.mrf.mxu0
      %v1867 = vadd.f32 0.0, %v1866
      %1868 = vmatmul.f32.gmra.mxu0 %v416
      %v1869 = vpop.f32.mrf.mxu0
      %v1870 = vadd.f32 0.0, %v1869
      %1871 = vmatmul.f32.gmra.mxu0 %v418
      %v1872 = vpop.f32.mrf.mxu0
      %v1873 = vadd.f32 0.0, %v1872
      %1874 = vmatmul.f32.gmra.mxu0 %v420
      %v1875 = vpop.f32.mrf.mxu0
      %v1876 = vadd.f32 0.0, %v1875
      %1877 = vmatmul.f32.gmra.mxu0 %v422
      %v1878 = vpop.f32.mrf.mxu0
      %v1879 = vadd.f32 0.0, %v1878
      %1880 = vmatmul.f32.gmra.mxu0 %v424
      %v1881 = vpop.f32.mrf.mxu0
      %v1882 = vadd.f32 0.0, %v1881
      %1883 = vmatmul.f32.gmra.mxu0 %v426
      %v1884 = vpop.f32.mrf.mxu0
      %v1885 = vadd.f32 0.0, %v1884
      %1886 = vmatmul.f32.gmra.mxu0 %v1773
      %v1887 = vpop.f32.mrf.mxu0
      %v1888 = vadd.f32 0.0, %v1887
      %1889 = vmatmul.f32.gmra.mxu0 %v1775
      %v1890 = vpop.f32.mrf.mxu0
      %v1891 = vadd.f32 0.0, %v1890
      %1892 = vdwg.mxu0
      %v1893 = vadd.f32 %v1733, %v1798
      %v1894 = vadd.f32 %v1734, %v1801
      %v1895 = vadd.f32 %v1735, %v1804
      %v1896 = vadd.f32 %v1736, %v1807
      %v1897 = vadd.f32 %v1737, %v1810
      %v1898 = vadd.f32 %v1738, %v1813
      %v1899 = vadd.f32 %v1739, %v1816
      %v1900 = vadd.f32 %v1740, %v1819
      %v1901 = vadd.f32 %v1741, %v1822
      %v1902 = vadd.f32 %v1742, %v1825
      %v1903 = vadd.f32 %v1743, %v1828
      %v1904 = vadd.f32 %v1744, %v1831
      %v1905 = vadd.f32 %v1745, %v1834
      %v1906 = vadd.f32 %v1746, %v1837
      %v1907 = vadd.f32 %v1747, %v1840
      %v1908 = vadd.f32 %v1748, %v1843
      %v1909 = vadd.f32 %v1749, %v1846
      %v1910 = vadd.f32 %v1750, %v1849
      %v1911 = vadd.f32 %v1751, %v1852
      %v1912 = vadd.f32 %v1752, %v1855
      %v1913 = vadd.f32 %v1753, %v1858
      %v1914 = vadd.f32 %v1754, %v1861
      %v1915 = vadd.f32 %v1755, %v1864
      %v1916 = vadd.f32 %v1756, %v1867
      %v1917 = vadd.f32 %v1757, %v1870
      %v1918 = vadd.f32 %v1758, %v1873
      %v1919 = vadd.f32 %v1759, %v1876
      %v1920 = vadd.f32 %v1760, %v1879
      %v1921 = vadd.f32 %v1761, %v1882
      %v1922 = vadd.f32 %v1762, %v1885
      %v1923 = vadd.f32 %v1763, %v1888
      %v1924 = vadd.f32 %v1764, %v1891
      %v1925 = vrot.slane %v219, 2
      %v1926 = vrot.slane %v220, 2
      %v1927 = vsel %vm725, %v1925, %v1926
      %v1928 = vrot.slane %v221, 2
      %v1929 = vsel %vm725, %v1926, %v1928
      %s1930 = scalar_lea.vmem %s1, 28
      %v1931 = vld [vmem:[%s1930] sm:$0xf]
      %v1932 = vsel %vm363, %v1927, 0
      %v1934 = vsel %vm363, %v1929, 0
      %v1937 = vsel %vm428, %v1931, 0
      %1939 = vmatpush.msra.mxu0 0.0
      %1940 = vmatpush.msra.mxu0 0.0
      %1941 = vmatpush.msra.mxu0 0.0
      %1942 = vmatpush.msra.mxu0 0.0
      %1943 = vmatpush.msra.mxu0 0.0
      %1944 = vmatpush.msra.mxu0 0.0
      %1945 = vmatpush.msra.mxu0 0.0
      %1946 = vmatpush.msra.mxu0 0.0
      %1947 = vmatpush.msra.mxu0 0.0
      %1948 = vmatpush.msra.mxu0 0.0
      %1949 = vmatpush.msra.mxu0 0.0
      %1950 = vmatpush.msra.mxu0 0.0
      %1951 = vmatpush.msra.mxu0 0.0
      %1952 = vmatpush.msra.mxu0 0.0
      %1953 = vmatpush.msra.mxu0 0.0
      %1954 = vmatpush.msra.mxu0 %v1937
      %1955 = vmatmul.f32.gmra.mxu0 %v812
      %v1956 = vpop.f32.mrf.mxu0
      %v1957 = vadd.f32 0.0, %v1956
      %1958 = vmatmul.f32.gmra.mxu0 %v814
      %v1959 = vpop.f32.mrf.mxu0
      %v1960 = vadd.f32 0.0, %v1959
      %1961 = vmatmul.f32.gmra.mxu0 %v816
      %v1962 = vpop.f32.mrf.mxu0
      %v1963 = vadd.f32 0.0, %v1962
      %1964 = vmatmul.f32.gmra.mxu0 %v818
      %v1965 = vpop.f32.mrf.mxu0
      %v1966 = vadd.f32 0.0, %v1965
      %1967 = vmatmul.f32.gmra.mxu0 %v820
      %v1968 = vpop.f32.mrf.mxu0
      %v1969 = vadd.f32 0.0, %v1968
      %1970 = vmatmul.f32.gmra.mxu0 %v822
      %v1971 = vpop.f32.mrf.mxu0
      %v1972 = vadd.f32 0.0, %v1971
      %1973 = vmatmul.f32.gmra.mxu0 %v824
      %v1974 = vpop.f32.mrf.mxu0
      %v1975 = vadd.f32 0.0, %v1974
      %1976 = vmatmul.f32.gmra.mxu0 %v826
      %v1977 = vpop.f32.mrf.mxu0
      %v1978 = vadd.f32 0.0, %v1977
      %1979 = vmatmul.f32.gmra.mxu0 %v828
      %v1980 = vpop.f32.mrf.mxu0
      %v1981 = vadd.f32 0.0, %v1980
      %1982 = vmatmul.f32.gmra.mxu0 %v830
      %v1983 = vpop.f32.mrf.mxu0
      %v1984 = vadd.f32 0.0, %v1983
      %1985 = vmatmul.f32.gmra.mxu0 %v832
      %v1986 = vpop.f32.mrf.mxu0
      %v1987 = vadd.f32 0.0, %v1986
      %1988 = vmatmul.f32.gmra.mxu0 %v834
      %v1989 = vpop.f32.mrf.mxu0
      %v1990 = vadd.f32 0.0, %v1989
      %1991 = vmatmul.f32.gmra.mxu0 %v836
      %v1992 = vpop.f32.mrf.mxu0
      %v1993 = vadd.f32 0.0, %v1992
      %1994 = vmatmul.f32.gmra.mxu0 %v838
      %v1995 = vpop.f32.mrf.mxu0
      %v1996 = vadd.f32 0.0, %v1995
      %1997 = vmatmul.f32.gmra.mxu0 %v840
      %v1998 = vpop.f32.mrf.mxu0
      %v1999 = vadd.f32 0.0, %v1998
      %2000 = vmatmul.f32.gmra.mxu0 %v842
      %v2001 = vpop.f32.mrf.mxu0
      %v2002 = vadd.f32 0.0, %v2001
      %2003 = vmatmul.f32.gmra.mxu0 %v844
      %v2004 = vpop.f32.mrf.mxu0
      %v2005 = vadd.f32 0.0, %v2004
      %2006 = vmatmul.f32.gmra.mxu0 %v846
      %v2007 = vpop.f32.mrf.mxu0
      %v2008 = vadd.f32 0.0, %v2007
      %2009 = vmatmul.f32.gmra.mxu0 %v848
      %v2010 = vpop.f32.mrf.mxu0
      %v2011 = vadd.f32 0.0, %v2010
      %2012 = vmatmul.f32.gmra.mxu0 %v850
      %v2013 = vpop.f32.mrf.mxu0
      %v2014 = vadd.f32 0.0, %v2013
      %2015 = vmatmul.f32.gmra.mxu0 %v852
      %v2016 = vpop.f32.mrf.mxu0
      %v2017 = vadd.f32 0.0, %v2016
      %2018 = vmatmul.f32.gmra.mxu0 %v854
      %v2019 = vpop.f32.mrf.mxu0
      %v2020 = vadd.f32 0.0, %v2019
      %2021 = vmatmul.f32.gmra.mxu0 %v856
      %v2022 = vpop.f32.mrf.mxu0
      %v2023 = vadd.f32 0.0, %v2022
      %2024 = vmatmul.f32.gmra.mxu0 %v858
      %v2025 = vpop.f32.mrf.mxu0
      %v2026 = vadd.f32 0.0, %v2025
      %2027 = vmatmul.f32.gmra.mxu0 %v860
      %v2028 = vpop.f32.mrf.mxu0
      %v2029 = vadd.f32 0.0, %v2028
      %2030 = vmatmul.f32.gmra.mxu0 %v862
      %v2031 = vpop.f32.mrf.mxu0
      %v2032 = vadd.f32 0.0, %v2031
      %2033 = vmatmul.f32.gmra.mxu0 %v864
      %v2034 = vpop.f32.mrf.mxu0
      %v2035 = vadd.f32 0.0, %v2034
      %2036 = vmatmul.f32.gmra.mxu0 %v866
      %v2037 = vpop.f32.mrf.mxu0
      %v2038 = vadd.f32 0.0, %v2037
      %2039 = vmatmul.f32.gmra.mxu0 %v868
      %v2040 = vpop.f32.mrf.mxu0
      %v2041 = vadd.f32 0.0, %v2040
      %2042 = vmatmul.f32.gmra.mxu0 %v870
      %v2043 = vpop.f32.mrf.mxu0
      %v2044 = vadd.f32 0.0, %v2043
      %2045 = vmatmul.f32.gmra.mxu0 %v1932
      %v2046 = vpop.f32.mrf.mxu0
      %v2047 = vadd.f32 0.0, %v2046
      %2048 = vmatmul.f32.gmra.mxu0 %v1934
      %v2049 = vpop.f32.mrf.mxu0
      %v2050 = vadd.f32 0.0, %v2049
      %2051 = vdwg.mxu0
      %v2052 = vadd.f32 %v1893, %v1957
      %v2053 = vadd.f32 %v1894, %v1960
      %v2054 = vadd.f32 %v1895, %v1963
      %v2055 = vadd.f32 %v1896, %v1966
      %v2056 = vadd.f32 %v1897, %v1969
      %v2057 = vadd.f32 %v1898, %v1972
      %v2058 = vadd.f32 %v1899, %v1975
      %v2059 = vadd.f32 %v1900, %v1978
      %v2060 = vadd.f32 %v1901, %v1981
      %v2061 = vadd.f32 %v1902, %v1984
      %v2062 = vadd.f32 %v1903, %v1987
      %v2063 = vadd.f32 %v1904, %v1990
      %v2064 = vadd.f32 %v1905, %v1993
      %v2065 = vadd.f32 %v1906, %v1996
      %v2066 = vadd.f32 %v1907, %v1999
      %v2067 = vadd.f32 %v1908, %v2002
      %v2068 = vadd.f32 %v1909, %v2005
      %v2069 = vadd.f32 %v1910, %v2008
      %v2070 = vadd.f32 %v1911, %v2011
      %v2071 = vadd.f32 %v1912, %v2014
      %v2072 = vadd.f32 %v1913, %v2017
      %v2073 = vadd.f32 %v1914, %v2020
      %v2074 = vadd.f32 %v1915, %v2023
      %v2075 = vadd.f32 %v1916, %v2026
      %v2076 = vadd.f32 %v1917, %v2029
      %v2077 = vadd.f32 %v1918, %v2032
      %v2078 = vadd.f32 %v1919, %v2035
      %v2079 = vadd.f32 %v1920, %v2038
      %v2080 = vadd.f32 %v1921, %v2041
      %v2081 = vadd.f32 %v1922, %v2044
      %v2082 = vadd.f32 %v1923, %v2047
      %v2083 = vadd.f32 %v1924, %v2050
      %v2084 = vrot.slane %v219, 3
      %v2085 = vrot.slane %v220, 3
      %v2086 = vsel %vm1020, %v2084, %v2085
      %v2087 = vrot.slane %v221, 3
      %v2088 = vsel %vm1020, %v2085, %v2087
      %s2089 = scalar_lea.vmem %s1, 32
      %v2090 = vld [vmem:[%s2089] sm:$0xf]
      %v2091 = vsel %vm363, %v2086, 0
      %v2093 = vsel %vm363, %v2088, 0
      %v2096 = vsel %vm428, %v2090, 0
      %2098 = vmatpush.msra.mxu0 0.0
      %2099 = vmatpush.msra.mxu0 0.0
      %2100 = vmatpush.msra.mxu0 0.0
      %2101 = vmatpush.msra.mxu0 0.0
      %2102 = vmatpush.msra.mxu0 0.0
      %2103 = vmatpush.msra.mxu0 0.0
      %2104 = vmatpush.msra.mxu0 0.0
      %2105 = vmatpush.msra.mxu0 0.0
      %2106 = vmatpush.msra.mxu0 0.0
      %2107 = vmatpush.msra.mxu0 0.0
      %2108 = vmatpush.msra.mxu0 0.0
      %2109 = vmatpush.msra.mxu0 0.0
      %2110 = vmatpush.msra.mxu0 0.0
      %2111 = vmatpush.msra.mxu0 0.0
      %2112 = vmatpush.msra.mxu0 0.0
      %2113 = vmatpush.msra.mxu0 %v2096
      %2114 = vmatmul.f32.gmra.mxu0 %v1107
      %v2115 = vpop.f32.mrf.mxu0
      %v2116 = vadd.f32 0.0, %v2115
      %2117 = vmatmul.f32.gmra.mxu0 %v1109
      %v2118 = vpop.f32.mrf.mxu0
      %v2119 = vadd.f32 0.0, %v2118
      %2120 = vmatmul.f32.gmra.mxu0 %v1111
      %v2121 = vpop.f32.mrf.mxu0
      %v2122 = vadd.f32 0.0, %v2121
      %2123 = vmatmul.f32.gmra.mxu0 %v1113
      %v2124 = vpop.f32.mrf.mxu0
      %v2125 = vadd.f32 0.0, %v2124
      %2126 = vmatmul.f32.gmra.mxu0 %v1115
      %v2127 = vpop.f32.mrf.mxu0
      %v2128 = vadd.f32 0.0, %v2127
      %2129 = vmatmul.f32.gmra.mxu0 %v1117
      %v2130 = vpop.f32.mrf.mxu0
      %v2131 = vadd.f32 0.0, %v2130
      %2132 = vmatmul.f32.gmra.mxu0 %v1119
      %v2133 = vpop.f32.mrf.mxu0
      %v2134 = vadd.f32 0.0, %v2133
      %2135 = vmatmul.f32.gmra.mxu0 %v1121
      %v2136 = vpop.f32.mrf.mxu0
      %v2137 = vadd.f32 0.0, %v2136
      %2138 = vmatmul.f32.gmra.mxu0 %v1123
      %v2139 = vpop.f32.mrf.mxu0
      %v2140 = vadd.f32 0.0, %v2139
      %2141 = vmatmul.f32.gmra.mxu0 %v1125
      %v2142 = vpop.f32.mrf.mxu0
      %v2143 = vadd.f32 0.0, %v2142
      %2144 = vmatmul.f32.gmra.mxu0 %v1127
      %v2145 = vpop.f32.mrf.mxu0
      %v2146 = vadd.f32 0.0, %v2145
      %2147 = vmatmul.f32.gmra.mxu0 %v1129
      %v2148 = vpop.f32.mrf.mxu0
      %v2149 = vadd.f32 0.0, %v2148
      %2150 = vmatmul.f32.gmra.mxu0 %v1131
      %v2151 = vpop.f32.mrf.mxu0
      %v2152 = vadd.f32 0.0, %v2151
      %2153 = vmatmul.f32.gmra.mxu0 %v1133
      %v2154 = vpop.f32.mrf.mxu0
      %v2155 = vadd.f32 0.0, %v2154
      %2156 = vmatmul.f32.gmra.mxu0 %v1135
      %v2157 = vpop.f32.mrf.mxu0
      %v2158 = vadd.f32 0.0, %v2157
      %2159 = vmatmul.f32.gmra.mxu0 %v1137
      %v2160 = vpop.f32.mrf.mxu0
      %v2161 = vadd.f32 0.0, %v2160
      %2162 = vmatmul.f32.gmra.mxu0 %v1139
      %v2163 = vpop.f32.mrf.mxu0
      %v2164 = vadd.f32 0.0, %v2163
      %2165 = vmatmul.f32.gmra.mxu0 %v1141
      %v2166 = vpop.f32.mrf.mxu0
      %v2167 = vadd.f32 0.0, %v2166
      %2168 = vmatmul.f32.gmra.mxu0 %v1143
      %v2169 = vpop.f32.mrf.mxu0
      %v2170 = vadd.f32 0.0, %v2169
      %2171 = vmatmul.f32.gmra.mxu0 %v1145
      %v2172 = vpop.f32.mrf.mxu0
      %v2173 = vadd.f32 0.0, %v2172
      %2174 = vmatmul.f32.gmra.mxu0 %v1147
      %v2175 = vpop.f32.mrf.mxu0
      %v2176 = vadd.f32 0.0, %v2175
      %2177 = vmatmul.f32.gmra.mxu0 %v1149
      %v2178 = vpop.f32.mrf.mxu0
      %v2179 = vadd.f32 0.0, %v2178
      %2180 = vmatmul.f32.gmra.mxu0 %v1151
      %v2181 = vpop.f32.mrf.mxu0
      %v2182 = vadd.f32 0.0, %v2181
      %2183 = vmatmul.f32.gmra.mxu0 %v1153
      %v2184 = vpop.f32.mrf.mxu0
      %v2185 = vadd.f32 0.0, %v2184
      %2186 = vmatmul.f32.gmra.mxu0 %v1155
      %v2187 = vpop.f32.mrf.mxu0
      %v2188 = vadd.f32 0.0, %v2187
      %2189 = vmatmul.f32.gmra.mxu0 %v1157
      %v2190 = vpop.f32.mrf.mxu0
      %v2191 = vadd.f32 0.0, %v2190
      %2192 = vmatmul.f32.gmra.mxu0 %v1159
      %v2193 = vpop.f32.mrf.mxu0
      %v2194 = vadd.f32 0.0, %v2193
      %2195 = vmatmul.f32.gmra.mxu0 %v1161
      %v2196 = vpop.f32.mrf.mxu0
      %v2197 = vadd.f32 0.0, %v2196
      %2198 = vmatmul.f32.gmra.mxu0 %v1163
      %v2199 = vpop.f32.mrf.mxu0
      %v2200 = vadd.f32 0.0, %v2199
      %2201 = vmatmul.f32.gmra.mxu0 %v1165
      %v2202 = vpop.f32.mrf.mxu0
      %v2203 = vadd.f32 0.0, %v2202
      %2204 = vmatmul.f32.gmra.mxu0 %v2091
      %v2205 = vpop.f32.mrf.mxu0
      %v2206 = vadd.f32 0.0, %v2205
      %2207 = vmatmul.f32.gmra.mxu0 %v2093
      %v2208 = vpop.f32.mrf.mxu0
      %v2209 = vadd.f32 0.0, %v2208
      %2210 = vdwg.mxu0
      %v2211 = vadd.f32 %v2052, %v2116
      %v2212 = vadd.f32 %v2053, %v2119
      %v2213 = vadd.f32 %v2054, %v2122
      %v2214 = vadd.f32 %v2055, %v2125
      %v2215 = vadd.f32 %v2056, %v2128
      %v2216 = vadd.f32 %v2057, %v2131
      %v2217 = vadd.f32 %v2058, %v2134
      %v2218 = vadd.f32 %v2059, %v2137
      %v2219 = vadd.f32 %v2060, %v2140
      %v2220 = vadd.f32 %v2061, %v2143
      %v2221 = vadd.f32 %v2062, %v2146
      %v2222 = vadd.f32 %v2063, %v2149
      %v2223 = vadd.f32 %v2064, %v2152
      %v2224 = vadd.f32 %v2065, %v2155
      %v2225 = vadd.f32 %v2066, %v2158
      %v2226 = vadd.f32 %v2067, %v2161
      %v2227 = vadd.f32 %v2068, %v2164
      %v2228 = vadd.f32 %v2069, %v2167
      %v2229 = vadd.f32 %v2070, %v2170
      %v2230 = vadd.f32 %v2071, %v2173
      %v2231 = vadd.f32 %v2072, %v2176
      %v2232 = vadd.f32 %v2073, %v2179
      %v2233 = vadd.f32 %v2074, %v2182
      %v2234 = vadd.f32 %v2075, %v2185
      %v2235 = vadd.f32 %v2076, %v2188
      %v2236 = vadd.f32 %v2077, %v2191
      %v2237 = vadd.f32 %v2078, %v2194
      %v2238 = vadd.f32 %v2079, %v2197
      %v2239 = vadd.f32 %v2080, %v2200
      %v2240 = vadd.f32 %v2081, %v2203
      %v2241 = vadd.f32 %v2082, %v2206
      %v2242 = vadd.f32 %v2083, %v2209
      %v2243 = vrot.slane %v219, 4
      %v2244 = vrot.slane %v220, 4
      %v2245 = vsel %vm428, %v2243, %v2244
      %v2246 = vrot.slane %v221, 4
      %v2247 = vsel %vm428, %v2244, %v2246
      %s2248 = scalar_lea.vmem %s1, 36
      %v2249 = vld [vmem:[%s2248] sm:$0xf]
      %v2250 = vsel %vm363, %v2245, 0
      %v2252 = vsel %vm363, %v2247, 0
      %v2255 = vsel %vm428, %v2249, 0
      %2257 = vmatpush.msra.mxu0 0.0
      %2258 = vmatpush.msra.mxu0 0.0
      %2259 = vmatpush.msra.mxu0 0.0
      %2260 = vmatpush.msra.mxu0 0.0
      %2261 = vmatpush.msra.mxu0 0.0
      %2262 = vmatpush.msra.mxu0 0.0
      %2263 = vmatpush.msra.mxu0 0.0
      %2264 = vmatpush.msra.mxu0 0.0
      %2265 = vmatpush.msra.mxu0 0.0
      %2266 = vmatpush.msra.mxu0 0.0
      %2267 = vmatpush.msra.mxu0 0.0
      %2268 = vmatpush.msra.mxu0 0.0
      %2269 = vmatpush.msra.mxu0 0.0
      %2270 = vmatpush.msra.mxu0 0.0
      %2271 = vmatpush.msra.mxu0 0.0
      %2272 = vmatpush.msra.mxu0 %v2255
      %2273 = vmatmul.f32.gmra.mxu0 %v1401
      %v2274 = vpop.f32.mrf.mxu0
      %v2275 = vadd.f32 0.0, %v2274
      %2276 = vmatmul.f32.gmra.mxu0 %v1403
      %v2277 = vpop.f32.mrf.mxu0
      %v2278 = vadd.f32 0.0, %v2277
      %2279 = vmatmul.f32.gmra.mxu0 %v1405
      %v2280 = vpop.f32.mrf.mxu0
      %v2281 = vadd.f32 0.0, %v2280
      %2282 = vmatmul.f32.gmra.mxu0 %v1407
      %v2283 = vpop.f32.mrf.mxu0
      %v2284 = vadd.f32 0.0, %v2283
      %2285 = vmatmul.f32.gmra.mxu0 %v1409
      %v2286 = vpop.f32.mrf.mxu0
      %v2287 = vadd.f32 0.0, %v2286
      %2288 = vmatmul.f32.gmra.mxu0 %v1411
      %v2289 = vpop.f32.mrf.mxu0
      %v2290 = vadd.f32 0.0, %v2289
      %2291 = vmatmul.f32.gmra.mxu0 %v1413
      %v2292 = vpop.f32.mrf.mxu0
      %v2293 = vadd.f32 0.0, %v2292
      %2294 = vmatmul.f32.gmra.mxu0 %v1415
      %v2295 = vpop.f32.mrf.mxu0
      %v2296 = vadd.f32 0.0, %v2295
      %2297 = vmatmul.f32.gmra.mxu0 %v1417
      %v2298 = vpop.f32.mrf.mxu0
      %v2299 = vadd.f32 0.0, %v2298
      %2300 = vmatmul.f32.gmra.mxu0 %v1419
      %v2301 = vpop.f32.mrf.mxu0
      %v2302 = vadd.f32 0.0, %v2301
      %2303 = vmatmul.f32.gmra.mxu0 %v1421
      %v2304 = vpop.f32.mrf.mxu0
      %v2305 = vadd.f32 0.0, %v2304
      %2306 = vmatmul.f32.gmra.mxu0 %v1423
      %v2307 = vpop.f32.mrf.mxu0
      %v2308 = vadd.f32 0.0, %v2307
      %2309 = vmatmul.f32.gmra.mxu0 %v1425
      %v2310 = vpop.f32.mrf.mxu0
      %v2311 = vadd.f32 0.0, %v2310
      %2312 = vmatmul.f32.gmra.mxu0 %v1427
      %v2313 = vpop.f32.mrf.mxu0
      %v2314 = vadd.f32 0.0, %v2313
      %2315 = vmatmul.f32.gmra.mxu0 %v1429
      %v2316 = vpop.f32.mrf.mxu0
      %v2317 = vadd.f32 0.0, %v2316
      %2318 = vmatmul.f32.gmra.mxu0 %v1431
      %v2319 = vpop.f32.mrf.mxu0
      %v2320 = vadd.f32 0.0, %v2319
      %2321 = vmatmul.f32.gmra.mxu0 %v1433
      %v2322 = vpop.f32.mrf.mxu0
      %v2323 = vadd.f32 0.0, %v2322
      %2324 = vmatmul.f32.gmra.mxu0 %v1435
      %v2325 = vpop.f32.mrf.mxu0
      %v2326 = vadd.f32 0.0, %v2325
      %2327 = vmatmul.f32.gmra.mxu0 %v1437
      %v2328 = vpop.f32.mrf.mxu0
      %v2329 = vadd.f32 0.0, %v2328
      %2330 = vmatmul.f32.gmra.mxu0 %v1439
      %v2331 = vpop.f32.mrf.mxu0
      %v2332 = vadd.f32 0.0, %v2331
      %2333 = vmatmul.f32.gmra.mxu0 %v1441
      %v2334 = vpop.f32.mrf.mxu0
      %v2335 = vadd.f32 0.0, %v2334
      %2336 = vmatmul.f32.gmra.mxu0 %v1443
      %v2337 = vpop.f32.mrf.mxu0
      %v2338 = vadd.f32 0.0, %v2337
      %2339 = vmatmul.f32.gmra.mxu0 %v1445
      %v2340 = vpop.f32.mrf.mxu0
      %v2341 = vadd.f32 0.0, %v2340
      %2342 = vmatmul.f32.gmra.mxu0 %v1447
      %v2343 = vpop.f32.mrf.mxu0
      %v2344 = vadd.f32 0.0, %v2343
      %2345 = vmatmul.f32.gmra.mxu0 %v1449
      %v2346 = vpop.f32.mrf.mxu0
      %v2347 = vadd.f32 0.0, %v2346
      %2348 = vmatmul.f32.gmra.mxu0 %v1451
      %v2349 = vpop.f32.mrf.mxu0
      %v2350 = vadd.f32 0.0, %v2349
      %2351 = vmatmul.f32.gmra.mxu0 %v1453
      %v2352 = vpop.f32.mrf.mxu0
      %v2353 = vadd.f32 0.0, %v2352
      %2354 = vmatmul.f32.gmra.mxu0 %v1455
      %v2355 = vpop.f32.mrf.mxu0
      %v2356 = vadd.f32 0.0, %v2355
      %2357 = vmatmul.f32.gmra.mxu0 %v1457
      %v2358 = vpop.f32.mrf.mxu0
      %v2359 = vadd.f32 0.0, %v2358
      %2360 = vmatmul.f32.gmra.mxu0 %v1459
      %v2361 = vpop.f32.mrf.mxu0
      %v2362 = vadd.f32 0.0, %v2361
      %2363 = vmatmul.f32.gmra.mxu0 %v2250
      %v2364 = vpop.f32.mrf.mxu0
      %v2365 = vadd.f32 0.0, %v2364
      %2366 = vmatmul.f32.gmra.mxu0 %v2252
      %v2367 = vpop.f32.mrf.mxu0
      %v2368 = vadd.f32 0.0, %v2367
      %2369 = vdwg.mxu0
      %v2370 = vadd.f32 %v2211, %v2275
      %v2371 = vadd.f32 %v2212, %v2278
      %v2372 = vadd.f32 %v2213, %v2281
      %v2373 = vadd.f32 %v2214, %v2284
      %v2374 = vadd.f32 %v2215, %v2287
      %v2375 = vadd.f32 %v2216, %v2290
      %v2376 = vadd.f32 %v2217, %v2293
      %v2377 = vadd.f32 %v2218, %v2296
      %v2378 = vadd.f32 %v2219, %v2299
      %v2379 = vadd.f32 %v2220, %v2302
      %v2380 = vadd.f32 %v2221, %v2305
      %v2381 = vadd.f32 %v2222, %v2308
      %v2382 = vadd.f32 %v2223, %v2311
      %v2383 = vadd.f32 %v2224, %v2314
      %v2384 = vadd.f32 %v2225, %v2317
      %v2385 = vadd.f32 %v2226, %v2320
      %v2386 = vadd.f32 %v2227, %v2323
      %v2387 = vadd.f32 %v2228, %v2326
      %v2388 = vadd.f32 %v2229, %v2329
      %v2389 = vadd.f32 %v2230, %v2332
      %v2390 = vadd.f32 %v2231, %v2335
      %v2391 = vadd.f32 %v2232, %v2338
      %v2392 = vadd.f32 %v2233, %v2341
      %v2393 = vadd.f32 %v2234, %v2344
      %v2394 = vadd.f32 %v2235, %v2347
      %v2395 = vadd.f32 %v2236, %v2350
      %v2396 = vadd.f32 %v2237, %v2353
      %v2397 = vadd.f32 %v2238, %v2356
      %v2398 = vadd.f32 %v2239, %v2359
      %v2399 = vadd.f32 %v2240, %v2362
      %v2400 = vadd.f32 %v2241, %v2365
      %v2401 = vadd.f32 %v2242, %v2368
      %s2402 = scalar_lea.vmem %s1, 40
      %v2403 = vld [vmem:[%s2402] sm:$0xf]
      %v2405 = vsel %vm363, %v222, 0
      %v2408 = vsel %vm363, %v223, 0
      %v2411 = vsel %vm428, %v2403, 0
      %2413 = vmatpush.msra.mxu0 0.0
      %2414 = vmatpush.msra.mxu0 0.0
      %2415 = vmatpush.msra.mxu0 0.0
      %2416 = vmatpush.msra.mxu0 0.0
      %2417 = vmatpush.msra.mxu0 0.0
      %2418 = vmatpush.msra.mxu0 0.0
      %2419 = vmatpush.msra.mxu0 0.0
      %2420 = vmatpush.msra.mxu0 0.0
      %2421 = vmatpush.msra.mxu0 0.0
      %2422 = vmatpush.msra.mxu0 0.0
      %2423 = vmatpush.msra.mxu0 0.0
      %2424 = vmatpush.msra.mxu0 0.0
      %2425 = vmatpush.msra.mxu0 0.0
      %2426 = vmatpush.msra.mxu0 0.0
      %2427 = vmatpush.msra.mxu0 0.0
      %2428 = vmatpush.msra.mxu0 %v2411
      %2429 = vmatmul.f32.gmra.mxu0 %v553
      %v2430 = vpop.f32.mrf.mxu0
      %v2431 = vadd.f32 0.0, %v2430
      %2432 = vmatmul.f32.gmra.mxu0 %v555
      %v2433 = vpop.f32.mrf.mxu0
      %v2434 = vadd.f32 0.0, %v2433
      %2435 = vmatmul.f32.gmra.mxu0 %v557
      %v2436 = vpop.f32.mrf.mxu0
      %v2437 = vadd.f32 0.0, %v2436
      %2438 = vmatmul.f32.gmra.mxu0 %v559
      %v2439 = vpop.f32.mrf.mxu0
      %v2440 = vadd.f32 0.0, %v2439
      %2441 = vmatmul.f32.gmra.mxu0 %v561
      %v2442 = vpop.f32.mrf.mxu0
      %v2443 = vadd.f32 0.0, %v2442
      %2444 = vmatmul.f32.gmra.mxu0 %v563
      %v2445 = vpop.f32.mrf.mxu0
      %v2446 = vadd.f32 0.0, %v2445
      %2447 = vmatmul.f32.gmra.mxu0 %v565
      %v2448 = vpop.f32.mrf.mxu0
      %v2449 = vadd.f32 0.0, %v2448
      %2450 = vmatmul.f32.gmra.mxu0 %v567
      %v2451 = vpop.f32.mrf.mxu0
      %v2452 = vadd.f32 0.0, %v2451
      %2453 = vmatmul.f32.gmra.mxu0 %v569
      %v2454 = vpop.f32.mrf.mxu0
      %v2455 = vadd.f32 0.0, %v2454
      %2456 = vmatmul.f32.gmra.mxu0 %v571
      %v2457 = vpop.f32.mrf.mxu0
      %v2458 = vadd.f32 0.0, %v2457
      %2459 = vmatmul.f32.gmra.mxu0 %v573
      %v2460 = vpop.f32.mrf.mxu0
      %v2461 = vadd.f32 0.0, %v2460
      %2462 = vmatmul.f32.gmra.mxu0 %v575
      %v2463 = vpop.f32.mrf.mxu0
      %v2464 = vadd.f32 0.0, %v2463
      %2465 = vmatmul.f32.gmra.mxu0 %v577
      %v2466 = vpop.f32.mrf.mxu0
      %v2467 = vadd.f32 0.0, %v2466
      %2468 = vmatmul.f32.gmra.mxu0 %v579
      %v2469 = vpop.f32.mrf.mxu0
      %v2470 = vadd.f32 0.0, %v2469
      %2471 = vmatmul.f32.gmra.mxu0 %v581
      %v2472 = vpop.f32.mrf.mxu0
      %v2473 = vadd.f32 0.0, %v2472
      %2474 = vmatmul.f32.gmra.mxu0 %v583
      %v2475 = vpop.f32.mrf.mxu0
      %v2476 = vadd.f32 0.0, %v2475
      %2477 = vmatmul.f32.gmra.mxu0 %v585
      %v2478 = vpop.f32.mrf.mxu0
      %v2479 = vadd.f32 0.0, %v2478
      %2480 = vmatmul.f32.gmra.mxu0 %v587
      %v2481 = vpop.f32.mrf.mxu0
      %v2482 = vadd.f32 0.0, %v2481
      %2483 = vmatmul.f32.gmra.mxu0 %v589
      %v2484 = vpop.f32.mrf.mxu0
      %v2485 = vadd.f32 0.0, %v2484
      %2486 = vmatmul.f32.gmra.mxu0 %v591
      %v2487 = vpop.f32.mrf.mxu0
      %v2488 = vadd.f32 0.0, %v2487
      %2489 = vmatmul.f32.gmra.mxu0 %v593
      %v2490 = vpop.f32.mrf.mxu0
      %v2491 = vadd.f32 0.0, %v2490
      %2492 = vmatmul.f32.gmra.mxu0 %v595
      %v2493 = vpop.f32.mrf.mxu0
      %v2494 = vadd.f32 0.0, %v2493
      %2495 = vmatmul.f32.gmra.mxu0 %v597
      %v2496 = vpop.f32.mrf.mxu0
      %v2497 = vadd.f32 0.0, %v2496
      %2498 = vmatmul.f32.gmra.mxu0 %v599
      %v2499 = vpop.f32.mrf.mxu0
      %v2500 = vadd.f32 0.0, %v2499
      %2501 = vmatmul.f32.gmra.mxu0 %v601
      %v2502 = vpop.f32.mrf.mxu0
      %v2503 = vadd.f32 0.0, %v2502
      %2504 = vmatmul.f32.gmra.mxu0 %v603
      %v2505 = vpop.f32.mrf.mxu0
      %v2506 = vadd.f32 0.0, %v2505
      %2507 = vmatmul.f32.gmra.mxu0 %v605
      %v2508 = vpop.f32.mrf.mxu0
      %v2509 = vadd.f32 0.0, %v2508
      %2510 = vmatmul.f32.gmra.mxu0 %v607
      %v2511 = vpop.f32.mrf.mxu0
      %v2512 = vadd.f32 0.0, %v2511
      %2513 = vmatmul.f32.gmra.mxu0 %v1612
      %v2514 = vpop.f32.mrf.mxu0
      %v2515 = vadd.f32 0.0, %v2514
      %2516 = vmatmul.f32.gmra.mxu0 %v1615
      %v2517 = vpop.f32.mrf.mxu0
      %v2518 = vadd.f32 0.0, %v2517
      %2519 = vmatmul.f32.gmra.mxu0 %v2405
      %v2520 = vpop.f32.mrf.mxu0
      %v2521 = vadd.f32 0.0, %v2520
      %2522 = vmatmul.f32.gmra.mxu0 %v2408
      %v2523 = vpop.f32.mrf.mxu0
      %v2524 = vadd.f32 0.0, %v2523
      %2525 = vdwg.mxu0
      %v2526 = vadd.f32 %v2370, %v2431
      %v2527 = vadd.f32 %v2371, %v2434
      %v2528 = vadd.f32 %v2372, %v2437
      %v2529 = vadd.f32 %v2373, %v2440
      %v2530 = vadd.f32 %v2374, %v2443
      %v2531 = vadd.f32 %v2375, %v2446
      %v2532 = vadd.f32 %v2376, %v2449
      %v2533 = vadd.f32 %v2377, %v2452
      %v2534 = vadd.f32 %v2378, %v2455
      %v2535 = vadd.f32 %v2379, %v2458
      %v2536 = vadd.f32 %v2380, %v2461
      %v2537 = vadd.f32 %v2381, %v2464
      %v2538 = vadd.f32 %v2382, %v2467
      %v2539 = vadd.f32 %v2383, %v2470
      %v2540 = vadd.f32 %v2384, %v2473
      %v2541 = vadd.f32 %v2385, %v2476
      %v2542 = vadd.f32 %v2386, %v2479
      %v2543 = vadd.f32 %v2387, %v2482
      %v2544 = vadd.f32 %v2388, %v2485
      %v2545 = vadd.f32 %v2389, %v2488
      %v2546 = vadd.f32 %v2390, %v2491
      %v2547 = vadd.f32 %v2391, %v2494
      %v2548 = vadd.f32 %v2392, %v2497
      %v2549 = vadd.f32 %v2393, %v2500
      %v2550 = vadd.f32 %v2394, %v2503
      %v2551 = vadd.f32 %v2395, %v2506
      %v2552 = vadd.f32 %v2396, %v2509
      %v2553 = vadd.f32 %v2397, %v2512
      %v2554 = vadd.f32 %v2398, %v2515
      %v2555 = vadd.f32 %v2399, %v2518
      %v2556 = vadd.f32 %v2400, %v2521
      %v2557 = vadd.f32 %v2401, %v2524
      %v2559 = vrot.slane %v222, 1
      %v2560 = vrot.slane %v223, 1
      %v2561 = vsel %vm280, %v2559, %v2560
      %v2562 = vrot.slane %v224, 1
      %v2563 = vsel %vm280, %v2560, %v2562
      %s2564 = scalar_lea.vmem %s1, 44
      %v2565 = vld [vmem:[%s2564] sm:$0xf]
      %v2566 = vsel %vm363, %v2561, 0
      %v2568 = vsel %vm363, %v2563, 0
      %v2571 = vsel %vm428, %v2565, 0
      %2573 = vmatpush.msra.mxu0 0.0
      %2574 = vmatpush.msra.mxu0 0.0
      %2575 = vmatpush.msra.mxu0 0.0
      %2576 = vmatpush.msra.mxu0 0.0
      %2577 = vmatpush.msra.mxu0 0.0
      %2578 = vmatpush.msra.mxu0 0.0
      %2579 = vmatpush.msra.mxu0 0.0
      %2580 = vmatpush.msra.mxu0 0.0
      %2581 = vmatpush.msra.mxu0 0.0
      %2582 = vmatpush.msra.mxu0 0.0
      %2583 = vmatpush.msra.mxu0 0.0
      %2584 = vmatpush.msra.mxu0 0.0
      %2585 = vmatpush.msra.mxu0 0.0
      %2586 = vmatpush.msra.mxu0 0.0
      %2587 = vmatpush.msra.mxu0 0.0
      %2588 = vmatpush.msra.mxu0 %v2571
      %2589 = vmatmul.f32.gmra.mxu0 %v372
      %v2590 = vpop.f32.mrf.mxu0
      %v2591 = vadd.f32 0.0, %v2590
      %2592 = vmatmul.f32.gmra.mxu0 %v374
      %v2593 = vpop.f32.mrf.mxu0
      %v2594 = vadd.f32 0.0, %v2593
      %2595 = vmatmul.f32.gmra.mxu0 %v376
      %v2596 = vpop.f32.mrf.mxu0
      %v2597 = vadd.f32 0.0, %v2596
      %2598 = vmatmul.f32.gmra.mxu0 %v378
      %v2599 = vpop.f32.mrf.mxu0
      %v2600 = vadd.f32 0.0, %v2599
      %2601 = vmatmul.f32.gmra.mxu0 %v380
      %v2602 = vpop.f32.mrf.mxu0
      %v2603 = vadd.f32 0.0, %v2602
      %2604 = vmatmul.f32.gmra.mxu0 %v382
      %v2605 = vpop.f32.mrf.mxu0
      %v2606 = vadd.f32 0.0, %v2605
      %2607 = vmatmul.f32.gmra.mxu0 %v384
      %v2608 = vpop.f32.mrf.mxu0
      %v2609 = vadd.f32 0.0, %v2608
      %2610 = vmatmul.f32.gmra.mxu0 %v386
      %v2611 = vpop.f32.mrf.mxu0
      %v2612 = vadd.f32 0.0, %v2611
      %2613 = vmatmul.f32.gmra.mxu0 %v388
      %v2614 = vpop.f32.mrf.mxu0
      %v2615 = vadd.f32 0.0, %v2614
      %2616 = vmatmul.f32.gmra.mxu0 %v390
      %v2617 = vpop.f32.mrf.mxu0
      %v2618 = vadd.f32 0.0, %v2617
      %2619 = vmatmul.f32.gmra.mxu0 %v392
      %v2620 = vpop.f32.mrf.mxu0
      %v2621 = vadd.f32 0.0, %v2620
      %2622 = vmatmul.f32.gmra.mxu0 %v394
      %v2623 = vpop.f32.mrf.mxu0
      %v2624 = vadd.f32 0.0, %v2623
      %2625 = vmatmul.f32.gmra.mxu0 %v396
      %v2626 = vpop.f32.mrf.mxu0
      %v2627 = vadd.f32 0.0, %v2626
      %2628 = vmatmul.f32.gmra.mxu0 %v398
      %v2629 = vpop.f32.mrf.mxu0
      %v2630 = vadd.f32 0.0, %v2629
      %2631 = vmatmul.f32.gmra.mxu0 %v400
      %v2632 = vpop.f32.mrf.mxu0
      %v2633 = vadd.f32 0.0, %v2632
      %2634 = vmatmul.f32.gmra.mxu0 %v402
      %v2635 = vpop.f32.mrf.mxu0
      %v2636 = vadd.f32 0.0, %v2635
      %2637 = vmatmul.f32.gmra.mxu0 %v404
      %v2638 = vpop.f32.mrf.mxu0
      %v2639 = vadd.f32 0.0, %v2638
      %2640 = vmatmul.f32.gmra.mxu0 %v406
      %v2641 = vpop.f32.mrf.mxu0
      %v2642 = vadd.f32 0.0, %v2641
      %2643 = vmatmul.f32.gmra.mxu0 %v408
      %v2644 = vpop.f32.mrf.mxu0
      %v2645 = vadd.f32 0.0, %v2644
      %2646 = vmatmul.f32.gmra.mxu0 %v410
      %v2647 = vpop.f32.mrf.mxu0
      %v2648 = vadd.f32 0.0, %v2647
      %2649 = vmatmul.f32.gmra.mxu0 %v412
      %v2650 = vpop.f32.mrf.mxu0
      %v2651 = vadd.f32 0.0, %v2650
      %2652 = vmatmul.f32.gmra.mxu0 %v414
      %v2653 = vpop.f32.mrf.mxu0
      %v2654 = vadd.f32 0.0, %v2653
      %2655 = vmatmul.f32.gmra.mxu0 %v416
      %v2656 = vpop.f32.mrf.mxu0
      %v2657 = vadd.f32 0.0, %v2656
      %2658 = vmatmul.f32.gmra.mxu0 %v418
      %v2659 = vpop.f32.mrf.mxu0
      %v2660 = vadd.f32 0.0, %v2659
      %2661 = vmatmul.f32.gmra.mxu0 %v420
      %v2662 = vpop.f32.mrf.mxu0
      %v2663 = vadd.f32 0.0, %v2662
      %2664 = vmatmul.f32.gmra.mxu0 %v422
      %v2665 = vpop.f32.mrf.mxu0
      %v2666 = vadd.f32 0.0, %v2665
      %2667 = vmatmul.f32.gmra.mxu0 %v424
      %v2668 = vpop.f32.mrf.mxu0
      %v2669 = vadd.f32 0.0, %v2668
      %2670 = vmatmul.f32.gmra.mxu0 %v426
      %v2671 = vpop.f32.mrf.mxu0
      %v2672 = vadd.f32 0.0, %v2671
      %2673 = vmatmul.f32.gmra.mxu0 %v1773
      %v2674 = vpop.f32.mrf.mxu0
      %v2675 = vadd.f32 0.0, %v2674
      %2676 = vmatmul.f32.gmra.mxu0 %v1775
      %v2677 = vpop.f32.mrf.mxu0
      %v2678 = vadd.f32 0.0, %v2677
      %2679 = vmatmul.f32.gmra.mxu0 %v2566
      %v2680 = vpop.f32.mrf.mxu0
      %v2681 = vadd.f32 0.0, %v2680
      %2682 = vmatmul.f32.gmra.mxu0 %v2568
      %v2683 = vpop.f32.mrf.mxu0
      %v2684 = vadd.f32 0.0, %v2683
      %2685 = vdwg.mxu0
      %v2686 = vadd.f32 %v2526, %v2591
      %v2687 = vadd.f32 %v2527, %v2594
      %v2688 = vadd.f32 %v2528, %v2597
      %v2689 = vadd.f32 %v2529, %v2600
      %v2690 = vadd.f32 %v2530, %v2603
      %v2691 = vadd.f32 %v2531, %v2606
      %v2692 = vadd.f32 %v2532, %v2609
      %v2693 = vadd.f32 %v2533, %v2612
      %v2694 = vadd.f32 %v2534, %v2615
      %v2695 = vadd.f32 %v2535, %v2618
      %v2696 = vadd.f32 %v2536, %v2621
      %v2697 = vadd.f32 %v2537, %v2624
      %v2698 = vadd.f32 %v2538, %v2627
      %v2699 = vadd.f32 %v2539, %v2630
      %v2700 = vadd.f32 %v2540, %v2633
      %v2701 = vadd.f32 %v2541, %v2636
      %v2702 = vadd.f32 %v2542, %v2639
      %v2703 = vadd.f32 %v2543, %v2642
      %v2704 = vadd.f32 %v2544, %v2645
      %v2705 = vadd.f32 %v2545, %v2648
      %v2706 = vadd.f32 %v2546, %v2651
      %v2707 = vadd.f32 %v2547, %v2654
      %v2708 = vadd.f32 %v2548, %v2657
      %v2709 = vadd.f32 %v2549, %v2660
      %v2710 = vadd.f32 %v2550, %v2663
      %v2711 = vadd.f32 %v2551, %v2666
      %v2712 = vadd.f32 %v2552, %v2669
      %v2713 = vadd.f32 %v2553, %v2672
      %v2714 = vadd.f32 %v2554, %v2675
      %v2715 = vadd.f32 %v2555, %v2678
      %v2716 = vadd.f32 %v2556, %v2681
      %v2717 = vadd.f32 %v2557, %v2684
      %v2718 = vrot.slane %v222, 2
      %v2719 = vrot.slane %v223, 2
      %v2720 = vsel %vm725, %v2718, %v2719
      %v2721 = vrot.slane %v224, 2
      %v2722 = vsel %vm725, %v2719, %v2721
      %s2723 = scalar_lea.vmem %s1, 48
      %v2724 = vld [vmem:[%s2723] sm:$0xf]
      %v2725 = vsel %vm363, %v2720, 0
      %v2727 = vsel %vm363, %v2722, 0
      %v2730 = vsel %vm428, %v2724, 0
      %2732 = vmatpush.msra.mxu0 0.0
      %2733 = vmatpush.msra.mxu0 0.0
      %2734 = vmatpush.msra.mxu0 0.0
      %2735 = vmatpush.msra.mxu0 0.0
      %2736 = vmatpush.msra.mxu0 0.0
      %2737 = vmatpush.msra.mxu0 0.0
      %2738 = vmatpush.msra.mxu0 0.0
      %2739 = vmatpush.msra.mxu0 0.0
      %2740 = vmatpush.msra.mxu0 0.0
      %2741 = vmatpush.msra.mxu0 0.0
      %2742 = vmatpush.msra.mxu0 0.0
      %2743 = vmatpush.msra.mxu0 0.0
      %2744 = vmatpush.msra.mxu0 0.0
      %2745 = vmatpush.msra.mxu0 0.0
      %2746 = vmatpush.msra.mxu0 0.0
      %2747 = vmatpush.msra.mxu0 %v2730
      %2748 = vmatmul.f32.gmra.mxu0 %v816
      %v2749 = vpop.f32.mrf.mxu0
      %v2750 = vadd.f32 0.0, %v2749
      %2751 = vmatmul.f32.gmra.mxu0 %v818
      %v2752 = vpop.f32.mrf.mxu0
      %v2753 = vadd.f32 0.0, %v2752
      %2754 = vmatmul.f32.gmra.mxu0 %v820
      %v2755 = vpop.f32.mrf.mxu0
      %v2756 = vadd.f32 0.0, %v2755
      %2757 = vmatmul.f32.gmra.mxu0 %v822
      %v2758 = vpop.f32.mrf.mxu0
      %v2759 = vadd.f32 0.0, %v2758
      %2760 = vmatmul.f32.gmra.mxu0 %v824
      %v2761 = vpop.f32.mrf.mxu0
      %v2762 = vadd.f32 0.0, %v2761
      %2763 = vmatmul.f32.gmra.mxu0 %v826
      %v2764 = vpop.f32.mrf.mxu0
      %v2765 = vadd.f32 0.0, %v2764
      %2766 = vmatmul.f32.gmra.mxu0 %v828
      %v2767 = vpop.f32.mrf.mxu0
      %v2768 = vadd.f32 0.0, %v2767
      %2769 = vmatmul.f32.gmra.mxu0 %v830
      %v2770 = vpop.f32.mrf.mxu0
      %v2771 = vadd.f32 0.0, %v2770
      %2772 = vmatmul.f32.gmra.mxu0 %v832
      %v2773 = vpop.f32.mrf.mxu0
      %v2774 = vadd.f32 0.0, %v2773
      %2775 = vmatmul.f32.gmra.mxu0 %v834
      %v2776 = vpop.f32.mrf.mxu0
      %v2777 = vadd.f32 0.0, %v2776
      %2778 = vmatmul.f32.gmra.mxu0 %v836
      %v2779 = vpop.f32.mrf.mxu0
      %v2780 = vadd.f32 0.0, %v2779
      %2781 = vmatmul.f32.gmra.mxu0 %v838
      %v2782 = vpop.f32.mrf.mxu0
      %v2783 = vadd.f32 0.0, %v2782
      %2784 = vmatmul.f32.gmra.mxu0 %v840
      %v2785 = vpop.f32.mrf.mxu0
      %v2786 = vadd.f32 0.0, %v2785
      %2787 = vmatmul.f32.gmra.mxu0 %v842
      %v2788 = vpop.f32.mrf.mxu0
      %v2789 = vadd.f32 0.0, %v2788
      %2790 = vmatmul.f32.gmra.mxu0 %v844
      %v2791 = vpop.f32.mrf.mxu0
      %v2792 = vadd.f32 0.0, %v2791
      %2793 = vmatmul.f32.gmra.mxu0 %v846
      %v2794 = vpop.f32.mrf.mxu0
      %v2795 = vadd.f32 0.0, %v2794
      %2796 = vmatmul.f32.gmra.mxu0 %v848
      %v2797 = vpop.f32.mrf.mxu0
      %v2798 = vadd.f32 0.0, %v2797
      %2799 = vmatmul.f32.gmra.mxu0 %v850
      %v2800 = vpop.f32.mrf.mxu0
      %v2801 = vadd.f32 0.0, %v2800
      %2802 = vmatmul.f32.gmra.mxu0 %v852
      %v2803 = vpop.f32.mrf.mxu0
      %v2804 = vadd.f32 0.0, %v2803
      %2805 = vmatmul.f32.gmra.mxu0 %v854
      %v2806 = vpop.f32.mrf.mxu0
      %v2807 = vadd.f32 0.0, %v2806
      %2808 = vmatmul.f32.gmra.mxu0 %v856
      %v2809 = vpop.f32.mrf.mxu0
      %v2810 = vadd.f32 0.0, %v2809
      %2811 = vmatmul.f32.gmra.mxu0 %v858
      %v2812 = vpop.f32.mrf.mxu0
      %v2813 = vadd.f32 0.0, %v2812
      %2814 = vmatmul.f32.gmra.mxu0 %v860
      %v2815 = vpop.f32.mrf.mxu0
      %v2816 = vadd.f32 0.0, %v2815
      %2817 = vmatmul.f32.gmra.mxu0 %v862
      %v2818 = vpop.f32.mrf.mxu0
      %v2819 = vadd.f32 0.0, %v2818
      %2820 = vmatmul.f32.gmra.mxu0 %v864
      %v2821 = vpop.f32.mrf.mxu0
      %v2822 = vadd.f32 0.0, %v2821
      %2823 = vmatmul.f32.gmra.mxu0 %v866
      %v2824 = vpop.f32.mrf.mxu0
      %v2825 = vadd.f32 0.0, %v2824
      %2826 = vmatmul.f32.gmra.mxu0 %v868
      %v2827 = vpop.f32.mrf.mxu0
      %v2828 = vadd.f32 0.0, %v2827
      %2829 = vmatmul.f32.gmra.mxu0 %v870
      %v2830 = vpop.f32.mrf.mxu0
      %v2831 = vadd.f32 0.0, %v2830
      %2832 = vmatmul.f32.gmra.mxu0 %v1932
      %v2833 = vpop.f32.mrf.mxu0
      %v2834 = vadd.f32 0.0, %v2833
      %2835 = vmatmul.f32.gmra.mxu0 %v1934
      %v2836 = vpop.f32.mrf.mxu0
      %v2837 = vadd.f32 0.0, %v2836
      %2838 = vmatmul.f32.gmra.mxu0 %v2725
      %v2839 = vpop.f32.mrf.mxu0
      %v2840 = vadd.f32 0.0, %v2839
      %2841 = vmatmul.f32.gmra.mxu0 %v2727
      %v2842 = vpop.f32.mrf.mxu0
      %v2843 = vadd.f32 0.0, %v2842
      %2844 = vdwg.mxu0
      %v2845 = vadd.f32 %v2686, %v2750
      %v2846 = vadd.f32 %v2687, %v2753
      %v2847 = vadd.f32 %v2688, %v2756
      %v2848 = vadd.f32 %v2689, %v2759
      %v2849 = vadd.f32 %v2690, %v2762
      %v2850 = vadd.f32 %v2691, %v2765
      %v2851 = vadd.f32 %v2692, %v2768
      %v2852 = vadd.f32 %v2693, %v2771
      %v2853 = vadd.f32 %v2694, %v2774
      %v2854 = vadd.f32 %v2695, %v2777
      %v2855 = vadd.f32 %v2696, %v2780
      %v2856 = vadd.f32 %v2697, %v2783
      %v2857 = vadd.f32 %v2698, %v2786
      %v2858 = vadd.f32 %v2699, %v2789
      %v2859 = vadd.f32 %v2700, %v2792
      %v2860 = vadd.f32 %v2701, %v2795
      %v2861 = vadd.f32 %v2702, %v2798
      %v2862 = vadd.f32 %v2703, %v2801
      %v2863 = vadd.f32 %v2704, %v2804
      %v2864 = vadd.f32 %v2705, %v2807
      %v2865 = vadd.f32 %v2706, %v2810
      %v2866 = vadd.f32 %v2707, %v2813
      %v2867 = vadd.f32 %v2708, %v2816
      %v2868 = vadd.f32 %v2709, %v2819
      %v2869 = vadd.f32 %v2710, %v2822
      %v2870 = vadd.f32 %v2711, %v2825
      %v2871 = vadd.f32 %v2712, %v2828
      %v2872 = vadd.f32 %v2713, %v2831
      %v2873 = vadd.f32 %v2714, %v2834
      %v2874 = vadd.f32 %v2715, %v2837
      %v2875 = vadd.f32 %v2716, %v2840
      %v2876 = vadd.f32 %v2717, %v2843
      %v2877 = vrot.slane %v222, 3
      %v2878 = vrot.slane %v223, 3
      %v2879 = vsel %vm1020, %v2877, %v2878
      %v2880 = vrot.slane %v224, 3
      %v2881 = vsel %vm1020, %v2878, %v2880
      %s2882 = scalar_lea.vmem %s1, 52
      %v2883 = vld [vmem:[%s2882] sm:$0xf]
      %v2884 = vsel %vm363, %v2879, 0
      %v2886 = vsel %vm363, %v2881, 0
      %v2889 = vsel %vm428, %v2883, 0
      %2891 = vmatpush.msra.mxu0 0.0
      %2892 = vmatpush.msra.mxu0 0.0
      %2893 = vmatpush.msra.mxu0 0.0
      %2894 = vmatpush.msra.mxu0 0.0
      %2895 = vmatpush.msra.mxu0 0.0
      %2896 = vmatpush.msra.mxu0 0.0
      %2897 = vmatpush.msra.mxu0 0.0
      %2898 = vmatpush.msra.mxu0 0.0
      %2899 = vmatpush.msra.mxu0 0.0
      %2900 = vmatpush.msra.mxu0 0.0
      %2901 = vmatpush.msra.mxu0 0.0
      %2902 = vmatpush.msra.mxu0 0.0
      %2903 = vmatpush.msra.mxu0 0.0
      %2904 = vmatpush.msra.mxu0 0.0
      %2905 = vmatpush.msra.mxu0 0.0
      %2906 = vmatpush.msra.mxu0 %v2889
      %2907 = vmatmul.f32.gmra.mxu0 %v1111
      %v2908 = vpop.f32.mrf.mxu0
      %v2909 = vadd.f32 0.0, %v2908
      %2910 = vmatmul.f32.gmra.mxu0 %v1113
      %v2911 = vpop.f32.mrf.mxu0
      %v2912 = vadd.f32 0.0, %v2911
      %2913 = vmatmul.f32.gmra.mxu0 %v1115
      %v2914 = vpop.f32.mrf.mxu0
      %v2915 = vadd.f32 0.0, %v2914
      %2916 = vmatmul.f32.gmra.mxu0 %v1117
      %v2917 = vpop.f32.mrf.mxu0
      %v2918 = vadd.f32 0.0, %v2917
      %2919 = vmatmul.f32.gmra.mxu0 %v1119
      %v2920 = vpop.f32.mrf.mxu0
      %v2921 = vadd.f32 0.0, %v2920
      %2922 = vmatmul.f32.gmra.mxu0 %v1121
      %v2923 = vpop.f32.mrf.mxu0
      %v2924 = vadd.f32 0.0, %v2923
      %2925 = vmatmul.f32.gmra.mxu0 %v1123
      %v2926 = vpop.f32.mrf.mxu0
      %v2927 = vadd.f32 0.0, %v2926
      %2928 = vmatmul.f32.gmra.mxu0 %v1125
      %v2929 = vpop.f32.mrf.mxu0
      %v2930 = vadd.f32 0.0, %v2929
      %2931 = vmatmul.f32.gmra.mxu0 %v1127
      %v2932 = vpop.f32.mrf.mxu0
      %v2933 = vadd.f32 0.0, %v2932
      %2934 = vmatmul.f32.gmra.mxu0 %v1129
      %v2935 = vpop.f32.mrf.mxu0
      %v2936 = vadd.f32 0.0, %v2935
      %2937 = vmatmul.f32.gmra.mxu0 %v1131
      %v2938 = vpop.f32.mrf.mxu0
      %v2939 = vadd.f32 0.0, %v2938
      %2940 = vmatmul.f32.gmra.mxu0 %v1133
      %v2941 = vpop.f32.mrf.mxu0
      %v2942 = vadd.f32 0.0, %v2941
      %2943 = vmatmul.f32.gmra.mxu0 %v1135
      %v2944 = vpop.f32.mrf.mxu0
      %v2945 = vadd.f32 0.0, %v2944
      %2946 = vmatmul.f32.gmra.mxu0 %v1137
      %v2947 = vpop.f32.mrf.mxu0
      %v2948 = vadd.f32 0.0, %v2947
      %2949 = vmatmul.f32.gmra.mxu0 %v1139
      %v2950 = vpop.f32.mrf.mxu0
      %v2951 = vadd.f32 0.0, %v2950
      %2952 = vmatmul.f32.gmra.mxu0 %v1141
      %v2953 = vpop.f32.mrf.mxu0
      %v2954 = vadd.f32 0.0, %v2953
      %2955 = vmatmul.f32.gmra.mxu0 %v1143
      %v2956 = vpop.f32.mrf.mxu0
      %v2957 = vadd.f32 0.0, %v2956
      %2958 = vmatmul.f32.gmra.mxu0 %v1145
      %v2959 = vpop.f32.mrf.mxu0
      %v2960 = vadd.f32 0.0, %v2959
      %2961 = vmatmul.f32.gmra.mxu0 %v1147
      %v2962 = vpop.f32.mrf.mxu0
      %v2963 = vadd.f32 0.0, %v2962
      %2964 = vmatmul.f32.gmra.mxu0 %v1149
      %v2965 = vpop.f32.mrf.mxu0
      %v2966 = vadd.f32 0.0, %v2965
      %2967 = vmatmul.f32.gmra.mxu0 %v1151
      %v2968 = vpop.f32.mrf.mxu0
      %v2969 = vadd.f32 0.0, %v2968
      %2970 = vmatmul.f32.gmra.mxu0 %v1153
      %v2971 = vpop.f32.mrf.mxu0
      %v2972 = vadd.f32 0.0, %v2971
      %2973 = vmatmul.f32.gmra.mxu0 %v1155
      %v2974 = vpop.f32.mrf.mxu0
      %v2975 = vadd.f32 0.0, %v2974
      %2976 = vmatmul.f32.gmra.mxu0 %v1157
      %v2977 = vpop.f32.mrf.mxu0
      %v2978 = vadd.f32 0.0, %v2977
      %2979 = vmatmul.f32.gmra.mxu0 %v1159
      %v2980 = vpop.f32.mrf.mxu0
      %v2981 = vadd.f32 0.0, %v2980
      %2982 = vmatmul.f32.gmra.mxu0 %v1161
      %v2983 = vpop.f32.mrf.mxu0
      %v2984 = vadd.f32 0.0, %v2983
      %2985 = vmatmul.f32.gmra.mxu0 %v1163
      %v2986 = vpop.f32.mrf.mxu0
      %v2987 = vadd.f32 0.0, %v2986
      %2988 = vmatmul.f32.gmra.mxu0 %v1165
      %v2989 = vpop.f32.mrf.mxu0
      %v2990 = vadd.f32 0.0, %v2989
      %2991 = vmatmul.f32.gmra.mxu0 %v2091
      %v2992 = vpop.f32.mrf.mxu0
      %v2993 = vadd.f32 0.0, %v2992
      %2994 = vmatmul.f32.gmra.mxu0 %v2093
      %v2995 = vpop.f32.mrf.mxu0
      %v2996 = vadd.f32 0.0, %v2995
      %2997 = vmatmul.f32.gmra.mxu0 %v2884
      %v2998 = vpop.f32.mrf.mxu0
      %v2999 = vadd.f32 0.0, %v2998
      %3000 = vmatmul.f32.gmra.mxu0 %v2886
      %v3001 = vpop.f32.mrf.mxu0
      %v3002 = vadd.f32 0.0, %v3001
      %3003 = vdwg.mxu0
      %v3004 = vadd.f32 %v2845, %v2909
      %v3005 = vadd.f32 %v2846, %v2912
      %v3006 = vadd.f32 %v2847, %v2915
      %v3007 = vadd.f32 %v2848, %v2918
      %v3008 = vadd.f32 %v2849, %v2921
      %v3009 = vadd.f32 %v2850, %v2924
      %v3010 = vadd.f32 %v2851, %v2927
      %v3011 = vadd.f32 %v2852, %v2930
      %v3012 = vadd.f32 %v2853, %v2933
      %v3013 = vadd.f32 %v2854, %v2936
      %v3014 = vadd.f32 %v2855, %v2939
      %v3015 = vadd.f32 %v2856, %v2942
      %v3016 = vadd.f32 %v2857, %v2945
      %v3017 = vadd.f32 %v2858, %v2948
      %v3018 = vadd.f32 %v2859, %v2951
      %v3019 = vadd.f32 %v2860, %v2954
      %v3020 = vadd.f32 %v2861, %v2957
      %v3021 = vadd.f32 %v2862, %v2960
      %v3022 = vadd.f32 %v2863, %v2963
      %v3023 = vadd.f32 %v2864, %v2966
      %v3024 = vadd.f32 %v2865, %v2969
      %v3025 = vadd.f32 %v2866, %v2972
      %v3026 = vadd.f32 %v2867, %v2975
      %v3027 = vadd.f32 %v2868, %v2978
      %v3028 = vadd.f32 %v2869, %v2981
      %v3029 = vadd.f32 %v2870, %v2984
      %v3030 = vadd.f32 %v2871, %v2987
      %v3031 = vadd.f32 %v2872, %v2990
      %v3032 = vadd.f32 %v2873, %v2993
      %v3033 = vadd.f32 %v2874, %v2996
      %v3034 = vadd.f32 %v2875, %v2999
      %v3035 = vadd.f32 %v2876, %v3002
      %v3036 = vrot.slane %v222, 4
      %v3037 = vrot.slane %v223, 4
      %v3038 = vsel %vm428, %v3036, %v3037
      %v3039 = vrot.slane %v224, 4
      %v3040 = vsel %vm428, %v3037, %v3039
      %s3041 = scalar_lea.vmem %s1, 56
      %v3042 = vld [vmem:[%s3041] sm:$0xf]
      %v3043 = vsel %vm363, %v3038, 0
      %v3045 = vsel %vm363, %v3040, 0
      %v3048 = vsel %vm428, %v3042, 0
      %3050 = vmatpush.msra.mxu0 0.0
      %3051 = vmatpush.msra.mxu0 0.0
      %3052 = vmatpush.msra.mxu0 0.0
      %3053 = vmatpush.msra.mxu0 0.0
      %3054 = vmatpush.msra.mxu0 0.0
      %3055 = vmatpush.msra.mxu0 0.0
      %3056 = vmatpush.msra.mxu0 0.0
      %3057 = vmatpush.msra.mxu0 0.0
      %3058 = vmatpush.msra.mxu0 0.0
      %3059 = vmatpush.msra.mxu0 0.0
      %3060 = vmatpush.msra.mxu0 0.0
      %3061 = vmatpush.msra.mxu0 0.0
      %3062 = vmatpush.msra.mxu0 0.0
      %3063 = vmatpush.msra.mxu0 0.0
      %3064 = vmatpush.msra.mxu0 0.0
      %3065 = vmatpush.msra.mxu0 %v3048
      %3066 = vmatmul.f32.gmra.mxu0 %v1405
      %v3067 = vpop.f32.mrf.mxu0
      %v3068 = vadd.f32 0.0, %v3067
      %3069 = vmatmul.f32.gmra.mxu0 %v1407
      %v3070 = vpop.f32.mrf.mxu0
      %v3071 = vadd.f32 0.0, %v3070
      %3072 = vmatmul.f32.gmra.mxu0 %v1409
      %v3073 = vpop.f32.mrf.mxu0
      %v3074 = vadd.f32 0.0, %v3073
      %3075 = vmatmul.f32.gmra.mxu0 %v1411
      %v3076 = vpop.f32.mrf.mxu0
      %v3077 = vadd.f32 0.0, %v3076
      %3078 = vmatmul.f32.gmra.mxu0 %v1413
      %v3079 = vpop.f32.mrf.mxu0
      %v3080 = vadd.f32 0.0, %v3079
      %3081 = vmatmul.f32.gmra.mxu0 %v1415
      %v3082 = vpop.f32.mrf.mxu0
      %v3083 = vadd.f32 0.0, %v3082
      %3084 = vmatmul.f32.gmra.mxu0 %v1417
      %v3085 = vpop.f32.mrf.mxu0
      %v3086 = vadd.f32 0.0, %v3085
      %3087 = vmatmul.f32.gmra.mxu0 %v1419
      %v3088 = vpop.f32.mrf.mxu0
      %v3089 = vadd.f32 0.0, %v3088
      %3090 = vmatmul.f32.gmra.mxu0 %v1421
      %v3091 = vpop.f32.mrf.mxu0
      %v3092 = vadd.f32 0.0, %v3091
      %3093 = vmatmul.f32.gmra.mxu0 %v1423
      %v3094 = vpop.f32.mrf.mxu0
      %v3095 = vadd.f32 0.0, %v3094
      %3096 = vmatmul.f32.gmra.mxu0 %v1425
      %v3097 = vpop.f32.mrf.mxu0
      %v3098 = vadd.f32 0.0, %v3097
      %3099 = vmatmul.f32.gmra.mxu0 %v1427
      %v3100 = vpop.f32.mrf.mxu0
      %v3101 = vadd.f32 0.0, %v3100
      %3102 = vmatmul.f32.gmra.mxu0 %v1429
      %v3103 = vpop.f32.mrf.mxu0
      %v3104 = vadd.f32 0.0, %v3103
      %3105 = vmatmul.f32.gmra.mxu0 %v1431
      %v3106 = vpop.f32.mrf.mxu0
      %v3107 = vadd.f32 0.0, %v3106
      %3108 = vmatmul.f32.gmra.mxu0 %v1433
      %v3109 = vpop.f32.mrf.mxu0
      %v3110 = vadd.f32 0.0, %v3109
      %3111 = vmatmul.f32.gmra.mxu0 %v1435
      %v3112 = vpop.f32.mrf.mxu0
      %v3113 = vadd.f32 0.0, %v3112
      %3114 = vmatmul.f32.gmra.mxu0 %v1437
      %v3115 = vpop.f32.mrf.mxu0
      %v3116 = vadd.f32 0.0, %v3115
      %3117 = vmatmul.f32.gmra.mxu0 %v1439
      %v3118 = vpop.f32.mrf.mxu0
      %v3119 = vadd.f32 0.0, %v3118
      %3120 = vmatmul.f32.gmra.mxu0 %v1441
      %v3121 = vpop.f32.mrf.mxu0
      %v3122 = vadd.f32 0.0, %v3121
      %3123 = vmatmul.f32.gmra.mxu0 %v1443
      %v3124 = vpop.f32.mrf.mxu0
      %v3125 = vadd.f32 0.0, %v3124
      %3126 = vmatmul.f32.gmra.mxu0 %v1445
      %v3127 = vpop.f32.mrf.mxu0
      %v3128 = vadd.f32 0.0, %v3127
      %3129 = vmatmul.f32.gmra.mxu0 %v1447
      %v3130 = vpop.f32.mrf.mxu0
      %v3131 = vadd.f32 0.0, %v3130
      %3132 = vmatmul.f32.gmra.mxu0 %v1449
      %v3133 = vpop.f32.mrf.mxu0
      %v3134 = vadd.f32 0.0, %v3133
      %3135 = vmatmul.f32.gmra.mxu0 %v1451
      %v3136 = vpop.f32.mrf.mxu0
      %v3137 = vadd.f32 0.0, %v3136
      %3138 = vmatmul.f32.gmra.mxu0 %v1453
      %v3139 = vpop.f32.mrf.mxu0
      %v3140 = vadd.f32 0.0, %v3139
      %3141 = vmatmul.f32.gmra.mxu0 %v1455
      %v3142 = vpop.f32.mrf.mxu0
      %v3143 = vadd.f32 0.0, %v3142
      %3144 = vmatmul.f32.gmra.mxu0 %v1457
      %v3145 = vpop.f32.mrf.mxu0
      %v3146 = vadd.f32 0.0, %v3145
      %3147 = vmatmul.f32.gmra.mxu0 %v1459
      %v3148 = vpop.f32.mrf.mxu0
      %v3149 = vadd.f32 0.0, %v3148
      %3150 = vmatmul.f32.gmra.mxu0 %v2250
      %v3151 = vpop.f32.mrf.mxu0
      %v3152 = vadd.f32 0.0, %v3151
      %3153 = vmatmul.f32.gmra.mxu0 %v2252
      %v3154 = vpop.f32.mrf.mxu0
      %v3155 = vadd.f32 0.0, %v3154
      %3156 = vmatmul.f32.gmra.mxu0 %v3043
      %v3157 = vpop.f32.mrf.mxu0
      %v3158 = vadd.f32 0.0, %v3157
      %3159 = vmatmul.f32.gmra.mxu0 %v3045
      %v3160 = vpop.f32.mrf.mxu0
      %v3161 = vadd.f32 0.0, %v3160
      %3162 = vdwg.mxu0
      %v3163 = vadd.f32 %v3004, %v3068
      %v3164 = vadd.f32 %v3005, %v3071
      %v3165 = vadd.f32 %v3006, %v3074
      %v3166 = vadd.f32 %v3007, %v3077
      %v3167 = vadd.f32 %v3008, %v3080
      %v3168 = vadd.f32 %v3009, %v3083
      %v3169 = vadd.f32 %v3010, %v3086
      %v3170 = vadd.f32 %v3011, %v3089
      %v3171 = vadd.f32 %v3012, %v3092
      %v3172 = vadd.f32 %v3013, %v3095
      %v3173 = vadd.f32 %v3014, %v3098
      %v3174 = vadd.f32 %v3015, %v3101
      %v3175 = vadd.f32 %v3016, %v3104
      %v3176 = vadd.f32 %v3017, %v3107
      %v3177 = vadd.f32 %v3018, %v3110
      %v3178 = vadd.f32 %v3019, %v3113
      %v3179 = vadd.f32 %v3020, %v3116
      %v3180 = vadd.f32 %v3021, %v3119
      %v3181 = vadd.f32 %v3022, %v3122
      %v3182 = vadd.f32 %v3023, %v3125
      %v3183 = vadd.f32 %v3024, %v3128
      %v3184 = vadd.f32 %v3025, %v3131
      %v3185 = vadd.f32 %v3026, %v3134
      %v3186 = vadd.f32 %v3027, %v3137
      %v3187 = vadd.f32 %v3028, %v3140
      %v3188 = vadd.f32 %v3029, %v3143
      %v3189 = vadd.f32 %v3030, %v3146
      %v3190 = vadd.f32 %v3031, %v3149
      %v3191 = vadd.f32 %v3032, %v3152
      %v3192 = vadd.f32 %v3033, %v3155
      %v3193 = vadd.f32 %v3034, %v3158
      %v3194 = vadd.f32 %v3035, %v3161
      %s3195 = scalar_lea.vmem %s1, 60
      %v3196 = vld [vmem:[%s3195] sm:$0xf]
      %v3198 = vsel %vm363, %v225, 0
      %v3201 = vsel %vm363, %v226, 0
      %v3204 = vsel %vm428, %v3196, 0
      %3206 = vmatpush.msra.mxu0 0.0
      %3207 = vmatpush.msra.mxu0 0.0
      %3208 = vmatpush.msra.mxu0 0.0
      %3209 = vmatpush.msra.mxu0 0.0
      %3210 = vmatpush.msra.mxu0 0.0
      %3211 = vmatpush.msra.mxu0 0.0
      %3212 = vmatpush.msra.mxu0 0.0
      %3213 = vmatpush.msra.mxu0 0.0
      %3214 = vmatpush.msra.mxu0 0.0
      %3215 = vmatpush.msra.mxu0 0.0
      %3216 = vmatpush.msra.mxu0 0.0
      %3217 = vmatpush.msra.mxu0 0.0
      %3218 = vmatpush.msra.mxu0 0.0
      %3219 = vmatpush.msra.mxu0 0.0
      %3220 = vmatpush.msra.mxu0 0.0
      %3221 = vmatpush.msra.mxu0 %v3204
      %3222 = vmatmul.f32.gmra.mxu0 %v557
      %v3223 = vpop.f32.mrf.mxu0
      %v3224 = vadd.f32 0.0, %v3223
      %3225 = vmatmul.f32.gmra.mxu0 %v559
      %v3226 = vpop.f32.mrf.mxu0
      %v3227 = vadd.f32 0.0, %v3226
      %3228 = vmatmul.f32.gmra.mxu0 %v561
      %v3229 = vpop.f32.mrf.mxu0
      %v3230 = vadd.f32 0.0, %v3229
      %3231 = vmatmul.f32.gmra.mxu0 %v563
      %v3232 = vpop.f32.mrf.mxu0
      %v3233 = vadd.f32 0.0, %v3232
      %3234 = vmatmul.f32.gmra.mxu0 %v565
      %v3235 = vpop.f32.mrf.mxu0
      %v3236 = vadd.f32 0.0, %v3235
      %3237 = vmatmul.f32.gmra.mxu0 %v567
      %v3238 = vpop.f32.mrf.mxu0
      %v3239 = vadd.f32 0.0, %v3238
      %3240 = vmatmul.f32.gmra.mxu0 %v569
      %v3241 = vpop.f32.mrf.mxu0
      %v3242 = vadd.f32 0.0, %v3241
      %3243 = vmatmul.f32.gmra.mxu0 %v571
      %v3244 = vpop.f32.mrf.mxu0
      %v3245 = vadd.f32 0.0, %v3244
      %3246 = vmatmul.f32.gmra.mxu0 %v573
      %v3247 = vpop.f32.mrf.mxu0
      %v3248 = vadd.f32 0.0, %v3247
      %3249 = vmatmul.f32.gmra.mxu0 %v575
      %v3250 = vpop.f32.mrf.mxu0
      %v3251 = vadd.f32 0.0, %v3250
      %3252 = vmatmul.f32.gmra.mxu0 %v577
      %v3253 = vpop.f32.mrf.mxu0
      %v3254 = vadd.f32 0.0, %v3253
      %3255 = vmatmul.f32.gmra.mxu0 %v579
      %v3256 = vpop.f32.mrf.mxu0
      %v3257 = vadd.f32 0.0, %v3256
      %3258 = vmatmul.f32.gmra.mxu0 %v581
      %v3259 = vpop.f32.mrf.mxu0
      %v3260 = vadd.f32 0.0, %v3259
      %3261 = vmatmul.f32.gmra.mxu0 %v583
      %v3262 = vpop.f32.mrf.mxu0
      %v3263 = vadd.f32 0.0, %v3262
      %3264 = vmatmul.f32.gmra.mxu0 %v585
      %v3265 = vpop.f32.mrf.mxu0
      %v3266 = vadd.f32 0.0, %v3265
      %3267 = vmatmul.f32.gmra.mxu0 %v587
      %v3268 = vpop.f32.mrf.mxu0
      %v3269 = vadd.f32 0.0, %v3268
      %3270 = vmatmul.f32.gmra.mxu0 %v589
      %v3271 = vpop.f32.mrf.mxu0
      %v3272 = vadd.f32 0.0, %v3271
      %3273 = vmatmul.f32.gmra.mxu0 %v591
      %v3274 = vpop.f32.mrf.mxu0
      %v3275 = vadd.f32 0.0, %v3274
      %3276 = vmatmul.f32.gmra.mxu0 %v593
      %v3277 = vpop.f32.mrf.mxu0
      %v3278 = vadd.f32 0.0, %v3277
      %3279 = vmatmul.f32.gmra.mxu0 %v595
      %v3280 = vpop.f32.mrf.mxu0
      %v3281 = vadd.f32 0.0, %v3280
      %3282 = vmatmul.f32.gmra.mxu0 %v597
      %v3283 = vpop.f32.mrf.mxu0
      %v3284 = vadd.f32 0.0, %v3283
      %3285 = vmatmul.f32.gmra.mxu0 %v599
      %v3286 = vpop.f32.mrf.mxu0
      %v3287 = vadd.f32 0.0, %v3286
      %3288 = vmatmul.f32.gmra.mxu0 %v601
      %v3289 = vpop.f32.mrf.mxu0
      %v3290 = vadd.f32 0.0, %v3289
      %3291 = vmatmul.f32.gmra.mxu0 %v603
      %v3292 = vpop.f32.mrf.mxu0
      %v3293 = vadd.f32 0.0, %v3292
      %3294 = vmatmul.f32.gmra.mxu0 %v605
      %v3295 = vpop.f32.mrf.mxu0
      %v3296 = vadd.f32 0.0, %v3295
      %3297 = vmatmul.f32.gmra.mxu0 %v607
      %v3298 = vpop.f32.mrf.mxu0
      %v3299 = vadd.f32 0.0, %v3298
      %3300 = vmatmul.f32.gmra.mxu0 %v1612
      %v3301 = vpop.f32.mrf.mxu0
      %v3302 = vadd.f32 0.0, %v3301
      %3303 = vmatmul.f32.gmra.mxu0 %v1615
      %v3304 = vpop.f32.mrf.mxu0
      %v3305 = vadd.f32 0.0, %v3304
      %3306 = vmatmul.f32.gmra.mxu0 %v2405
      %v3307 = vpop.f32.mrf.mxu0
      %v3308 = vadd.f32 0.0, %v3307
      %3309 = vmatmul.f32.gmra.mxu0 %v2408
      %v3310 = vpop.f32.mrf.mxu0
      %v3311 = vadd.f32 0.0, %v3310
      %3312 = vmatmul.f32.gmra.mxu0 %v3198
      %v3313 = vpop.f32.mrf.mxu0
      %v3314 = vadd.f32 0.0, %v3313
      %3315 = vmatmul.f32.gmra.mxu0 %v3201
      %v3316 = vpop.f32.mrf.mxu0
      %v3317 = vadd.f32 0.0, %v3316
      %3318 = vdwg.mxu0
      %v3319 = vadd.f32 %v3163, %v3224
      %v3320 = vadd.f32 %v3164, %v3227
      %v3321 = vadd.f32 %v3165, %v3230
      %v3322 = vadd.f32 %v3166, %v3233
      %v3323 = vadd.f32 %v3167, %v3236
      %v3324 = vadd.f32 %v3168, %v3239
      %v3325 = vadd.f32 %v3169, %v3242
      %v3326 = vadd.f32 %v3170, %v3245
      %v3327 = vadd.f32 %v3171, %v3248
      %v3328 = vadd.f32 %v3172, %v3251
      %v3329 = vadd.f32 %v3173, %v3254
      %v3330 = vadd.f32 %v3174, %v3257
      %v3331 = vadd.f32 %v3175, %v3260
      %v3332 = vadd.f32 %v3176, %v3263
      %v3333 = vadd.f32 %v3177, %v3266
      %v3334 = vadd.f32 %v3178, %v3269
      %v3335 = vadd.f32 %v3179, %v3272
      %v3336 = vadd.f32 %v3180, %v3275
      %v3337 = vadd.f32 %v3181, %v3278
      %v3338 = vadd.f32 %v3182, %v3281
      %v3339 = vadd.f32 %v3183, %v3284
      %v3340 = vadd.f32 %v3184, %v3287
      %v3341 = vadd.f32 %v3185, %v3290
      %v3342 = vadd.f32 %v3186, %v3293
      %v3343 = vadd.f32 %v3187, %v3296
      %v3344 = vadd.f32 %v3188, %v3299
      %v3345 = vadd.f32 %v3189, %v3302
      %v3346 = vadd.f32 %v3190, %v3305
      %v3347 = vadd.f32 %v3191, %v3308
      %v3348 = vadd.f32 %v3192, %v3311
      %v3349 = vadd.f32 %v3193, %v3314
      %v3350 = vadd.f32 %v3194, %v3317
      %v3352 = vrot.slane %v225, 1
      %v3353 = vrot.slane %v226, 1
      %v3354 = vsel %vm280, %v3352, %v3353
      %v3355 = vrot.slane %v227, 1
      %v3356 = vsel %vm280, %v3353, %v3355
      %s3357 = scalar_lea.vmem %s1, 64
      %v3358 = vld [vmem:[%s3357] sm:$0xf]
      %v3359 = vsel %vm363, %v3354, 0
      %v3361 = vsel %vm363, %v3356, 0
      %v3364 = vsel %vm428, %v3358, 0
      %3366 = vmatpush.msra.mxu0 0.0
      %3367 = vmatpush.msra.mxu0 0.0
      %3368 = vmatpush.msra.mxu0 0.0
      %3369 = vmatpush.msra.mxu0 0.0
      %3370 = vmatpush.msra.mxu0 0.0
      %3371 = vmatpush.msra.mxu0 0.0
      %3372 = vmatpush.msra.mxu0 0.0
      %3373 = vmatpush.msra.mxu0 0.0
      %3374 = vmatpush.msra.mxu0 0.0
      %3375 = vmatpush.msra.mxu0 0.0
      %3376 = vmatpush.msra.mxu0 0.0
      %3377 = vmatpush.msra.mxu0 0.0
      %3378 = vmatpush.msra.mxu0 0.0
      %3379 = vmatpush.msra.mxu0 0.0
      %3380 = vmatpush.msra.mxu0 0.0
      %3381 = vmatpush.msra.mxu0 %v3364
      %3382 = vmatmul.f32.gmra.mxu0 %v376
      %v3383 = vpop.f32.mrf.mxu0
      %v3384 = vadd.f32 0.0, %v3383
      %3385 = vmatmul.f32.gmra.mxu0 %v378
      %v3386 = vpop.f32.mrf.mxu0
      %v3387 = vadd.f32 0.0, %v3386
      %3388 = vmatmul.f32.gmra.mxu0 %v380
      %v3389 = vpop.f32.mrf.mxu0
      %v3390 = vadd.f32 0.0, %v3389
      %3391 = vmatmul.f32.gmra.mxu0 %v382
      %v3392 = vpop.f32.mrf.mxu0
      %v3393 = vadd.f32 0.0, %v3392
      %3394 = vmatmul.f32.gmra.mxu0 %v384
      %v3395 = vpop.f32.mrf.mxu0
      %v3396 = vadd.f32 0.0, %v3395
      %3397 = vmatmul.f32.gmra.mxu0 %v386
      %v3398 = vpop.f32.mrf.mxu0
      %v3399 = vadd.f32 0.0, %v3398
      %3400 = vmatmul.f32.gmra.mxu0 %v388
      %v3401 = vpop.f32.mrf.mxu0
      %v3402 = vadd.f32 0.0, %v3401
      %3403 = vmatmul.f32.gmra.mxu0 %v390
      %v3404 = vpop.f32.mrf.mxu0
      %v3405 = vadd.f32 0.0, %v3404
      %3406 = vmatmul.f32.gmra.mxu0 %v392
      %v3407 = vpop.f32.mrf.mxu0
      %v3408 = vadd.f32 0.0, %v3407
      %3409 = vmatmul.f32.gmra.mxu0 %v394
      %v3410 = vpop.f32.mrf.mxu0
      %v3411 = vadd.f32 0.0, %v3410
      %3412 = vmatmul.f32.gmra.mxu0 %v396
      %v3413 = vpop.f32.mrf.mxu0
      %v3414 = vadd.f32 0.0, %v3413
      %3415 = vmatmul.f32.gmra.mxu0 %v398
      %v3416 = vpop.f32.mrf.mxu0
      %v3417 = vadd.f32 0.0, %v3416
      %3418 = vmatmul.f32.gmra.mxu0 %v400
      %v3419 = vpop.f32.mrf.mxu0
      %v3420 = vadd.f32 0.0, %v3419
      %3421 = vmatmul.f32.gmra.mxu0 %v402
      %v3422 = vpop.f32.mrf.mxu0
      %v3423 = vadd.f32 0.0, %v3422
      %3424 = vmatmul.f32.gmra.mxu0 %v404
      %v3425 = vpop.f32.mrf.mxu0
      %v3426 = vadd.f32 0.0, %v3425
      %3427 = vmatmul.f32.gmra.mxu0 %v406
      %v3428 = vpop.f32.mrf.mxu0
      %v3429 = vadd.f32 0.0, %v3428
      %3430 = vmatmul.f32.gmra.mxu0 %v408
      %v3431 = vpop.f32.mrf.mxu0
      %v3432 = vadd.f32 0.0, %v3431
      %3433 = vmatmul.f32.gmra.mxu0 %v410
      %v3434 = vpop.f32.mrf.mxu0
      %v3435 = vadd.f32 0.0, %v3434
      %3436 = vmatmul.f32.gmra.mxu0 %v412
      %v3437 = vpop.f32.mrf.mxu0
      %v3438 = vadd.f32 0.0, %v3437
      %3439 = vmatmul.f32.gmra.mxu0 %v414
      %v3440 = vpop.f32.mrf.mxu0
      %v3441 = vadd.f32 0.0, %v3440
      %3442 = vmatmul.f32.gmra.mxu0 %v416
      %v3443 = vpop.f32.mrf.mxu0
      %v3444 = vadd.f32 0.0, %v3443
      %3445 = vmatmul.f32.gmra.mxu0 %v418
      %v3446 = vpop.f32.mrf.mxu0
      %v3447 = vadd.f32 0.0, %v3446
      %3448 = vmatmul.f32.gmra.mxu0 %v420
      %v3449 = vpop.f32.mrf.mxu0
      %v3450 = vadd.f32 0.0, %v3449
      %3451 = vmatmul.f32.gmra.mxu0 %v422
      %v3452 = vpop.f32.mrf.mxu0
      %v3453 = vadd.f32 0.0, %v3452
      %3454 = vmatmul.f32.gmra.mxu0 %v424
      %v3455 = vpop.f32.mrf.mxu0
      %v3456 = vadd.f32 0.0, %v3455
      %3457 = vmatmul.f32.gmra.mxu0 %v426
      %v3458 = vpop.f32.mrf.mxu0
      %v3459 = vadd.f32 0.0, %v3458
      %3460 = vmatmul.f32.gmra.mxu0 %v1773
      %v3461 = vpop.f32.mrf.mxu0
      %v3462 = vadd.f32 0.0, %v3461
      %3463 = vmatmul.f32.gmra.mxu0 %v1775
      %v3464 = vpop.f32.mrf.mxu0
      %v3465 = vadd.f32 0.0, %v3464
      %3466 = vmatmul.f32.gmra.mxu0 %v2566
      %v3467 = vpop.f32.mrf.mxu0
      %v3468 = vadd.f32 0.0, %v3467
      %3469 = vmatmul.f32.gmra.mxu0 %v2568
      %v3470 = vpop.f32.mrf.mxu0
      %v3471 = vadd.f32 0.0, %v3470
      %3472 = vmatmul.f32.gmra.mxu0 %v3359
      %v3473 = vpop.f32.mrf.mxu0
      %v3474 = vadd.f32 0.0, %v3473
      %3475 = vmatmul.f32.gmra.mxu0 %v3361
      %v3476 = vpop.f32.mrf.mxu0
      %v3477 = vadd.f32 0.0, %v3476
      %3478 = vdwg.mxu0
      %v3479 = vadd.f32 %v3319, %v3384
      %v3480 = vadd.f32 %v3320, %v3387
      %v3481 = vadd.f32 %v3321, %v3390
      %v3482 = vadd.f32 %v3322, %v3393
      %v3483 = vadd.f32 %v3323, %v3396
      %v3484 = vadd.f32 %v3324, %v3399
      %v3485 = vadd.f32 %v3325, %v3402
      %v3486 = vadd.f32 %v3326, %v3405
      %v3487 = vadd.f32 %v3327, %v3408
      %v3488 = vadd.f32 %v3328, %v3411
      %v3489 = vadd.f32 %v3329, %v3414
      %v3490 = vadd.f32 %v3330, %v3417
      %v3491 = vadd.f32 %v3331, %v3420
      %v3492 = vadd.f32 %v3332, %v3423
      %v3493 = vadd.f32 %v3333, %v3426
      %v3494 = vadd.f32 %v3334, %v3429
      %v3495 = vadd.f32 %v3335, %v3432
      %v3496 = vadd.f32 %v3336, %v3435
      %v3497 = vadd.f32 %v3337, %v3438
      %v3498 = vadd.f32 %v3338, %v3441
      %v3499 = vadd.f32 %v3339, %v3444
      %v3500 = vadd.f32 %v3340, %v3447
      %v3501 = vadd.f32 %v3341, %v3450
      %v3502 = vadd.f32 %v3342, %v3453
      %v3503 = vadd.f32 %v3343, %v3456
      %v3504 = vadd.f32 %v3344, %v3459
      %v3505 = vadd.f32 %v3345, %v3462
      %v3506 = vadd.f32 %v3346, %v3465
      %v3507 = vadd.f32 %v3347, %v3468
      %v3508 = vadd.f32 %v3348, %v3471
      %v3509 = vadd.f32 %v3349, %v3474
      %v3510 = vadd.f32 %v3350, %v3477
      %v3511 = vrot.slane %v225, 2
      %v3512 = vrot.slane %v226, 2
      %v3513 = vsel %vm725, %v3511, %v3512
      %v3514 = vrot.slane %v227, 2
      %v3515 = vsel %vm725, %v3512, %v3514
      %s3516 = scalar_lea.vmem %s1, 68
      %v3517 = vld [vmem:[%s3516] sm:$0xf]
      %v3518 = vsel %vm363, %v3513, 0
      %v3520 = vsel %vm363, %v3515, 0
      %v3523 = vsel %vm428, %v3517, 0
      %3525 = vmatpush.msra.mxu0 0.0
      %3526 = vmatpush.msra.mxu0 0.0
      %3527 = vmatpush.msra.mxu0 0.0
      %3528 = vmatpush.msra.mxu0 0.0
      %3529 = vmatpush.msra.mxu0 0.0
      %3530 = vmatpush.msra.mxu0 0.0
      %3531 = vmatpush.msra.mxu0 0.0
      %3532 = vmatpush.msra.mxu0 0.0
      %3533 = vmatpush.msra.mxu0 0.0
      %3534 = vmatpush.msra.mxu0 0.0
      %3535 = vmatpush.msra.mxu0 0.0
      %3536 = vmatpush.msra.mxu0 0.0
      %3537 = vmatpush.msra.mxu0 0.0
      %3538 = vmatpush.msra.mxu0 0.0
      %3539 = vmatpush.msra.mxu0 0.0
      %3540 = vmatpush.msra.mxu0 %v3523
      %3541 = vmatmul.f32.gmra.mxu0 %v820
      %v3542 = vpop.f32.mrf.mxu0
      %v3543 = vadd.f32 0.0, %v3542
      %3544 = vmatmul.f32.gmra.mxu0 %v822
      %v3545 = vpop.f32.mrf.mxu0
      %v3546 = vadd.f32 0.0, %v3545
      %3547 = vmatmul.f32.gmra.mxu0 %v824
      %v3548 = vpop.f32.mrf.mxu0
      %v3549 = vadd.f32 0.0, %v3548
      %3550 = vmatmul.f32.gmra.mxu0 %v826
      %v3551 = vpop.f32.mrf.mxu0
      %v3552 = vadd.f32 0.0, %v3551
      %3553 = vmatmul.f32.gmra.mxu0 %v828
      %v3554 = vpop.f32.mrf.mxu0
      %v3555 = vadd.f32 0.0, %v3554
      %3556 = vmatmul.f32.gmra.mxu0 %v830
      %v3557 = vpop.f32.mrf.mxu0
      %v3558 = vadd.f32 0.0, %v3557
      %3559 = vmatmul.f32.gmra.mxu0 %v832
      %v3560 = vpop.f32.mrf.mxu0
      %v3561 = vadd.f32 0.0, %v3560
      %3562 = vmatmul.f32.gmra.mxu0 %v834
      %v3563 = vpop.f32.mrf.mxu0
      %v3564 = vadd.f32 0.0, %v3563
      %3565 = vmatmul.f32.gmra.mxu0 %v836
      %v3566 = vpop.f32.mrf.mxu0
      %v3567 = vadd.f32 0.0, %v3566
      %3568 = vmatmul.f32.gmra.mxu0 %v838
      %v3569 = vpop.f32.mrf.mxu0
      %v3570 = vadd.f32 0.0, %v3569
      %3571 = vmatmul.f32.gmra.mxu0 %v840
      %v3572 = vpop.f32.mrf.mxu0
      %v3573 = vadd.f32 0.0, %v3572
      %3574 = vmatmul.f32.gmra.mxu0 %v842
      %v3575 = vpop.f32.mrf.mxu0
      %v3576 = vadd.f32 0.0, %v3575
      %3577 = vmatmul.f32.gmra.mxu0 %v844
      %v3578 = vpop.f32.mrf.mxu0
      %v3579 = vadd.f32 0.0, %v3578
      %3580 = vmatmul.f32.gmra.mxu0 %v846
      %v3581 = vpop.f32.mrf.mxu0
      %v3582 = vadd.f32 0.0, %v3581
      %3583 = vmatmul.f32.gmra.mxu0 %v848
      %v3584 = vpop.f32.mrf.mxu0
      %v3585 = vadd.f32 0.0, %v3584
      %3586 = vmatmul.f32.gmra.mxu0 %v850
      %v3587 = vpop.f32.mrf.mxu0
      %v3588 = vadd.f32 0.0, %v3587
      %3589 = vmatmul.f32.gmra.mxu0 %v852
      %v3590 = vpop.f32.mrf.mxu0
      %v3591 = vadd.f32 0.0, %v3590
      %3592 = vmatmul.f32.gmra.mxu0 %v854
      %v3593 = vpop.f32.mrf.mxu0
      %v3594 = vadd.f32 0.0, %v3593
      %3595 = vmatmul.f32.gmra.mxu0 %v856
      %v3596 = vpop.f32.mrf.mxu0
      %v3597 = vadd.f32 0.0, %v3596
      %3598 = vmatmul.f32.gmra.mxu0 %v858
      %v3599 = vpop.f32.mrf.mxu0
      %v3600 = vadd.f32 0.0, %v3599
      %3601 = vmatmul.f32.gmra.mxu0 %v860
      %v3602 = vpop.f32.mrf.mxu0
      %v3603 = vadd.f32 0.0, %v3602
      %3604 = vmatmul.f32.gmra.mxu0 %v862
      %v3605 = vpop.f32.mrf.mxu0
      %v3606 = vadd.f32 0.0, %v3605
      %3607 = vmatmul.f32.gmra.mxu0 %v864
      %v3608 = vpop.f32.mrf.mxu0
      %v3609 = vadd.f32 0.0, %v3608
      %3610 = vmatmul.f32.gmra.mxu0 %v866
      %v3611 = vpop.f32.mrf.mxu0
      %v3612 = vadd.f32 0.0, %v3611
      %3613 = vmatmul.f32.gmra.mxu0 %v868
      %v3614 = vpop.f32.mrf.mxu0
      %v3615 = vadd.f32 0.0, %v3614
      %3616 = vmatmul.f32.gmra.mxu0 %v870
      %v3617 = vpop.f32.mrf.mxu0
      %v3618 = vadd.f32 0.0, %v3617
      %3619 = vmatmul.f32.gmra.mxu0 %v1932
      %v3620 = vpop.f32.mrf.mxu0
      %v3621 = vadd.f32 0.0, %v3620
      %3622 = vmatmul.f32.gmra.mxu0 %v1934
      %v3623 = vpop.f32.mrf.mxu0
      %v3624 = vadd.f32 0.0, %v3623
      %3625 = vmatmul.f32.gmra.mxu0 %v2725
      %v3626 = vpop.f32.mrf.mxu0
      %v3627 = vadd.f32 0.0, %v3626
      %3628 = vmatmul.f32.gmra.mxu0 %v2727
      %v3629 = vpop.f32.mrf.mxu0
      %v3630 = vadd.f32 0.0, %v3629
      %3631 = vmatmul.f32.gmra.mxu0 %v3518
      %v3632 = vpop.f32.mrf.mxu0
      %v3633 = vadd.f32 0.0, %v3632
      %3634 = vmatmul.f32.gmra.mxu0 %v3520
      %v3635 = vpop.f32.mrf.mxu0
      %v3636 = vadd.f32 0.0, %v3635
      %3637 = vdwg.mxu0
      %v3638 = vadd.f32 %v3479, %v3543
      %v3639 = vadd.f32 %v3480, %v3546
      %v3640 = vadd.f32 %v3481, %v3549
      %v3641 = vadd.f32 %v3482, %v3552
      %v3642 = vadd.f32 %v3483, %v3555
      %v3643 = vadd.f32 %v3484, %v3558
      %v3644 = vadd.f32 %v3485, %v3561
      %v3645 = vadd.f32 %v3486, %v3564
      %v3646 = vadd.f32 %v3487, %v3567
      %v3647 = vadd.f32 %v3488, %v3570
      %v3648 = vadd.f32 %v3489, %v3573
      %v3649 = vadd.f32 %v3490, %v3576
      %v3650 = vadd.f32 %v3491, %v3579
      %v3651 = vadd.f32 %v3492, %v3582
      %v3652 = vadd.f32 %v3493, %v3585
      %v3653 = vadd.f32 %v3494, %v3588
      %v3654 = vadd.f32 %v3495, %v3591
      %v3655 = vadd.f32 %v3496, %v3594
      %v3656 = vadd.f32 %v3497, %v3597
      %v3657 = vadd.f32 %v3498, %v3600
      %v3658 = vadd.f32 %v3499, %v3603
      %v3659 = vadd.f32 %v3500, %v3606
      %v3660 = vadd.f32 %v3501, %v3609
      %v3661 = vadd.f32 %v3502, %v3612
      %v3662 = vadd.f32 %v3503, %v3615
      %v3663 = vadd.f32 %v3504, %v3618
      %v3664 = vadd.f32 %v3505, %v3621
      %v3665 = vadd.f32 %v3506, %v3624
      %v3666 = vadd.f32 %v3507, %v3627
      %v3667 = vadd.f32 %v3508, %v3630
      %v3668 = vadd.f32 %v3509, %v3633
      %v3669 = vadd.f32 %v3510, %v3636
      %v3670 = vrot.slane %v225, 3
      %v3671 = vrot.slane %v226, 3
      %v3672 = vsel %vm1020, %v3670, %v3671
      %v3673 = vrot.slane %v227, 3
      %v3674 = vsel %vm1020, %v3671, %v3673
      %s3675 = scalar_lea.vmem %s1, 72
      %v3676 = vld [vmem:[%s3675] sm:$0xf]
      %v3677 = vsel %vm363, %v3672, 0
      %v3679 = vsel %vm363, %v3674, 0
      %v3682 = vsel %vm428, %v3676, 0
      %3684 = vmatpush.msra.mxu0 0.0
      %3685 = vmatpush.msra.mxu0 0.0
      %3686 = vmatpush.msra.mxu0 0.0
      %3687 = vmatpush.msra.mxu0 0.0
      %3688 = vmatpush.msra.mxu0 0.0
      %3689 = vmatpush.msra.mxu0 0.0
      %3690 = vmatpush.msra.mxu0 0.0
      %3691 = vmatpush.msra.mxu0 0.0
      %3692 = vmatpush.msra.mxu0 0.0
      %3693 = vmatpush.msra.mxu0 0.0
      %3694 = vmatpush.msra.mxu0 0.0
      %3695 = vmatpush.msra.mxu0 0.0
      %3696 = vmatpush.msra.mxu0 0.0
      %3697 = vmatpush.msra.mxu0 0.0
      %3698 = vmatpush.msra.mxu0 0.0
      %3699 = vmatpush.msra.mxu0 %v3682
      %3700 = vmatmul.f32.gmra.mxu0 %v1115
      %v3701 = vpop.f32.mrf.mxu0
      %v3702 = vadd.f32 0.0, %v3701
      %3703 = vmatmul.f32.gmra.mxu0 %v1117
      %v3704 = vpop.f32.mrf.mxu0
      %v3705 = vadd.f32 0.0, %v3704
      %3706 = vmatmul.f32.gmra.mxu0 %v1119
      %v3707 = vpop.f32.mrf.mxu0
      %v3708 = vadd.f32 0.0, %v3707
      %3709 = vmatmul.f32.gmra.mxu0 %v1121
      %v3710 = vpop.f32.mrf.mxu0
      %v3711 = vadd.f32 0.0, %v3710
      %3712 = vmatmul.f32.gmra.mxu0 %v1123
      %v3713 = vpop.f32.mrf.mxu0
      %v3714 = vadd.f32 0.0, %v3713
      %3715 = vmatmul.f32.gmra.mxu0 %v1125
      %v3716 = vpop.f32.mrf.mxu0
      %v3717 = vadd.f32 0.0, %v3716
      %3718 = vmatmul.f32.gmra.mxu0 %v1127
      %v3719 = vpop.f32.mrf.mxu0
      %v3720 = vadd.f32 0.0, %v3719
      %3721 = vmatmul.f32.gmra.mxu0 %v1129
      %v3722 = vpop.f32.mrf.mxu0
      %v3723 = vadd.f32 0.0, %v3722
      %3724 = vmatmul.f32.gmra.mxu0 %v1131
      %v3725 = vpop.f32.mrf.mxu0
      %v3726 = vadd.f32 0.0, %v3725
      %3727 = vmatmul.f32.gmra.mxu0 %v1133
      %v3728 = vpop.f32.mrf.mxu0
      %v3729 = vadd.f32 0.0, %v3728
      %3730 = vmatmul.f32.gmra.mxu0 %v1135
      %v3731 = vpop.f32.mrf.mxu0
      %v3732 = vadd.f32 0.0, %v3731
      %3733 = vmatmul.f32.gmra.mxu0 %v1137
      %v3734 = vpop.f32.mrf.mxu0
      %v3735 = vadd.f32 0.0, %v3734
      %3736 = vmatmul.f32.gmra.mxu0 %v1139
      %v3737 = vpop.f32.mrf.mxu0
      %v3738 = vadd.f32 0.0, %v3737
      %3739 = vmatmul.f32.gmra.mxu0 %v1141
      %v3740 = vpop.f32.mrf.mxu0
      %v3741 = vadd.f32 0.0, %v3740
      %3742 = vmatmul.f32.gmra.mxu0 %v1143
      %v3743 = vpop.f32.mrf.mxu0
      %v3744 = vadd.f32 0.0, %v3743
      %3745 = vmatmul.f32.gmra.mxu0 %v1145
      %v3746 = vpop.f32.mrf.mxu0
      %v3747 = vadd.f32 0.0, %v3746
      %3748 = vmatmul.f32.gmra.mxu0 %v1147
      %v3749 = vpop.f32.mrf.mxu0
      %v3750 = vadd.f32 0.0, %v3749
      %3751 = vmatmul.f32.gmra.mxu0 %v1149
      %v3752 = vpop.f32.mrf.mxu0
      %v3753 = vadd.f32 0.0, %v3752
      %3754 = vmatmul.f32.gmra.mxu0 %v1151
      %v3755 = vpop.f32.mrf.mxu0
      %v3756 = vadd.f32 0.0, %v3755
      %3757 = vmatmul.f32.gmra.mxu0 %v1153
      %v3758 = vpop.f32.mrf.mxu0
      %v3759 = vadd.f32 0.0, %v3758
      %3760 = vmatmul.f32.gmra.mxu0 %v1155
      %v3761 = vpop.f32.mrf.mxu0
      %v3762 = vadd.f32 0.0, %v3761
      %3763 = vmatmul.f32.gmra.mxu0 %v1157
      %v3764 = vpop.f32.mrf.mxu0
      %v3765 = vadd.f32 0.0, %v3764
      %3766 = vmatmul.f32.gmra.mxu0 %v1159
      %v3767 = vpop.f32.mrf.mxu0
      %v3768 = vadd.f32 0.0, %v3767
      %3769 = vmatmul.f32.gmra.mxu0 %v1161
      %v3770 = vpop.f32.mrf.mxu0
      %v3771 = vadd.f32 0.0, %v3770
      %3772 = vmatmul.f32.gmra.mxu0 %v1163
      %v3773 = vpop.f32.mrf.mxu0
      %v3774 = vadd.f32 0.0, %v3773
      %3775 = vmatmul.f32.gmra.mxu0 %v1165
      %v3776 = vpop.f32.mrf.mxu0
      %v3777 = vadd.f32 0.0, %v3776
      %3778 = vmatmul.f32.gmra.mxu0 %v2091
      %v3779 = vpop.f32.mrf.mxu0
      %v3780 = vadd.f32 0.0, %v3779
      %3781 = vmatmul.f32.gmra.mxu0 %v2093
      %v3782 = vpop.f32.mrf.mxu0
      %v3783 = vadd.f32 0.0, %v3782
      %3784 = vmatmul.f32.gmra.mxu0 %v2884
      %v3785 = vpop.f32.mrf.mxu0
      %v3786 = vadd.f32 0.0, %v3785
      %3787 = vmatmul.f32.gmra.mxu0 %v2886
      %v3788 = vpop.f32.mrf.mxu0
      %v3789 = vadd.f32 0.0, %v3788
      %3790 = vmatmul.f32.gmra.mxu0 %v3677
      %v3791 = vpop.f32.mrf.mxu0
      %v3792 = vadd.f32 0.0, %v3791
      %3793 = vmatmul.f32.gmra.mxu0 %v3679
      %v3794 = vpop.f32.mrf.mxu0
      %v3795 = vadd.f32 0.0, %v3794
      %3796 = vdwg.mxu0
      %v3797 = vadd.f32 %v3638, %v3702
      %v3798 = vadd.f32 %v3639, %v3705
      %v3799 = vadd.f32 %v3640, %v3708
      %v3800 = vadd.f32 %v3641, %v3711
      %v3801 = vadd.f32 %v3642, %v3714
      %v3802 = vadd.f32 %v3643, %v3717
      %v3803 = vadd.f32 %v3644, %v3720
      %v3804 = vadd.f32 %v3645, %v3723
      %v3805 = vadd.f32 %v3646, %v3726
      %v3806 = vadd.f32 %v3647, %v3729
      %v3807 = vadd.f32 %v3648, %v3732
      %v3808 = vadd.f32 %v3649, %v3735
      %v3809 = vadd.f32 %v3650, %v3738
      %v3810 = vadd.f32 %v3651, %v3741
      %v3811 = vadd.f32 %v3652, %v3744
      %v3812 = vadd.f32 %v3653, %v3747
      %v3813 = vadd.f32 %v3654, %v3750
      %v3814 = vadd.f32 %v3655, %v3753
      %v3815 = vadd.f32 %v3656, %v3756
      %v3816 = vadd.f32 %v3657, %v3759
      %v3817 = vadd.f32 %v3658, %v3762
      %v3818 = vadd.f32 %v3659, %v3765
      %v3819 = vadd.f32 %v3660, %v3768
      %v3820 = vadd.f32 %v3661, %v3771
      %v3821 = vadd.f32 %v3662, %v3774
      %v3822 = vadd.f32 %v3663, %v3777
      %v3823 = vadd.f32 %v3664, %v3780
      %v3824 = vadd.f32 %v3665, %v3783
      %v3825 = vadd.f32 %v3666, %v3786
      %v3826 = vadd.f32 %v3667, %v3789
      %v3827 = vadd.f32 %v3668, %v3792
      %v3828 = vadd.f32 %v3669, %v3795
      %v3829 = vrot.slane %v225, 4
      %v3830 = vrot.slane %v226, 4
      %v3831 = vsel %vm428, %v3829, %v3830
      %v3832 = vrot.slane %v227, 4
      %v3833 = vsel %vm428, %v3830, %v3832
      %s3834 = scalar_lea.vmem %s1, 76
      %v3835 = vld [vmem:[%s3834] sm:$0xf]
      %v3836 = vsel %vm363, %v3831, 0
      %v3838 = vsel %vm363, %v3833, 0
      %v3841 = vsel %vm428, %v3835, 0
      %3843 = vmatpush.msra.mxu0 0.0
      %3844 = vmatpush.msra.mxu0 0.0
      %3845 = vmatpush.msra.mxu0 0.0
      %3846 = vmatpush.msra.mxu0 0.0
      %3847 = vmatpush.msra.mxu0 0.0
      %3848 = vmatpush.msra.mxu0 0.0
      %3849 = vmatpush.msra.mxu0 0.0
      %3850 = vmatpush.msra.mxu0 0.0
      %3851 = vmatpush.msra.mxu0 0.0
      %3852 = vmatpush.msra.mxu0 0.0
      %3853 = vmatpush.msra.mxu0 0.0
      %3854 = vmatpush.msra.mxu0 0.0
      %3855 = vmatpush.msra.mxu0 0.0
      %3856 = vmatpush.msra.mxu0 0.0
      %3857 = vmatpush.msra.mxu0 0.0
      %3858 = vmatpush.msra.mxu0 %v3841
      %3859 = vmatmul.f32.gmra.mxu0 %v1409
      %v3860 = vpop.f32.mrf.mxu0
      %v3861 = vadd.f32 0.0, %v3860
      %3862 = vmatmul.f32.gmra.mxu0 %v1411
      %v3863 = vpop.f32.mrf.mxu0
      %v3864 = vadd.f32 0.0, %v3863
      %3865 = vmatmul.f32.gmra.mxu0 %v1413
      %v3866 = vpop.f32.mrf.mxu0
      %v3867 = vadd.f32 0.0, %v3866
      %3868 = vmatmul.f32.gmra.mxu0 %v1415
      %v3869 = vpop.f32.mrf.mxu0
      %v3870 = vadd.f32 0.0, %v3869
      %3871 = vmatmul.f32.gmra.mxu0 %v1417
      %v3872 = vpop.f32.mrf.mxu0
      %v3873 = vadd.f32 0.0, %v3872
      %3874 = vmatmul.f32.gmra.mxu0 %v1419
      %v3875 = vpop.f32.mrf.mxu0
      %v3876 = vadd.f32 0.0, %v3875
      %3877 = vmatmul.f32.gmra.mxu0 %v1421
      %v3878 = vpop.f32.mrf.mxu0
      %v3879 = vadd.f32 0.0, %v3878
      %3880 = vmatmul.f32.gmra.mxu0 %v1423
      %v3881 = vpop.f32.mrf.mxu0
      %v3882 = vadd.f32 0.0, %v3881
      %3883 = vmatmul.f32.gmra.mxu0 %v1425
      %v3884 = vpop.f32.mrf.mxu0
      %v3885 = vadd.f32 0.0, %v3884
      %3886 = vmatmul.f32.gmra.mxu0 %v1427
      %v3887 = vpop.f32.mrf.mxu0
      %v3888 = vadd.f32 0.0, %v3887
      %3889 = vmatmul.f32.gmra.mxu0 %v1429
      %v3890 = vpop.f32.mrf.mxu0
      %v3891 = vadd.f32 0.0, %v3890
      %3892 = vmatmul.f32.gmra.mxu0 %v1431
      %v3893 = vpop.f32.mrf.mxu0
      %v3894 = vadd.f32 0.0, %v3893
      %3895 = vmatmul.f32.gmra.mxu0 %v1433
      %v3896 = vpop.f32.mrf.mxu0
      %v3897 = vadd.f32 0.0, %v3896
      %3898 = vmatmul.f32.gmra.mxu0 %v1435
      %v3899 = vpop.f32.mrf.mxu0
      %v3900 = vadd.f32 0.0, %v3899
      %3901 = vmatmul.f32.gmra.mxu0 %v1437
      %v3902 = vpop.f32.mrf.mxu0
      %v3903 = vadd.f32 0.0, %v3902
      %3904 = vmatmul.f32.gmra.mxu0 %v1439
      %v3905 = vpop.f32.mrf.mxu0
      %v3906 = vadd.f32 0.0, %v3905
      %3907 = vmatmul.f32.gmra.mxu0 %v1441
      %v3908 = vpop.f32.mrf.mxu0
      %v3909 = vadd.f32 0.0, %v3908
      %3910 = vmatmul.f32.gmra.mxu0 %v1443
      %v3911 = vpop.f32.mrf.mxu0
      %v3912 = vadd.f32 0.0, %v3911
      %3913 = vmatmul.f32.gmra.mxu0 %v1445
      %v3914 = vpop.f32.mrf.mxu0
      %v3915 = vadd.f32 0.0, %v3914
      %3916 = vmatmul.f32.gmra.mxu0 %v1447
      %v3917 = vpop.f32.mrf.mxu0
      %v3918 = vadd.f32 0.0, %v3917
      %3919 = vmatmul.f32.gmra.mxu0 %v1449
      %v3920 = vpop.f32.mrf.mxu0
      %v3921 = vadd.f32 0.0, %v3920
      %3922 = vmatmul.f32.gmra.mxu0 %v1451
      %v3923 = vpop.f32.mrf.mxu0
      %v3924 = vadd.f32 0.0, %v3923
      %3925 = vmatmul.f32.gmra.mxu0 %v1453
      %v3926 = vpop.f32.mrf.mxu0
      %v3927 = vadd.f32 0.0, %v3926
      %3928 = vmatmul.f32.gmra.mxu0 %v1455
      %v3929 = vpop.f32.mrf.mxu0
      %v3930 = vadd.f32 0.0, %v3929
      %3931 = vmatmul.f32.gmra.mxu0 %v1457
      %v3932 = vpop.f32.mrf.mxu0
      %v3933 = vadd.f32 0.0, %v3932
      %3934 = vmatmul.f32.gmra.mxu0 %v1459
      %v3935 = vpop.f32.mrf.mxu0
      %v3936 = vadd.f32 0.0, %v3935
      %3937 = vmatmul.f32.gmra.mxu0 %v2250
      %v3938 = vpop.f32.mrf.mxu0
      %v3939 = vadd.f32 0.0, %v3938
      %3940 = vmatmul.f32.gmra.mxu0 %v2252
      %v3941 = vpop.f32.mrf.mxu0
      %v3942 = vadd.f32 0.0, %v3941
      %3943 = vmatmul.f32.gmra.mxu0 %v3043
      %v3944 = vpop.f32.mrf.mxu0
      %v3945 = vadd.f32 0.0, %v3944
      %3946 = vmatmul.f32.gmra.mxu0 %v3045
      %v3947 = vpop.f32.mrf.mxu0
      %v3948 = vadd.f32 0.0, %v3947
      %3949 = vmatmul.f32.gmra.mxu0 %v3836
      %v3950 = vpop.f32.mrf.mxu0
      %v3951 = vadd.f32 0.0, %v3950
      %3952 = vmatmul.f32.gmra.mxu0 %v3838
      %v3953 = vpop.f32.mrf.mxu0
      %v3954 = vadd.f32 0.0, %v3953
      %3955 = vdwg.mxu0
      %v3956 = vadd.f32 %v3797, %v3861
      %v3957 = vadd.f32 %v3798, %v3864
      %v3958 = vadd.f32 %v3799, %v3867
      %v3959 = vadd.f32 %v3800, %v3870
      %v3960 = vadd.f32 %v3801, %v3873
      %v3961 = vadd.f32 %v3802, %v3876
      %v3962 = vadd.f32 %v3803, %v3879
      %v3963 = vadd.f32 %v3804, %v3882
      %v3964 = vadd.f32 %v3805, %v3885
      %v3965 = vadd.f32 %v3806, %v3888
      %v3966 = vadd.f32 %v3807, %v3891
      %v3967 = vadd.f32 %v3808, %v3894
      %v3968 = vadd.f32 %v3809, %v3897
      %v3969 = vadd.f32 %v3810, %v3900
      %v3970 = vadd.f32 %v3811, %v3903
      %v3971 = vadd.f32 %v3812, %v3906
      %v3972 = vadd.f32 %v3813, %v3909
      %v3973 = vadd.f32 %v3814, %v3912
      %v3974 = vadd.f32 %v3815, %v3915
      %v3975 = vadd.f32 %v3816, %v3918
      %v3976 = vadd.f32 %v3817, %v3921
      %v3977 = vadd.f32 %v3818, %v3924
      %v3978 = vadd.f32 %v3819, %v3927
      %v3979 = vadd.f32 %v3820, %v3930
      %v3980 = vadd.f32 %v3821, %v3933
      %v3981 = vadd.f32 %v3822, %v3936
      %v3982 = vadd.f32 %v3823, %v3939
      %v3983 = vadd.f32 %v3824, %v3942
      %v3984 = vadd.f32 %v3825, %v3945
      %v3985 = vadd.f32 %v3826, %v3948
      %v3986 = vadd.f32 %v3827, %v3951
      %v3987 = vadd.f32 %v3828, %v3954
      %s3988 = scalar_lea.vmem %s1, 80
      %v3989 = vld [vmem:[%s3988] sm:$0xf]
      %v3991 = vsel %vm363, %v228, 0
      %v3994 = vsel %vm363, %v229, 0
      %v3997 = vsel %vm428, %v3989, 0
      %3999 = vmatpush.msra.mxu0 0.0
      %4000 = vmatpush.msra.mxu0 0.0
      %4001 = vmatpush.msra.mxu0 0.0
      %4002 = vmatpush.msra.mxu0 0.0
      %4003 = vmatpush.msra.mxu0 0.0
      %4004 = vmatpush.msra.mxu0 0.0
      %4005 = vmatpush.msra.mxu0 0.0
      %4006 = vmatpush.msra.mxu0 0.0
      %4007 = vmatpush.msra.mxu0 0.0
      %4008 = vmatpush.msra.mxu0 0.0
      %4009 = vmatpush.msra.mxu0 0.0
      %4010 = vmatpush.msra.mxu0 0.0
      %4011 = vmatpush.msra.mxu0 0.0
      %4012 = vmatpush.msra.mxu0 0.0
      %4013 = vmatpush.msra.mxu0 0.0
      %4014 = vmatpush.msra.mxu0 %v3997
      %4015 = vmatmul.f32.gmra.mxu0 %v561
      %v4016 = vpop.f32.mrf.mxu0
      %v4017 = vadd.f32 0.0, %v4016
      %4018 = vmatmul.f32.gmra.mxu0 %v563
      %v4019 = vpop.f32.mrf.mxu0
      %v4020 = vadd.f32 0.0, %v4019
      %4021 = vmatmul.f32.gmra.mxu0 %v565
      %v4022 = vpop.f32.mrf.mxu0
      %v4023 = vadd.f32 0.0, %v4022
      %4024 = vmatmul.f32.gmra.mxu0 %v567
      %v4025 = vpop.f32.mrf.mxu0
      %v4026 = vadd.f32 0.0, %v4025
      %4027 = vmatmul.f32.gmra.mxu0 %v569
      %v4028 = vpop.f32.mrf.mxu0
      %v4029 = vadd.f32 0.0, %v4028
      %4030 = vmatmul.f32.gmra.mxu0 %v571
      %v4031 = vpop.f32.mrf.mxu0
      %v4032 = vadd.f32 0.0, %v4031
      %4033 = vmatmul.f32.gmra.mxu0 %v573
      %v4034 = vpop.f32.mrf.mxu0
      %v4035 = vadd.f32 0.0, %v4034
      %4036 = vmatmul.f32.gmra.mxu0 %v575
      %v4037 = vpop.f32.mrf.mxu0
      %v4038 = vadd.f32 0.0, %v4037
      %4039 = vmatmul.f32.gmra.mxu0 %v577
      %v4040 = vpop.f32.mrf.mxu0
      %v4041 = vadd.f32 0.0, %v4040
      %4042 = vmatmul.f32.gmra.mxu0 %v579
      %v4043 = vpop.f32.mrf.mxu0
      %v4044 = vadd.f32 0.0, %v4043
      %4045 = vmatmul.f32.gmra.mxu0 %v581
      %v4046 = vpop.f32.mrf.mxu0
      %v4047 = vadd.f32 0.0, %v4046
      %4048 = vmatmul.f32.gmra.mxu0 %v583
      %v4049 = vpop.f32.mrf.mxu0
      %v4050 = vadd.f32 0.0, %v4049
      %4051 = vmatmul.f32.gmra.mxu0 %v585
      %v4052 = vpop.f32.mrf.mxu0
      %v4053 = vadd.f32 0.0, %v4052
      %4054 = vmatmul.f32.gmra.mxu0 %v587
      %v4055 = vpop.f32.mrf.mxu0
      %v4056 = vadd.f32 0.0, %v4055
      %4057 = vmatmul.f32.gmra.mxu0 %v589
      %v4058 = vpop.f32.mrf.mxu0
      %v4059 = vadd.f32 0.0, %v4058
      %4060 = vmatmul.f32.gmra.mxu0 %v591
      %v4061 = vpop.f32.mrf.mxu0
      %v4062 = vadd.f32 0.0, %v4061
      %4063 = vmatmul.f32.gmra.mxu0 %v593
      %v4064 = vpop.f32.mrf.mxu0
      %v4065 = vadd.f32 0.0, %v4064
      %4066 = vmatmul.f32.gmra.mxu0 %v595
      %v4067 = vpop.f32.mrf.mxu0
      %v4068 = vadd.f32 0.0, %v4067
      %4069 = vmatmul.f32.gmra.mxu0 %v597
      %v4070 = vpop.f32.mrf.mxu0
      %v4071 = vadd.f32 0.0, %v4070
      %4072 = vmatmul.f32.gmra.mxu0 %v599
      %v4073 = vpop.f32.mrf.mxu0
      %v4074 = vadd.f32 0.0, %v4073
      %4075 = vmatmul.f32.gmra.mxu0 %v601
      %v4076 = vpop.f32.mrf.mxu0
      %v4077 = vadd.f32 0.0, %v4076
      %4078 = vmatmul.f32.gmra.mxu0 %v603
      %v4079 = vpop.f32.mrf.mxu0
      %v4080 = vadd.f32 0.0, %v4079
      %4081 = vmatmul.f32.gmra.mxu0 %v605
      %v4082 = vpop.f32.mrf.mxu0
      %v4083 = vadd.f32 0.0, %v4082
      %4084 = vmatmul.f32.gmra.mxu0 %v607
      %v4085 = vpop.f32.mrf.mxu0
      %v4086 = vadd.f32 0.0, %v4085
      %4087 = vmatmul.f32.gmra.mxu0 %v1612
      %v4088 = vpop.f32.mrf.mxu0
      %v4089 = vadd.f32 0.0, %v4088
      %4090 = vmatmul.f32.gmra.mxu0 %v1615
      %v4091 = vpop.f32.mrf.mxu0
      %v4092 = vadd.f32 0.0, %v4091
      %4093 = vmatmul.f32.gmra.mxu0 %v2405
      %v4094 = vpop.f32.mrf.mxu0
      %v4095 = vadd.f32 0.0, %v4094
      %4096 = vmatmul.f32.gmra.mxu0 %v2408
      %v4097 = vpop.f32.mrf.mxu0
      %v4098 = vadd.f32 0.0, %v4097
      %4099 = vmatmul.f32.gmra.mxu0 %v3198
      %v4100 = vpop.f32.mrf.mxu0
      %v4101 = vadd.f32 0.0, %v4100
      %4102 = vmatmul.f32.gmra.mxu0 %v3201
      %v4103 = vpop.f32.mrf.mxu0
      %v4104 = vadd.f32 0.0, %v4103
      %4105 = vmatmul.f32.gmra.mxu0 %v3991
      %v4106 = vpop.f32.mrf.mxu0
      %v4107 = vadd.f32 0.0, %v4106
      %4108 = vmatmul.f32.gmra.mxu0 %v3994
      %v4109 = vpop.f32.mrf.mxu0
      %v4110 = vadd.f32 0.0, %v4109
      %4111 = vdwg.mxu0
      %v4112 = vadd.f32 %v3956, %v4017
      %v4113 = vadd.f32 %v3957, %v4020
      %v4114 = vadd.f32 %v3958, %v4023
      %v4115 = vadd.f32 %v3959, %v4026
      %v4116 = vadd.f32 %v3960, %v4029
      %v4117 = vadd.f32 %v3961, %v4032
      %v4118 = vadd.f32 %v3962, %v4035
      %v4119 = vadd.f32 %v3963, %v4038
      %v4120 = vadd.f32 %v3964, %v4041
      %v4121 = vadd.f32 %v3965, %v4044
      %v4122 = vadd.f32 %v3966, %v4047
      %v4123 = vadd.f32 %v3967, %v4050
      %v4124 = vadd.f32 %v3968, %v4053
      %v4125 = vadd.f32 %v3969, %v4056
      %v4126 = vadd.f32 %v3970, %v4059
      %v4127 = vadd.f32 %v3971, %v4062
      %v4128 = vadd.f32 %v3972, %v4065
      %v4129 = vadd.f32 %v3973, %v4068
      %v4130 = vadd.f32 %v3974, %v4071
      %v4131 = vadd.f32 %v3975, %v4074
      %v4132 = vadd.f32 %v3976, %v4077
      %v4133 = vadd.f32 %v3977, %v4080
      %v4134 = vadd.f32 %v3978, %v4083
      %v4135 = vadd.f32 %v3979, %v4086
      %v4136 = vadd.f32 %v3980, %v4089
      %v4137 = vadd.f32 %v3981, %v4092
      %v4138 = vadd.f32 %v3982, %v4095
      %v4139 = vadd.f32 %v3983, %v4098
      %v4140 = vadd.f32 %v3984, %v4101
      %v4141 = vadd.f32 %v3985, %v4104
      %v4142 = vadd.f32 %v3986, %v4107
      %v4143 = vadd.f32 %v3987, %v4110
      %v4145 = vrot.slane %v228, 1
      %v4146 = vrot.slane %v229, 1
      %v4147 = vsel %vm280, %v4145, %v4146
      %v4148 = vrot.slane %v230, 1
      %v4149 = vsel %vm280, %v4146, %v4148
      %s4150 = scalar_lea.vmem %s1, 84
      %v4151 = vld [vmem:[%s4150] sm:$0xf]
      %v4152 = vsel %vm363, %v4147, 0
      %v4154 = vsel %vm363, %v4149, 0
      %v4157 = vsel %vm428, %v4151, 0
      %4159 = vmatpush.msra.mxu0 0.0
      %4160 = vmatpush.msra.mxu0 0.0
      %4161 = vmatpush.msra.mxu0 0.0
      %4162 = vmatpush.msra.mxu0 0.0
      %4163 = vmatpush.msra.mxu0 0.0
      %4164 = vmatpush.msra.mxu0 0.0
      %4165 = vmatpush.msra.mxu0 0.0
      %4166 = vmatpush.msra.mxu0 0.0
      %4167 = vmatpush.msra.mxu0 0.0
      %4168 = vmatpush.msra.mxu0 0.0
      %4169 = vmatpush.msra.mxu0 0.0
      %4170 = vmatpush.msra.mxu0 0.0
      %4171 = vmatpush.msra.mxu0 0.0
      %4172 = vmatpush.msra.mxu0 0.0
      %4173 = vmatpush.msra.mxu0 0.0
      %4174 = vmatpush.msra.mxu0 %v4157
      %4175 = vmatmul.f32.gmra.mxu0 %v380
      %v4176 = vpop.f32.mrf.mxu0
      %v4177 = vadd.f32 0.0, %v4176
      %4178 = vmatmul.f32.gmra.mxu0 %v382
      %v4179 = vpop.f32.mrf.mxu0
      %v4180 = vadd.f32 0.0, %v4179
      %4181 = vmatmul.f32.gmra.mxu0 %v384
      %v4182 = vpop.f32.mrf.mxu0
      %v4183 = vadd.f32 0.0, %v4182
      %4184 = vmatmul.f32.gmra.mxu0 %v386
      %v4185 = vpop.f32.mrf.mxu0
      %v4186 = vadd.f32 0.0, %v4185
      %4187 = vmatmul.f32.gmra.mxu0 %v388
      %v4188 = vpop.f32.mrf.mxu0
      %v4189 = vadd.f32 0.0, %v4188
      %4190 = vmatmul.f32.gmra.mxu0 %v390
      %v4191 = vpop.f32.mrf.mxu0
      %v4192 = vadd.f32 0.0, %v4191
      %4193 = vmatmul.f32.gmra.mxu0 %v392
      %v4194 = vpop.f32.mrf.mxu0
      %v4195 = vadd.f32 0.0, %v4194
      %4196 = vmatmul.f32.gmra.mxu0 %v394
      %v4197 = vpop.f32.mrf.mxu0
      %v4198 = vadd.f32 0.0, %v4197
      %4199 = vmatmul.f32.gmra.mxu0 %v396
      %v4200 = vpop.f32.mrf.mxu0
      %v4201 = vadd.f32 0.0, %v4200
      %4202 = vmatmul.f32.gmra.mxu0 %v398
      %v4203 = vpop.f32.mrf.mxu0
      %v4204 = vadd.f32 0.0, %v4203
      %4205 = vmatmul.f32.gmra.mxu0 %v400
      %v4206 = vpop.f32.mrf.mxu0
      %v4207 = vadd.f32 0.0, %v4206
      %4208 = vmatmul.f32.gmra.mxu0 %v402
      %v4209 = vpop.f32.mrf.mxu0
      %v4210 = vadd.f32 0.0, %v4209
      %4211 = vmatmul.f32.gmra.mxu0 %v404
      %v4212 = vpop.f32.mrf.mxu0
      %v4213 = vadd.f32 0.0, %v4212
      %4214 = vmatmul.f32.gmra.mxu0 %v406
      %v4215 = vpop.f32.mrf.mxu0
      %v4216 = vadd.f32 0.0, %v4215
      %4217 = vmatmul.f32.gmra.mxu0 %v408
      %v4218 = vpop.f32.mrf.mxu0
      %v4219 = vadd.f32 0.0, %v4218
      %4220 = vmatmul.f32.gmra.mxu0 %v410
      %v4221 = vpop.f32.mrf.mxu0
      %v4222 = vadd.f32 0.0, %v4221
      %4223 = vmatmul.f32.gmra.mxu0 %v412
      %v4224 = vpop.f32.mrf.mxu0
      %v4225 = vadd.f32 0.0, %v4224
      %4226 = vmatmul.f32.gmra.mxu0 %v414
      %v4227 = vpop.f32.mrf.mxu0
      %v4228 = vadd.f32 0.0, %v4227
      %4229 = vmatmul.f32.gmra.mxu0 %v416
      %v4230 = vpop.f32.mrf.mxu0
      %v4231 = vadd.f32 0.0, %v4230
      %4232 = vmatmul.f32.gmra.mxu0 %v418
      %v4233 = vpop.f32.mrf.mxu0
      %v4234 = vadd.f32 0.0, %v4233
      %4235 = vmatmul.f32.gmra.mxu0 %v420
      %v4236 = vpop.f32.mrf.mxu0
      %v4237 = vadd.f32 0.0, %v4236
      %4238 = vmatmul.f32.gmra.mxu0 %v422
      %v4239 = vpop.f32.mrf.mxu0
      %v4240 = vadd.f32 0.0, %v4239
      %4241 = vmatmul.f32.gmra.mxu0 %v424
      %v4242 = vpop.f32.mrf.mxu0
      %v4243 = vadd.f32 0.0, %v4242
      %4244 = vmatmul.f32.gmra.mxu0 %v426
      %v4245 = vpop.f32.mrf.mxu0
      %v4246 = vadd.f32 0.0, %v4245
      %4247 = vmatmul.f32.gmra.mxu0 %v1773
      %v4248 = vpop.f32.mrf.mxu0
      %v4249 = vadd.f32 0.0, %v4248
      %4250 = vmatmul.f32.gmra.mxu0 %v1775
      %v4251 = vpop.f32.mrf.mxu0
      %v4252 = vadd.f32 0.0, %v4251
      %4253 = vmatmul.f32.gmra.mxu0 %v2566
      %v4254 = vpop.f32.mrf.mxu0
      %v4255 = vadd.f32 0.0, %v4254
      %4256 = vmatmul.f32.gmra.mxu0 %v2568
      %v4257 = vpop.f32.mrf.mxu0
      %v4258 = vadd.f32 0.0, %v4257
      %4259 = vmatmul.f32.gmra.mxu0 %v3359
      %v4260 = vpop.f32.mrf.mxu0
      %v4261 = vadd.f32 0.0, %v4260
      %4262 = vmatmul.f32.gmra.mxu0 %v3361
      %v4263 = vpop.f32.mrf.mxu0
      %v4264 = vadd.f32 0.0, %v4263
      %4265 = vmatmul.f32.gmra.mxu0 %v4152
      %v4266 = vpop.f32.mrf.mxu0
      %v4267 = vadd.f32 0.0, %v4266
      %4268 = vmatmul.f32.gmra.mxu0 %v4154
      %v4269 = vpop.f32.mrf.mxu0
      %v4270 = vadd.f32 0.0, %v4269
      %4271 = vdwg.mxu0
      %v4272 = vadd.f32 %v4112, %v4177
      %v4273 = vadd.f32 %v4113, %v4180
      %v4274 = vadd.f32 %v4114, %v4183
      %v4275 = vadd.f32 %v4115, %v4186
      %v4276 = vadd.f32 %v4116, %v4189
      %v4277 = vadd.f32 %v4117, %v4192
      %v4278 = vadd.f32 %v4118, %v4195
      %v4279 = vadd.f32 %v4119, %v4198
      %v4280 = vadd.f32 %v4120, %v4201
      %v4281 = vadd.f32 %v4121, %v4204
      %v4282 = vadd.f32 %v4122, %v4207
      %v4283 = vadd.f32 %v4123, %v4210
      %v4284 = vadd.f32 %v4124, %v4213
      %v4285 = vadd.f32 %v4125, %v4216
      %v4286 = vadd.f32 %v4126, %v4219
      %v4287 = vadd.f32 %v4127, %v4222
      %v4288 = vadd.f32 %v4128, %v4225
      %v4289 = vadd.f32 %v4129, %v4228
      %v4290 = vadd.f32 %v4130, %v4231
      %v4291 = vadd.f32 %v4131, %v4234
      %v4292 = vadd.f32 %v4132, %v4237
      %v4293 = vadd.f32 %v4133, %v4240
      %v4294 = vadd.f32 %v4134, %v4243
      %v4295 = vadd.f32 %v4135, %v4246
      %v4296 = vadd.f32 %v4136, %v4249
      %v4297 = vadd.f32 %v4137, %v4252
      %v4298 = vadd.f32 %v4138, %v4255
      %v4299 = vadd.f32 %v4139, %v4258
      %v4300 = vadd.f32 %v4140, %v4261
      %v4301 = vadd.f32 %v4141, %v4264
      %v4302 = vadd.f32 %v4142, %v4267
      %v4303 = vadd.f32 %v4143, %v4270
      %v4304 = vrot.slane %v228, 2
      %v4305 = vrot.slane %v229, 2
      %v4306 = vsel %vm725, %v4304, %v4305
      %v4307 = vrot.slane %v230, 2
      %v4308 = vsel %vm725, %v4305, %v4307
      %s4309 = scalar_lea.vmem %s1, 88
      %v4310 = vld [vmem:[%s4309] sm:$0xf]
      %v4311 = vsel %vm363, %v4306, 0
      %v4313 = vsel %vm363, %v4308, 0
      %v4316 = vsel %vm428, %v4310, 0
      %4318 = vmatpush.msra.mxu0 0.0
      %4319 = vmatpush.msra.mxu0 0.0
      %4320 = vmatpush.msra.mxu0 0.0
      %4321 = vmatpush.msra.mxu0 0.0
      %4322 = vmatpush.msra.mxu0 0.0
      %4323 = vmatpush.msra.mxu0 0.0
      %4324 = vmatpush.msra.mxu0 0.0
      %4325 = vmatpush.msra.mxu0 0.0
      %4326 = vmatpush.msra.mxu0 0.0
      %4327 = vmatpush.msra.mxu0 0.0
      %4328 = vmatpush.msra.mxu0 0.0
      %4329 = vmatpush.msra.mxu0 0.0
      %4330 = vmatpush.msra.mxu0 0.0
      %4331 = vmatpush.msra.mxu0 0.0
      %4332 = vmatpush.msra.mxu0 0.0
      %4333 = vmatpush.msra.mxu0 %v4316
      %4334 = vmatmul.f32.gmra.mxu0 %v824
      %v4335 = vpop.f32.mrf.mxu0
      %v4336 = vadd.f32 0.0, %v4335
      %4337 = vmatmul.f32.gmra.mxu0 %v826
      %v4338 = vpop.f32.mrf.mxu0
      %v4339 = vadd.f32 0.0, %v4338
      %4340 = vmatmul.f32.gmra.mxu0 %v828
      %v4341 = vpop.f32.mrf.mxu0
      %v4342 = vadd.f32 0.0, %v4341
      %4343 = vmatmul.f32.gmra.mxu0 %v830
      %v4344 = vpop.f32.mrf.mxu0
      %v4345 = vadd.f32 0.0, %v4344
      %4346 = vmatmul.f32.gmra.mxu0 %v832
      %v4347 = vpop.f32.mrf.mxu0
      %v4348 = vadd.f32 0.0, %v4347
      %4349 = vmatmul.f32.gmra.mxu0 %v834
      %v4350 = vpop.f32.mrf.mxu0
      %v4351 = vadd.f32 0.0, %v4350
      %4352 = vmatmul.f32.gmra.mxu0 %v836
      %v4353 = vpop.f32.mrf.mxu0
      %v4354 = vadd.f32 0.0, %v4353
      %4355 = vmatmul.f32.gmra.mxu0 %v838
      %v4356 = vpop.f32.mrf.mxu0
      %v4357 = vadd.f32 0.0, %v4356
      %4358 = vmatmul.f32.gmra.mxu0 %v840
      %v4359 = vpop.f32.mrf.mxu0
      %v4360 = vadd.f32 0.0, %v4359
      %4361 = vmatmul.f32.gmra.mxu0 %v842
      %v4362 = vpop.f32.mrf.mxu0
      %v4363 = vadd.f32 0.0, %v4362
      %4364 = vmatmul.f32.gmra.mxu0 %v844
      %v4365 = vpop.f32.mrf.mxu0
      %v4366 = vadd.f32 0.0, %v4365
      %4367 = vmatmul.f32.gmra.mxu0 %v846
      %v4368 = vpop.f32.mrf.mxu0
      %v4369 = vadd.f32 0.0, %v4368
      %4370 = vmatmul.f32.gmra.mxu0 %v848
      %v4371 = vpop.f32.mrf.mxu0
      %v4372 = vadd.f32 0.0, %v4371
      %4373 = vmatmul.f32.gmra.mxu0 %v850
      %v4374 = vpop.f32.mrf.mxu0
      %v4375 = vadd.f32 0.0, %v4374
      %4376 = vmatmul.f32.gmra.mxu0 %v852
      %v4377 = vpop.f32.mrf.mxu0
      %v4378 = vadd.f32 0.0, %v4377
      %4379 = vmatmul.f32.gmra.mxu0 %v854
      %v4380 = vpop.f32.mrf.mxu0
      %v4381 = vadd.f32 0.0, %v4380
      %4382 = vmatmul.f32.gmra.mxu0 %v856
      %v4383 = vpop.f32.mrf.mxu0
      %v4384 = vadd.f32 0.0, %v4383
      %4385 = vmatmul.f32.gmra.mxu0 %v858
      %v4386 = vpop.f32.mrf.mxu0
      %v4387 = vadd.f32 0.0, %v4386
      %4388 = vmatmul.f32.gmra.mxu0 %v860
      %v4389 = vpop.f32.mrf.mxu0
      %v4390 = vadd.f32 0.0, %v4389
      %4391 = vmatmul.f32.gmra.mxu0 %v862
      %v4392 = vpop.f32.mrf.mxu0
      %v4393 = vadd.f32 0.0, %v4392
      %4394 = vmatmul.f32.gmra.mxu0 %v864
      %v4395 = vpop.f32.mrf.mxu0
      %v4396 = vadd.f32 0.0, %v4395
      %4397 = vmatmul.f32.gmra.mxu0 %v866
      %v4398 = vpop.f32.mrf.mxu0
      %v4399 = vadd.f32 0.0, %v4398
      %4400 = vmatmul.f32.gmra.mxu0 %v868
      %v4401 = vpop.f32.mrf.mxu0
      %v4402 = vadd.f32 0.0, %v4401
      %4403 = vmatmul.f32.gmra.mxu0 %v870
      %v4404 = vpop.f32.mrf.mxu0
      %v4405 = vadd.f32 0.0, %v4404
      %4406 = vmatmul.f32.gmra.mxu0 %v1932
      %v4407 = vpop.f32.mrf.mxu0
      %v4408 = vadd.f32 0.0, %v4407
      %4409 = vmatmul.f32.gmra.mxu0 %v1934
      %v4410 = vpop.f32.mrf.mxu0
      %v4411 = vadd.f32 0.0, %v4410
      %4412 = vmatmul.f32.gmra.mxu0 %v2725
      %v4413 = vpop.f32.mrf.mxu0
      %v4414 = vadd.f32 0.0, %v4413
      %4415 = vmatmul.f32.gmra.mxu0 %v2727
      %v4416 = vpop.f32.mrf.mxu0
      %v4417 = vadd.f32 0.0, %v4416
      %4418 = vmatmul.f32.gmra.mxu0 %v3518
      %v4419 = vpop.f32.mrf.mxu0
      %v4420 = vadd.f32 0.0, %v4419
      %4421 = vmatmul.f32.gmra.mxu0 %v3520
      %v4422 = vpop.f32.mrf.mxu0
      %v4423 = vadd.f32 0.0, %v4422
      %4424 = vmatmul.f32.gmra.mxu0 %v4311
      %v4425 = vpop.f32.mrf.mxu0
      %v4426 = vadd.f32 0.0, %v4425
      %4427 = vmatmul.f32.gmra.mxu0 %v4313
      %v4428 = vpop.f32.mrf.mxu0
      %v4429 = vadd.f32 0.0, %v4428
      %4430 = vdwg.mxu0
      %v4431 = vadd.f32 %v4272, %v4336
      %v4432 = vadd.f32 %v4273, %v4339
      %v4433 = vadd.f32 %v4274, %v4342
      %v4434 = vadd.f32 %v4275, %v4345
      %v4435 = vadd.f32 %v4276, %v4348
      %v4436 = vadd.f32 %v4277, %v4351
      %v4437 = vadd.f32 %v4278, %v4354
      %v4438 = vadd.f32 %v4279, %v4357
      %v4439 = vadd.f32 %v4280, %v4360
      %v4440 = vadd.f32 %v4281, %v4363
      %v4441 = vadd.f32 %v4282, %v4366
      %v4442 = vadd.f32 %v4283, %v4369
      %v4443 = vadd.f32 %v4284, %v4372
      %v4444 = vadd.f32 %v4285, %v4375
      %v4445 = vadd.f32 %v4286, %v4378
      %v4446 = vadd.f32 %v4287, %v4381
      %v4447 = vadd.f32 %v4288, %v4384
      %v4448 = vadd.f32 %v4289, %v4387
      %v4449 = vadd.f32 %v4290, %v4390
      %v4450 = vadd.f32 %v4291, %v4393
      %v4451 = vadd.f32 %v4292, %v4396
      %v4452 = vadd.f32 %v4293, %v4399
      %v4453 = vadd.f32 %v4294, %v4402
      %v4454 = vadd.f32 %v4295, %v4405
      %v4455 = vadd.f32 %v4296, %v4408
      %v4456 = vadd.f32 %v4297, %v4411
      %v4457 = vadd.f32 %v4298, %v4414
      %v4458 = vadd.f32 %v4299, %v4417
      %v4459 = vadd.f32 %v4300, %v4420
      %v4460 = vadd.f32 %v4301, %v4423
      %v4461 = vadd.f32 %v4302, %v4426
      %v4462 = vadd.f32 %v4303, %v4429
      %v4463 = vrot.slane %v228, 3
      %v4464 = vrot.slane %v229, 3
      %v4465 = vsel %vm1020, %v4463, %v4464
      %v4466 = vrot.slane %v230, 3
      %v4467 = vsel %vm1020, %v4464, %v4466
      %s4468 = scalar_lea.vmem %s1, 92
      %v4469 = vld [vmem:[%s4468] sm:$0xf]
      %v4470 = vsel %vm363, %v4465, 0
      %v4472 = vsel %vm363, %v4467, 0
      %v4475 = vsel %vm428, %v4469, 0
      %4477 = vmatpush.msra.mxu0 0.0
      %4478 = vmatpush.msra.mxu0 0.0
      %4479 = vmatpush.msra.mxu0 0.0
      %4480 = vmatpush.msra.mxu0 0.0
      %4481 = vmatpush.msra.mxu0 0.0
      %4482 = vmatpush.msra.mxu0 0.0
      %4483 = vmatpush.msra.mxu0 0.0
      %4484 = vmatpush.msra.mxu0 0.0
      %4485 = vmatpush.msra.mxu0 0.0
      %4486 = vmatpush.msra.mxu0 0.0
      %4487 = vmatpush.msra.mxu0 0.0
      %4488 = vmatpush.msra.mxu0 0.0
      %4489 = vmatpush.msra.mxu0 0.0
      %4490 = vmatpush.msra.mxu0 0.0
      %4491 = vmatpush.msra.mxu0 0.0
      %4492 = vmatpush.msra.mxu0 %v4475
      %4493 = vmatmul.f32.gmra.mxu0 %v1119
      %v4494 = vpop.f32.mrf.mxu0
      %v4495 = vadd.f32 0.0, %v4494
      %4496 = vmatmul.f32.gmra.mxu0 %v1121
      %v4497 = vpop.f32.mrf.mxu0
      %v4498 = vadd.f32 0.0, %v4497
      %4499 = vmatmul.f32.gmra.mxu0 %v1123
      %v4500 = vpop.f32.mrf.mxu0
      %v4501 = vadd.f32 0.0, %v4500
      %4502 = vmatmul.f32.gmra.mxu0 %v1125
      %v4503 = vpop.f32.mrf.mxu0
      %v4504 = vadd.f32 0.0, %v4503
      %4505 = vmatmul.f32.gmra.mxu0 %v1127
      %v4506 = vpop.f32.mrf.mxu0
      %v4507 = vadd.f32 0.0, %v4506
      %4508 = vmatmul.f32.gmra.mxu0 %v1129
      %v4509 = vpop.f32.mrf.mxu0
      %v4510 = vadd.f32 0.0, %v4509
      %4511 = vmatmul.f32.gmra.mxu0 %v1131
      %v4512 = vpop.f32.mrf.mxu0
      %v4513 = vadd.f32 0.0, %v4512
      %4514 = vmatmul.f32.gmra.mxu0 %v1133
      %v4515 = vpop.f32.mrf.mxu0
      %v4516 = vadd.f32 0.0, %v4515
      %4517 = vmatmul.f32.gmra.mxu0 %v1135
      %v4518 = vpop.f32.mrf.mxu0
      %v4519 = vadd.f32 0.0, %v4518
      %4520 = vmatmul.f32.gmra.mxu0 %v1137
      %v4521 = vpop.f32.mrf.mxu0
      %v4522 = vadd.f32 0.0, %v4521
      %4523 = vmatmul.f32.gmra.mxu0 %v1139
      %v4524 = vpop.f32.mrf.mxu0
      %v4525 = vadd.f32 0.0, %v4524
      %4526 = vmatmul.f32.gmra.mxu0 %v1141
      %v4527 = vpop.f32.mrf.mxu0
      %v4528 = vadd.f32 0.0, %v4527
      %4529 = vmatmul.f32.gmra.mxu0 %v1143
      %v4530 = vpop.f32.mrf.mxu0
      %v4531 = vadd.f32 0.0, %v4530
      %4532 = vmatmul.f32.gmra.mxu0 %v1145
      %v4533 = vpop.f32.mrf.mxu0
      %v4534 = vadd.f32 0.0, %v4533
      %4535 = vmatmul.f32.gmra.mxu0 %v1147
      %v4536 = vpop.f32.mrf.mxu0
      %v4537 = vadd.f32 0.0, %v4536
      %4538 = vmatmul.f32.gmra.mxu0 %v1149
      %v4539 = vpop.f32.mrf.mxu0
      %v4540 = vadd.f32 0.0, %v4539
      %4541 = vmatmul.f32.gmra.mxu0 %v1151
      %v4542 = vpop.f32.mrf.mxu0
      %v4543 = vadd.f32 0.0, %v4542
      %4544 = vmatmul.f32.gmra.mxu0 %v1153
      %v4545 = vpop.f32.mrf.mxu0
      %v4546 = vadd.f32 0.0, %v4545
      %4547 = vmatmul.f32.gmra.mxu0 %v1155
      %v4548 = vpop.f32.mrf.mxu0
      %v4549 = vadd.f32 0.0, %v4548
      %4550 = vmatmul.f32.gmra.mxu0 %v1157
      %v4551 = vpop.f32.mrf.mxu0
      %v4552 = vadd.f32 0.0, %v4551
      %4553 = vmatmul.f32.gmra.mxu0 %v1159
      %v4554 = vpop.f32.mrf.mxu0
      %v4555 = vadd.f32 0.0, %v4554
      %4556 = vmatmul.f32.gmra.mxu0 %v1161
      %v4557 = vpop.f32.mrf.mxu0
      %v4558 = vadd.f32 0.0, %v4557
      %4559 = vmatmul.f32.gmra.mxu0 %v1163
      %v4560 = vpop.f32.mrf.mxu0
      %v4561 = vadd.f32 0.0, %v4560
      %4562 = vmatmul.f32.gmra.mxu0 %v1165
      %v4563 = vpop.f32.mrf.mxu0
      %v4564 = vadd.f32 0.0, %v4563
      %4565 = vmatmul.f32.gmra.mxu0 %v2091
      %v4566 = vpop.f32.mrf.mxu0
      %v4567 = vadd.f32 0.0, %v4566
      %4568 = vmatmul.f32.gmra.mxu0 %v2093
      %v4569 = vpop.f32.mrf.mxu0
      %v4570 = vadd.f32 0.0, %v4569
      %4571 = vmatmul.f32.gmra.mxu0 %v2884
      %v4572 = vpop.f32.mrf.mxu0
      %v4573 = vadd.f32 0.0, %v4572
      %4574 = vmatmul.f32.gmra.mxu0 %v2886
      %v4575 = vpop.f32.mrf.mxu0
      %v4576 = vadd.f32 0.0, %v4575
      %4577 = vmatmul.f32.gmra.mxu0 %v3677
      %v4578 = vpop.f32.mrf.mxu0
      %v4579 = vadd.f32 0.0, %v4578
      %4580 = vmatmul.f32.gmra.mxu0 %v3679
      %v4581 = vpop.f32.mrf.mxu0
      %v4582 = vadd.f32 0.0, %v4581
      %4583 = vmatmul.f32.gmra.mxu0 %v4470
      %v4584 = vpop.f32.mrf.mxu0
      %v4585 = vadd.f32 0.0, %v4584
      %4586 = vmatmul.f32.gmra.mxu0 %v4472
      %v4587 = vpop.f32.mrf.mxu0
      %v4588 = vadd.f32 0.0, %v4587
      %4589 = vdwg.mxu0
      %v4590 = vadd.f32 %v4431, %v4495
      %v4591 = vadd.f32 %v4432, %v4498
      %v4592 = vadd.f32 %v4433, %v4501
      %v4593 = vadd.f32 %v4434, %v4504
      %v4594 = vadd.f32 %v4435, %v4507
      %v4595 = vadd.f32 %v4436, %v4510
      %v4596 = vadd.f32 %v4437, %v4513
      %v4597 = vadd.f32 %v4438, %v4516
      %v4598 = vadd.f32 %v4439, %v4519
      %v4599 = vadd.f32 %v4440, %v4522
      %v4600 = vadd.f32 %v4441, %v4525
      %v4601 = vadd.f32 %v4442, %v4528
      %v4602 = vadd.f32 %v4443, %v4531
      %v4603 = vadd.f32 %v4444, %v4534
      %v4604 = vadd.f32 %v4445, %v4537
      %v4605 = vadd.f32 %v4446, %v4540
      %v4606 = vadd.f32 %v4447, %v4543
      %v4607 = vadd.f32 %v4448, %v4546
      %v4608 = vadd.f32 %v4449, %v4549
      %v4609 = vadd.f32 %v4450, %v4552
      %v4610 = vadd.f32 %v4451, %v4555
      %v4611 = vadd.f32 %v4452, %v4558
      %v4612 = vadd.f32 %v4453, %v4561
      %v4613 = vadd.f32 %v4454, %v4564
      %v4614 = vadd.f32 %v4455, %v4567
      %v4615 = vadd.f32 %v4456, %v4570
      %v4616 = vadd.f32 %v4457, %v4573
      %v4617 = vadd.f32 %v4458, %v4576
      %v4618 = vadd.f32 %v4459, %v4579
      %v4619 = vadd.f32 %v4460, %v4582
      %v4620 = vadd.f32 %v4461, %v4585
      %v4621 = vadd.f32 %v4462, %v4588
      %v4622 = vrot.slane %v228, 4
      %v4623 = vrot.slane %v229, 4
      %v4624 = vsel %vm428, %v4622, %v4623
      %v4625 = vrot.slane %v230, 4
      %v4626 = vsel %vm428, %v4623, %v4625
      %s4627 = scalar_lea.vmem %s1, 96
      %v4628 = vld [vmem:[%s4627] sm:$0xf]
      %v4629 = vsel %vm363, %v4624, 0
      %v4631 = vsel %vm363, %v4626, 0
      %v4634 = vsel %vm428, %v4628, 0
      %4636 = vmatpush.msra.mxu0 0.0
      %4637 = vmatpush.msra.mxu0 0.0
      %4638 = vmatpush.msra.mxu0 0.0
      %4639 = vmatpush.msra.mxu0 0.0
      %4640 = vmatpush.msra.mxu0 0.0
      %4641 = vmatpush.msra.mxu0 0.0
      %4642 = vmatpush.msra.mxu0 0.0
      %4643 = vmatpush.msra.mxu0 0.0
      %4644 = vmatpush.msra.mxu0 0.0
      %4645 = vmatpush.msra.mxu0 0.0
      %4646 = vmatpush.msra.mxu0 0.0
      %4647 = vmatpush.msra.mxu0 0.0
      %4648 = vmatpush.msra.mxu0 0.0
      %4649 = vmatpush.msra.mxu0 0.0
      %4650 = vmatpush.msra.mxu0 0.0
      %4651 = vmatpush.msra.mxu0 %v4634
      %4652 = vmatmul.f32.gmra.mxu0 %v1413
      %v4653 = vpop.f32.mrf.mxu0
      %v4654 = vadd.f32 0.0, %v4653
      %4655 = vmatmul.f32.gmra.mxu0 %v1415
      %v4656 = vpop.f32.mrf.mxu0
      %v4657 = vadd.f32 0.0, %v4656
      %4658 = vmatmul.f32.gmra.mxu0 %v1417
      %v4659 = vpop.f32.mrf.mxu0
      %v4660 = vadd.f32 0.0, %v4659
      %4661 = vmatmul.f32.gmra.mxu0 %v1419
      %v4662 = vpop.f32.mrf.mxu0
      %v4663 = vadd.f32 0.0, %v4662
      %4664 = vmatmul.f32.gmra.mxu0 %v1421
      %v4665 = vpop.f32.mrf.mxu0
      %v4666 = vadd.f32 0.0, %v4665
      %4667 = vmatmul.f32.gmra.mxu0 %v1423
      %v4668 = vpop.f32.mrf.mxu0
      %v4669 = vadd.f32 0.0, %v4668
      %4670 = vmatmul.f32.gmra.mxu0 %v1425
      %v4671 = vpop.f32.mrf.mxu0
      %v4672 = vadd.f32 0.0, %v4671
      %4673 = vmatmul.f32.gmra.mxu0 %v1427
      %v4674 = vpop.f32.mrf.mxu0
      %v4675 = vadd.f32 0.0, %v4674
      %4676 = vmatmul.f32.gmra.mxu0 %v1429
      %v4677 = vpop.f32.mrf.mxu0
      %v4678 = vadd.f32 0.0, %v4677
      %4679 = vmatmul.f32.gmra.mxu0 %v1431
      %v4680 = vpop.f32.mrf.mxu0
      %v4681 = vadd.f32 0.0, %v4680
      %4682 = vmatmul.f32.gmra.mxu0 %v1433
      %v4683 = vpop.f32.mrf.mxu0
      %v4684 = vadd.f32 0.0, %v4683
      %4685 = vmatmul.f32.gmra.mxu0 %v1435
      %v4686 = vpop.f32.mrf.mxu0
      %v4687 = vadd.f32 0.0, %v4686
      %4688 = vmatmul.f32.gmra.mxu0 %v1437
      %v4689 = vpop.f32.mrf.mxu0
      %v4690 = vadd.f32 0.0, %v4689
      %4691 = vmatmul.f32.gmra.mxu0 %v1439
      %v4692 = vpop.f32.mrf.mxu0
      %v4693 = vadd.f32 0.0, %v4692
      %4694 = vmatmul.f32.gmra.mxu0 %v1441
      %v4695 = vpop.f32.mrf.mxu0
      %v4696 = vadd.f32 0.0, %v4695
      %4697 = vmatmul.f32.gmra.mxu0 %v1443
      %v4698 = vpop.f32.mrf.mxu0
      %v4699 = vadd.f32 0.0, %v4698
      %4700 = vmatmul.f32.gmra.mxu0 %v1445
      %v4701 = vpop.f32.mrf.mxu0
      %v4702 = vadd.f32 0.0, %v4701
      %4703 = vmatmul.f32.gmra.mxu0 %v1447
      %v4704 = vpop.f32.mrf.mxu0
      %v4705 = vadd.f32 0.0, %v4704
      %4706 = vmatmul.f32.gmra.mxu0 %v1449
      %v4707 = vpop.f32.mrf.mxu0
      %v4708 = vadd.f32 0.0, %v4707
      %4709 = vmatmul.f32.gmra.mxu0 %v1451
      %v4710 = vpop.f32.mrf.mxu0
      %v4711 = vadd.f32 0.0, %v4710
      %4712 = vmatmul.f32.gmra.mxu0 %v1453
      %v4713 = vpop.f32.mrf.mxu0
      %v4714 = vadd.f32 0.0, %v4713
      %4715 = vmatmul.f32.gmra.mxu0 %v1455
      %v4716 = vpop.f32.mrf.mxu0
      %v4717 = vadd.f32 0.0, %v4716
      %4718 = vmatmul.f32.gmra.mxu0 %v1457
      %v4719 = vpop.f32.mrf.mxu0
      %v4720 = vadd.f32 0.0, %v4719
      %4721 = vmatmul.f32.gmra.mxu0 %v1459
      %v4722 = vpop.f32.mrf.mxu0
      %v4723 = vadd.f32 0.0, %v4722
      %4724 = vmatmul.f32.gmra.mxu0 %v2250
      %v4725 = vpop.f32.mrf.mxu0
      %v4726 = vadd.f32 0.0, %v4725
      %4727 = vmatmul.f32.gmra.mxu0 %v2252
      %v4728 = vpop.f32.mrf.mxu0
      %v4729 = vadd.f32 0.0, %v4728
      %4730 = vmatmul.f32.gmra.mxu0 %v3043
      %v4731 = vpop.f32.mrf.mxu0
      %v4732 = vadd.f32 0.0, %v4731
      %4733 = vmatmul.f32.gmra.mxu0 %v3045
      %v4734 = vpop.f32.mrf.mxu0
      %v4735 = vadd.f32 0.0, %v4734
      %4736 = vmatmul.f32.gmra.mxu0 %v3836
      %v4737 = vpop.f32.mrf.mxu0
      %v4738 = vadd.f32 0.0, %v4737
      %4739 = vmatmul.f32.gmra.mxu0 %v3838
      %v4740 = vpop.f32.mrf.mxu0
      %v4741 = vadd.f32 0.0, %v4740
      %4742 = vmatmul.f32.gmra.mxu0 %v4629
      %v4743 = vpop.f32.mrf.mxu0
      %v4744 = vadd.f32 0.0, %v4743
      %4745 = vmatmul.f32.gmra.mxu0 %v4631
      %v4746 = vpop.f32.mrf.mxu0
      %v4747 = vadd.f32 0.0, %v4746
      %4748 = vdwg.mxu0
      %v4749 = vadd.f32 %v4590, %v4654
      %v4750 = vadd.f32 %v4591, %v4657
      %v4751 = vadd.f32 %v4592, %v4660
      %v4752 = vadd.f32 %v4593, %v4663
      %v4753 = vadd.f32 %v4594, %v4666
      %v4754 = vadd.f32 %v4595, %v4669
      %v4755 = vadd.f32 %v4596, %v4672
      %v4756 = vadd.f32 %v4597, %v4675
      %v4757 = vadd.f32 %v4598, %v4678
      %v4758 = vadd.f32 %v4599, %v4681
      %v4759 = vadd.f32 %v4600, %v4684
      %v4760 = vadd.f32 %v4601, %v4687
      %v4761 = vadd.f32 %v4602, %v4690
      %v4762 = vadd.f32 %v4603, %v4693
      %v4763 = vadd.f32 %v4604, %v4696
      %v4764 = vadd.f32 %v4605, %v4699
      %v4765 = vadd.f32 %v4606, %v4702
      %v4766 = vadd.f32 %v4607, %v4705
      %v4767 = vadd.f32 %v4608, %v4708
      %v4768 = vadd.f32 %v4609, %v4711
      %v4769 = vadd.f32 %v4610, %v4714
      %v4770 = vadd.f32 %v4611, %v4717
      %v4771 = vadd.f32 %v4612, %v4720
      %v4772 = vadd.f32 %v4613, %v4723
      %v4773 = vadd.f32 %v4614, %v4726
      %v4774 = vadd.f32 %v4615, %v4729
      %v4775 = vadd.f32 %v4616, %v4732
      %v4776 = vadd.f32 %v4617, %v4735
      %v4777 = vadd.f32 %v4618, %v4738
      %v4778 = vadd.f32 %v4619, %v4741
      %v4779 = vadd.f32 %v4620, %v4744
      %v4780 = vadd.f32 %v4621, %v4747
      %v4781 = vld [vmem:[%s2] sm:$0x1]
      %v4783 = vperm.slane %v4781, 0
      %v4785 = vadd.f32 %v4749, %v4783
      %v4786 = vadd.f32 %v4750, %v4783
      %v4787 = vadd.f32 %v4751, %v4783
      %v4788 = vadd.f32 %v4752, %v4783
      %v4789 = vadd.f32 %v4753, %v4783
      %v4790 = vadd.f32 %v4754, %v4783
      %v4791 = vadd.f32 %v4755, %v4783
      %v4792 = vadd.f32 %v4756, %v4783
      %v4793 = vadd.f32 %v4757, %v4783
      %v4794 = vadd.f32 %v4758, %v4783
      %v4795 = vadd.f32 %v4759, %v4783
      %v4796 = vadd.f32 %v4760, %v4783
      %v4797 = vadd.f32 %v4761, %v4783
      %v4798 = vadd.f32 %v4762, %v4783
      %v4799 = vadd.f32 %v4763, %v4783
      %v4800 = vadd.f32 %v4764, %v4783
      %v4801 = vadd.f32 %v4765, %v4783
      %v4802 = vadd.f32 %v4766, %v4783
      %v4803 = vadd.f32 %v4767, %v4783
      %v4804 = vadd.f32 %v4768, %v4783
      %v4805 = vadd.f32 %v4769, %v4783
      %v4806 = vadd.f32 %v4770, %v4783
      %v4807 = vadd.f32 %v4771, %v4783
      %v4808 = vadd.f32 %v4772, %v4783
      %v4809 = vadd.f32 %v4773, %v4783
      %v4810 = vadd.f32 %v4774, %v4783
      %v4811 = vadd.f32 %v4775, %v4783
      %v4812 = vadd.f32 %v4776, %v4783
      %v4813 = vadd.f32 %v4777, %v4783
      %v4814 = vadd.f32 %v4778, %v4783
      %v4815 = vadd.f32 %v4779, %v4783
      %v4816 = vadd.f32 %v4780, %v4783
      %vm4817 = vcmask 64512
      %4818 = vst.msk [vmem:[%s170] sm:$0xff] %vm4817, %v4785
      %4819 = vst.msk [vmem:[%s170 + $0x8] sm:$0xff] %vm4817, %v4786
      %4820 = vst.msk [vmem:[%s170 + $0x10] sm:$0xff] %vm4817, %v4787
      %4821 = vst.msk [vmem:[%s170 + $0x18] sm:$0xff] %vm4817, %v4788
      %4822 = vst.msk [vmem:[%s170 + $0x20] sm:$0xff] %vm4817, %v4789
      %4823 = vst.msk [vmem:[%s170 + $0x28] sm:$0xff] %vm4817, %v4790
      %4824 = vst.msk [vmem:[%s170 + $0x30] sm:$0xff] %vm4817, %v4791
      %4825 = vst.msk [vmem:[%s170 + $0x38] sm:$0xff] %vm4817, %v4792
      %4826 = vst.msk [vmem:[%s170 + $0x40] sm:$0xff] %vm4817, %v4793
      %4827 = vst.msk [vmem:[%s170 + $0x48] sm:$0xff] %vm4817, %v4794
      %4828 = vst.msk [vmem:[%s170 + $0x50] sm:$0xff] %vm4817, %v4795
      %4829 = vst.msk [vmem:[%s170 + $0x58] sm:$0xff] %vm4817, %v4796
      %4830 = vst.msk [vmem:[%s170 + $0x60] sm:$0xff] %vm4817, %v4797
      %4831 = vst.msk [vmem:[%s170 + $0x68] sm:$0xff] %vm4817, %v4798
      %4832 = vst.msk [vmem:[%s170 + $0x70] sm:$0xff] %vm4817, %v4799
      %4833 = vst.msk [vmem:[%s170 + $0x78] sm:$0xff] %vm4817, %v4800
      %4834 = vst.msk [vmem:[%s170 + $0x80] sm:$0xff] %vm4817, %v4801
      %4835 = vst.msk [vmem:[%s170 + $0x88] sm:$0xff] %vm4817, %v4802
      %4836 = vst.msk [vmem:[%s170 + $0x90] sm:$0xff] %vm4817, %v4803
      %4837 = vst.msk [vmem:[%s170 + $0x98] sm:$0xff] %vm4817, %v4804
      %4838 = vst.msk [vmem:[%s170 + $0xa0] sm:$0xff] %vm4817, %v4805
      %4839 = vst.msk [vmem:[%s170 + $0xa8] sm:$0xff] %vm4817, %v4806
      %4840 = vst.msk [vmem:[%s170 + $0xb0] sm:$0xff] %vm4817, %v4807
      %4841 = vst.msk [vmem:[%s170 + $0xb8] sm:$0xff] %vm4817, %v4808
      %4842 = vst.msk [vmem:[%s170 + $0xc0] sm:$0xff] %vm4817, %v4809
      %4843 = vst.msk [vmem:[%s170 + $0xc8] sm:$0xff] %vm4817, %v4810
      %4844 = vst.msk [vmem:[%s170 + $0xd0] sm:$0xff] %vm4817, %v4811
      %4845 = vst.msk [vmem:[%s170 + $0xd8] sm:$0xff] %vm4817, %v4812
      %4846 = vst.msk [vmem:[%s170 + $0xe0] sm:$0xff] %vm4817, %v4813
      %4847 = vst.msk [vmem:[%s170 + $0xe8] sm:$0xff] %vm4817, %v4814
      %4848 = vst.msk [vmem:[%s170 + $0xf0] sm:$0xff] %vm4817, %v4815
      %4849 = vst.msk [vmem:[%s170 + $0xf8] sm:$0xff] %vm4817, %v4816
      %p4850 = scmp.lt.s32.totalorder %s14, 1
      %s4851 = scalar_select %p4850, %s14, 1
      %s4852 = smul.addr %s4851, 32
      %s4853 = smul.addr %s4852, 8
      %s4854 = scalar_lea.vmem %s3, %s4853
      // Predicated region
      $region33: #{tpu_custom_call.1} parent=31 // pred_check
        %p4855 = pneg %p100
      $region34: #{tpu_custom_call.1} parent=31 // pred_check_branch
        %4857 = sbr.rel (%p4855) target = $region36
      $region35: #{tpu_custom_call.1} parent=31 // pred_region
        _
      $region36: #{tpu_custom_call.1} parent=31 // pred_fallthru
        _
    $region32: #{tpu_custom_call.1} parent=5 // pred_fallthru
      _
    %p4858 = scmp.le.s32.totalorder 2, %s9
    // Predicated region
    $region37: #{tpu_custom_call.1} parent=5 // pred_check
      %p4859 = pneg %p4858
    $region38: #{tpu_custom_call.1} parent=5 // pred_check_branch
      %4861 = sbr.rel (%p4859) target = $region40
    $region39: #{tpu_custom_call.1} parent=5 // pred_region
      %s4862 = ssub.s32 %s9, 2
      // Predicated region
      $region41: #{tpu_custom_call.1} parent=39 // pred_check
        %p4863 = pneg %p106
      $region42: #{tpu_custom_call.1} parent=39 // pred_check_branch
        %4865 = sbr.rel (%p4863) target = $region44
      $region43: #{tpu_custom_call.1} parent=39 // pred_region
        %p4866 = scmp.lt.s32.totalorder %s15, 1
        %s4867 = scalar_select %p4866, %s15, 1
        %s4868 = smul.addr %s4867, 32
        %s4869 = smul.addr %s4868, 8
        %s4870 = scalar_lea.vmem %s3, %s4869
      $region44: #{tpu_custom_call.1} parent=39 // pred_fallthru
        _
    $region40: #{tpu_custom_call.1} parent=5 // pred_fallthru
      _
  $region6: #{tpu_custom_call.1} parent=0 // loop_footer
    %s13 = sadd.s32 1, %s9
  $region7: #{tpu_custom_call.1} parent=0 // loop_footer_branch
    %8 = sbr.rel target = $region3
  $region8: #{tpu_custom_call.1} parent=0 // loop_exit
    _

</llo_original>
